<compile_context>
chip_gen: v5e
topology: v5e:2x2
jax: 0.10.0
libtpu: 0.0.40
codegen_flags: <defaults>
</compile_context>

<pallas_src>
import jax
import jax.numpy as jnp
from jax import lax
from jax.experimental import pallas as pl
from jax.experimental.pallas import tpu as pltpu

# ----------------------------- configuration -------------------------------
B = 2                 # batch
N_IN = 64             # number of input points
NUM_OUT = 8           # num_out_points
BOTTLENECK = 32       # bottleneck_size
GROUP_SIZE = 4        # SoftProjection group size (k nearest neighbors)
INIT_TEMPERATURE = 1.0
MIN_SIGMA = 0.01
EPS = 1e-5            # BatchNorm eps (PyTorch default)
SIGMA = max(INIT_TEMPERATURE ** 2, MIN_SIGMA)   # SoftProjection.sigma()

# ----------------------- parameter slab layout (static) --------------------
CONV_DIMS = [(3, 64), (64, 64), (64, 64), (64, 128), (128, BOTTLENECK)]
FC_DIMS = [(BOTTLENECK, 256), (256, 256), (256, 256), (256, 3 * NUM_OUT)]
LAYER_DIMS = CONV_DIMS + FC_DIMS          # 9 layers; layers 0..7 have BN

A_COLS = 128   # slab A: conv1..5 and fc4 (cout <= 128)
B_COLS = 256   # slab B: fc1..3          (cout == 256)
V_COLS = 256   # vector slab: bias / gamma / beta rows, padded to 256 lanes


def _round8(n):
    return -(-n // 8) * 8


LAYERS = []                 # per layer: (slab_id, row_offset, cin, cout)
_a_off = 0
_b_off = 0
for _cin, _cout in LAYER_DIMS:
    if _cout <= A_COLS:
        LAYERS.append((0, _a_off, _cin, _cout))
        _a_off += _round8(_cin)
    else:
        LAYERS.append((1, _b_off, _cin, _cout))
        _b_off += _round8(_cin)
A_ROWS, B_ROWS = _a_off, _b_off            # 584, 544
V_ROWS = 3 * (len(LAYER_DIMS) - 1) + 1     # 3 rows per BN layer + fc4 bias = 25


# ------------------------------ fused kernel -------------------------------
def samplenet_fused_kernel(x_ref, wa_ref, wb_ref, v_ref, simp_ref, proj_ref):
    f32 = jnp.float32
    M = NUM_OUT

    def dense(h, li):
        slab, roff, cin, cout = LAYERS[li]
        w_slab = wa_ref if slab == 0 else wb_ref
        w = w_slab[roff:roff + cin, :cout]
        b = v_ref[3 * li:3 * li + 1, :cout]
        return jnp.dot(h, w, preferred_element_type=f32) + b

    def bn_relu(z, li):
        # training-mode BatchNorm: biased batch stats, single pass (E[z^2]-mu^2)
        cout = LAYERS[li][3]
        gamma = v_ref[3 * li + 1:3 * li + 2, :cout]
        beta = v_ref[3 * li + 2:3 * li + 3, :cout]
        mu = jnp.mean(z, axis=0, keepdims=True)
        var = jnp.mean(z * z, axis=0, keepdims=True) - mu * mu
        zn = (z - mu) * lax.rsqrt(var + EPS)
        return jnp.maximum(zn * gamma + beta, 0.0)

    # ---- layout: 'bcn' [B,3,N] -> points-major [N,3] per batch, via an MXU
    #      identity matmul (x_n3 = I_N @ x_3n^T), avoiding relayout transposes.
    eye_n = (lax.broadcasted_iota(jnp.int32, (N_IN, N_IN), 0)
             == lax.broadcasted_iota(jnp.int32, (N_IN, N_IN), 1)).astype(f32)
    x_3n = [x_ref[b] for b in range(B)]                           # each [3, N]
    x_n3 = [lax.dot_general(eye_n, xb, (((1,), (1,)), ((), ())),
                            preferred_element_type=f32)
            for xb in x_3n]                                       # each [N, 3]
    h = jnp.concatenate(x_n3, axis=0)                             # [B*N, 3]

    # ---- per-point MLP: conv1..5 (1x1) + BN(batch stats) + ReLU ----
    for li in range(5):
        h = bn_relu(dense(h, li), li)                             # -> [B*N, 32]

    # ---- global max pool over each batch element's points ----
    g = jnp.concatenate(
        [jnp.max(h[b * N_IN:(b + 1) * N_IN, :], axis=0, keepdims=True)
         for b in range(B)], axis=0)                              # [B, 32]

    # ---- fully-connected head ----
    for li in range(5, 8):
        g = bn_relu(dense(g, li), li)                             # [B, 256]
    y = dense(g, 8)                                               # [B, 3*M]

    # ---- simp in 'bcn' layout: rows packed as (b*3 + c) ----
    yc = [y[:, c * M:(c + 1) * M] for c in range(3)]              # 3 x [B, M]
    s_3m = [jnp.concatenate([yc[c][b:b + 1, :] for c in range(3)], axis=0)
            for b in range(B)]                                    # per-batch [3, M]
    simp_ref[...] = jnp.concatenate(s_3m, axis=0)                 # [B*3, M]

    # ---- SoftProjection(point_cloud=x, query_cloud=simp), training path ----
    inv_sigma = 1.0 / SIGMA
    proj_blocks = []
    for b in range(B):
        sq = s_3m[b]                                              # [3, M] queries
        xb_n3 = x_n3[b]                                           # [N, 3]
        xb_3n = x_3n[b]                                           # [3, N]

        cross = jnp.dot(xb_n3, sq, preferred_element_type=f32)    # [N, M]
        x_sq = jnp.sum(xb_n3 * xb_n3, axis=1, keepdims=True)      # [N, 1]
        q_sq = jnp.sum(sq * sq, axis=0, keepdims=True)            # [1, M]
        d2 = x_sq - 2.0 * cross + q_sq                            # [N, M] sq. dists

        row = lax.broadcasted_iota(jnp.int32, d2.shape, 0)
        sels, dmins = [], []
        for _ in range(GROUP_SIZE):                               # iterative k-NN
            min_d = jnp.min(d2, axis=0, keepdims=True)            # [1, M]
            first = jnp.min(jnp.where(d2 <= min_d, row, N_IN),
                            axis=0, keepdims=True)                # lowest-idx min
            sel = row == first                                    # [N, M] one-hot
            sels.append(sel)
            dmins.append(min_d)                                   # selected dist
            d2 = jnp.where(sel, 1e30, d2)                         # exclude chosen

        # softmax(-dist/sigma) over the group, accumulated as one [N, M] matrix
        d0 = dmins[0]
        wsum = jnp.zeros_like(cross)
        for sel, dk in zip(sels, dmins):
            wsum = wsum + jnp.where(sel, jnp.exp((d0 - dk) * inv_sigma), 0.0)

        num = jnp.dot(xb_3n, wsum, preferred_element_type=f32)    # [3, M]
        den = jnp.sum(wsum, axis=0, keepdims=True)                # [1, M] >= 1
        proj_blocks.append(num / den)                             # [3, M] ('bcn')

    proj_ref[...] = jnp.concatenate(proj_blocks, axis=0)          # [B*3, M]


# ------------------------------- wrapper ------------------------------------
def _fullmap(nd):
    return lambda i, nd=nd: (0,) * nd


@jax.jit
def samplenet_forward(x_bcn, w_slab_a, w_slab_b, v_slab):
    simp2d, proj2d = pl.pallas_call(
        samplenet_fused_kernel,
        out_shape=(jax.ShapeDtypeStruct((B * 3, NUM_OUT), jnp.float32),
                   jax.ShapeDtypeStruct((B * 3, NUM_OUT), jnp.float32)),
        grid=(1,),
        in_specs=[
            pl.BlockSpec((B, 3, N_IN), _fullmap(3)),
            pl.BlockSpec((A_ROWS, A_COLS), _fullmap(2)),
            pl.BlockSpec((B_ROWS, B_COLS), _fullmap(2)),
            pl.BlockSpec((V_ROWS, V_COLS), _fullmap(2)),
        ],
        out_specs=[
            pl.BlockSpec((B * 3, NUM_OUT), _fullmap(2)),
            pl.BlockSpec((B * 3, NUM_OUT), _fullmap(2)),
        ],
        compiler_params=pltpu.CompilerParams(
            dimension_semantics=("arbitrary",)),
    )(x_bcn, w_slab_a, w_slab_b, v_slab)
    # (B*3, M) -> (B, 3, M): contiguous leading-dim split (free view), 'bcn'.
    return (simp2d.reshape(B, 3, NUM_OUT), proj2d.reshape(B, 3, NUM_OUT))


# ----------------------------- parameter init -------------------------------
def init_params(key):
    """PyTorch-default-like init (U(-1/sqrt(fan_in), +), BN gamma=1, beta=0),
    packed into: slab A [A_ROWS,128] (conv1..5 + fc4 weights), slab B
    [B_ROWS,256] (fc1..3 weights), vector slab [25,256] (bias/gamma/beta)."""
    keys = jax.random.split(key, len(LAYER_DIMS))
    w_a = jnp.zeros((A_ROWS, A_COLS), jnp.float32)
    w_b = jnp.zeros((B_ROWS, B_COLS), jnp.float32)
    v_s = jnp.zeros((V_ROWS, V_COLS), jnp.float32)
    for li, (cin, cout) in enumerate(LAYER_DIMS):
        k_w, k_b = jax.random.split(keys[li])
        bound = 1.0 / (cin ** 0.5)
        w = jax.random.uniform(k_w, (cin, cout), jnp.float32, -bound, bound)
        bias = jax.random.uniform(k_b, (cout,), jnp.float32, -bound, bound)
        slab, roff, _, _ = LAYERS[li]
        if slab == 0:
            w_a = w_a.at[roff:roff + cin, :cout].set(w)
        else:
            w_b = w_b.at[roff:roff + cin, :cout].set(w)
        v_s = v_s.at[3 * li, :cout].set(bias)          # bias row
        if li < 8:                                     # BN layers only
            v_s = v_s.at[3 * li + 1, :cout].set(1.0)   # gamma (beta row stays 0)
    return w_a, w_b, v_s


# --------------------------------- main --------------------------------------
if __name__ == "__main__":
    key = jax.random.PRNGKey(0)
    k_x, k_p = jax.random.split(key)
    x = jax.random.normal(k_x, (B, 3, N_IN), jnp.float32)   # 'bcn' input
    w_a, w_b, v_s = init_params(k_p)

    simp, proj = samplenet_forward(x, w_a, w_b, v_s)
    jax.block_until_ready((simp, proj))

    assert simp.shape == (B, 3, NUM_OUT)
    assert proj.shape == (B, 3, NUM_OUT)
    assert bool(jnp.all(jnp.isfinite(simp))) and bool(jnp.all(jnp.isfinite(proj)))
    print("KERNEL_OK")
</pallas_src>

<mosaic_0001>
module attributes {stable_mosaic.version = 11 : i64} {
  func.func @samplenet_fused_kernel(%arg0: i32, %arg1: memref<2x3x64xf32, #tpu.memory_space<vmem>>, %arg2: memref<584x128xf32, #tpu.memory_space<vmem>>, %arg3: memref<544x256xf32, #tpu.memory_space<vmem>>, %arg4: memref<25x256xf32, #tpu.memory_space<vmem>>, %arg5: memref<6x8xf32, #tpu.memory_space<vmem>>, %arg6: memref<6x8xf32, #tpu.memory_space<vmem>>) attributes {dimension_semantics = [#tpu.dimension_semantics<arbitrary>], iteration_bounds = array<i64: 1>, scalar_prefetch = 0 : i64, scratch_operands = 0 : i64, tpu.core_type = #tpu.core_type<tc>, window_params = [{pipeline_mode = #tpu.pipeline_mode<synchronous>, transform_indices = @transform_0, window_bounds = array<i64: 2, 3, 64>}, {pipeline_mode = #tpu.pipeline_mode<synchronous>, transform_indices = @transform_1, window_bounds = array<i64: 584, 128>}, {pipeline_mode = #tpu.pipeline_mode<synchronous>, transform_indices = @transform_2, window_bounds = array<i64: 544, 256>}, {pipeline_mode = #tpu.pipeline_mode<synchronous>, transform_indices = @transform_3, window_bounds = array<i64: 25, 256>}, {pipeline_mode = #tpu.pipeline_mode<synchronous>, transform_indices = @transform_4, window_bounds = array<i64: 6, 8>}, {pipeline_mode = #tpu.pipeline_mode<synchronous>, transform_indices = @transform_5, window_bounds = array<i64: 6, 8>}]} {
    %0 = tpu.iota {dimensions = array<i32: 0>} : vector<64x64xi32>
    %1 = tpu.iota {dimensions = array<i32: 1>} : vector<64x64xi32>
    %2 = arith.cmpi eq, %0, %1 : vector<64x64xi32>
    %3 = arith.extui %2 : vector<64x64xi1> to vector<64x64xi32>
    %4 = arith.sitofp %3 : vector<64x64xi32> to vector<64x64xf32>
    %c0 = arith.constant 0 : index
    %c0_0 = arith.constant 0 : index
    %c0_1 = arith.constant 0 : index
    %5 = vector.load %arg1[%c0, %c0_0, %c0_1] : memref<2x3x64xf32, #tpu.memory_space<vmem>>, vector<1x3x64xf32>
    %6 = vector.shape_cast %5 : vector<1x3x64xf32> to vector<3x64xf32>
    %c1 = arith.constant 1 : index
    %c0_2 = arith.constant 0 : index
    %c0_3 = arith.constant 0 : index
    %7 = vector.load %arg1[%c1, %c0_2, %c0_3] : memref<2x3x64xf32, #tpu.memory_space<vmem>>, vector<1x3x64xf32>
    %8 = vector.shape_cast %7 : vector<1x3x64xf32> to vector<3x64xf32>
    %cst = arith.constant dense<0.000000e+00> : vector<64x3xf32>
    %9 = tpu.matmul %4, %6, %cst {dimension_numbers = #tpu.dot_dimension_numbers<[1], [1], [0], [0], [0, 0, 1, 0], [], []>} : vector<64x64xf32>, vector<3x64xf32>, vector<64x3xf32> -> vector<64x3xf32>
    %cst_4 = arith.constant dense<0.000000e+00> : vector<64x3xf32>
    %10 = tpu.matmul %4, %8, %cst_4 {dimension_numbers = #tpu.dot_dimension_numbers<[1], [1], [0], [0], [0, 0, 1, 0], [], []>} : vector<64x64xf32>, vector<3x64xf32>, vector<64x3xf32> -> vector<64x3xf32>
    %11 = tpu.concatenate %9, %10 in 0 : vector<64x3xf32>, vector<64x3xf32> -> vector<128x3xf32>
    %c0_5 = arith.constant 0 : index
    %c0_6 = arith.constant 0 : index
    %12 = vector.load %arg2[%c0_5, %c0_6] : memref<584x128xf32, #tpu.memory_space<vmem>>, vector<3x64xf32>
    %c0_7 = arith.constant 0 : index
    %c0_8 = arith.constant 0 : index
    %13 = vector.load %arg4[%c0_7, %c0_8] : memref<25x256xf32, #tpu.memory_space<vmem>>, vector<1x64xf32>
    %cst_9 = arith.constant dense<0.000000e+00> : vector<128x64xf32>
    %14 = tpu.matmul %11, %12, %cst_9 {dimension_numbers = #tpu.dot_dimension_numbers<[1], [0], [0], [1], [0, 0, 1, 1], [], []>} : vector<128x3xf32>, vector<3x64xf32>, vector<128x64xf32> -> vector<128x64xf32>
    %15 = vector.broadcast %13 : vector<1x64xf32> to vector<128x64xf32>
    %16 = arith.addf %14, %15 : vector<128x64xf32>
    %c1_10 = arith.constant 1 : index
    %c0_11 = arith.constant 0 : index
    %17 = vector.load %arg4[%c1_10, %c0_11] : memref<25x256xf32, #tpu.memory_space<vmem>>, vector<1x64xf32>
    %c2 = arith.constant 2 : index
    %c0_12 = arith.constant 0 : index
    %18 = vector.load %arg4[%c2, %c0_12] : memref<25x256xf32, #tpu.memory_space<vmem>>, vector<1x64xf32>
    %cst_13 = arith.constant dense<0.000000e+00> : vector<64xf32>
    %19 = vector.multi_reduction <add>, %16, %cst_13 [0] : vector<128x64xf32> to vector<64xf32>
    %20 = vector.shape_cast %19 : vector<64xf32> to vector<1x64xf32>
    %cst_14 = arith.constant 1.280000e+02 : f32
    %21 = vector.broadcast %cst_14 : f32 to vector<1x64xf32>
    %22 = arith.divf %20, %21 : vector<1x64xf32>
    %23 = arith.mulf %16, %16 : vector<128x64xf32>
    %cst_15 = arith.constant dense<0.000000e+00> : vector<64xf32>
    %24 = vector.multi_reduction <add>, %23, %cst_15 [0] : vector<128x64xf32> to vector<64xf32>
    %25 = vector.shape_cast %24 : vector<64xf32> to vector<1x64xf32>
    %cst_16 = arith.constant 1.280000e+02 : f32
    %26 = vector.broadcast %cst_16 : f32 to vector<1x64xf32>
    %27 = arith.divf %25, %26 : vector<1x64xf32>
    %28 = arith.mulf %22, %22 : vector<1x64xf32>
    %29 = arith.subf %27, %28 : vector<1x64xf32>
    %30 = vector.broadcast %22 : vector<1x64xf32> to vector<128x64xf32>
    %31 = arith.subf %16, %30 : vector<128x64xf32>
    %cst_17 = arith.constant 9.99999974E-6 : f32
    %32 = vector.broadcast %cst_17 : f32 to vector<1x64xf32>
    %33 = arith.addf %29, %32 : vector<1x64xf32>
    %34 = math.rsqrt %33 : vector<1x64xf32>
    %35 = vector.broadcast %34 : vector<1x64xf32> to vector<128x64xf32>
    %36 = arith.mulf %31, %35 : vector<128x64xf32>
    %37 = vector.broadcast %17 : vector<1x64xf32> to vector<128x64xf32>
    %38 = arith.mulf %36, %37 : vector<128x64xf32>
    %39 = vector.broadcast %18 : vector<1x64xf32> to vector<128x64xf32>
    %40 = arith.addf %38, %39 : vector<128x64xf32>
    %cst_18 = arith.constant 0.000000e+00 : f32
    %41 = vector.broadcast %cst_18 : f32 to vector<128x64xf32>
    %42 = arith.maximumf %40, %41 : vector<128x64xf32>
    %c8 = arith.constant 8 : index
    %c0_19 = arith.constant 0 : index
    %43 = vector.load %arg2[%c8, %c0_19] : memref<584x128xf32, #tpu.memory_space<vmem>>, vector<64x64xf32>
    %c3 = arith.constant 3 : index
    %c0_20 = arith.constant 0 : index
    %44 = vector.load %arg4[%c3, %c0_20] : memref<25x256xf32, #tpu.memory_space<vmem>>, vector<1x64xf32>
    %cst_21 = arith.constant dense<0.000000e+00> : vector<128x64xf32>
    %45 = tpu.matmul %42, %43, %cst_21 {dimension_numbers = #tpu.dot_dimension_numbers<[1], [0], [0], [1], [0, 0, 1, 1], [], []>} : vector<128x64xf32>, vector<64x64xf32>, vector<128x64xf32> -> vector<128x64xf32>
    %46 = vector.broadcast %44 : vector<1x64xf32> to vector<128x64xf32>
    %47 = arith.addf %45, %46 : vector<128x64xf32>
    %c4 = arith.constant 4 : index
    %c0_22 = arith.constant 0 : index
    %48 = vector.load %arg4[%c4, %c0_22] : memref<25x256xf32, #tpu.memory_space<vmem>>, vector<1x64xf32>
    %c5 = arith.constant 5 : index
    %c0_23 = arith.constant 0 : index
    %49 = vector.load %arg4[%c5, %c0_23] : memref<25x256xf32, #tpu.memory_space<vmem>>, vector<1x64xf32>
    %cst_24 = arith.constant dense<0.000000e+00> : vector<64xf32>
    %50 = vector.multi_reduction <add>, %47, %cst_24 [0] : vector<128x64xf32> to vector<64xf32>
    %51 = vector.shape_cast %50 : vector<64xf32> to vector<1x64xf32>
    %cst_25 = arith.constant 1.280000e+02 : f32
    %52 = vector.broadcast %cst_25 : f32 to vector<1x64xf32>
    %53 = arith.divf %51, %52 : vector<1x64xf32>
    %54 = arith.mulf %47, %47 : vector<128x64xf32>
    %cst_26 = arith.constant dense<0.000000e+00> : vector<64xf32>
    %55 = vector.multi_reduction <add>, %54, %cst_26 [0] : vector<128x64xf32> to vector<64xf32>
    %56 = vector.shape_cast %55 : vector<64xf32> to vector<1x64xf32>
    %cst_27 = arith.constant 1.280000e+02 : f32
    %57 = vector.broadcast %cst_27 : f32 to vector<1x64xf32>
    %58 = arith.divf %56, %57 : vector<1x64xf32>
    %59 = arith.mulf %53, %53 : vector<1x64xf32>
    %60 = arith.subf %58, %59 : vector<1x64xf32>
    %61 = vector.broadcast %53 : vector<1x64xf32> to vector<128x64xf32>
    %62 = arith.subf %47, %61 : vector<128x64xf32>
    %cst_28 = arith.constant 9.99999974E-6 : f32
    %63 = vector.broadcast %cst_28 : f32 to vector<1x64xf32>
    %64 = arith.addf %60, %63 : vector<1x64xf32>
    %65 = math.rsqrt %64 : vector<1x64xf32>
    %66 = vector.broadcast %65 : vector<1x64xf32> to vector<128x64xf32>
    %67 = arith.mulf %62, %66 : vector<128x64xf32>
    %68 = vector.broadcast %48 : vector<1x64xf32> to vector<128x64xf32>
    %69 = arith.mulf %67, %68 : vector<128x64xf32>
    %70 = vector.broadcast %49 : vector<1x64xf32> to vector<128x64xf32>
    %71 = arith.addf %69, %70 : vector<128x64xf32>
    %cst_29 = arith.constant 0.000000e+00 : f32
    %72 = vector.broadcast %cst_29 : f32 to vector<128x64xf32>
    %73 = arith.maximumf %71, %72 : vector<128x64xf32>
    %c72 = arith.constant 72 : index
    %c0_30 = arith.constant 0 : index
    %74 = vector.load %arg2[%c72, %c0_30] : memref<584x128xf32, #tpu.memory_space<vmem>>, vector<64x64xf32>
    %c6 = arith.constant 6 : index
    %c0_31 = arith.constant 0 : index
    %75 = vector.load %arg4[%c6, %c0_31] : memref<25x256xf32, #tpu.memory_space<vmem>>, vector<1x64xf32>
    %cst_32 = arith.constant dense<0.000000e+00> : vector<128x64xf32>
    %76 = tpu.matmul %73, %74, %cst_32 {dimension_numbers = #tpu.dot_dimension_numbers<[1], [0], [0], [1], [0, 0, 1, 1], [], []>} : vector<128x64xf32>, vector<64x64xf32>, vector<128x64xf32> -> vector<128x64xf32>
    %77 = vector.broadcast %75 : vector<1x64xf32> to vector<128x64xf32>
    %78 = arith.addf %76, %77 : vector<128x64xf32>
    %c7 = arith.constant 7 : index
    %c0_33 = arith.constant 0 : index
    %79 = vector.load %arg4[%c7, %c0_33] : memref<25x256xf32, #tpu.memory_space<vmem>>, vector<1x64xf32>
    %c8_34 = arith.constant 8 : index
    %c0_35 = arith.constant 0 : index
    %80 = vector.load %arg4[%c8_34, %c0_35] : memref<25x256xf32, #tpu.memory_space<vmem>>, vector<1x64xf32>
    %cst_36 = arith.constant dense<0.000000e+00> : vector<64xf32>
    %81 = vector.multi_reduction <add>, %78, %cst_36 [0] : vector<128x64xf32> to vector<64xf32>
    %82 = vector.shape_cast %81 : vector<64xf32> to vector<1x64xf32>
    %cst_37 = arith.constant 1.280000e+02 : f32
    %83 = vector.broadcast %cst_37 : f32 to vector<1x64xf32>
    %84 = arith.divf %82, %83 : vector<1x64xf32>
    %85 = arith.mulf %78, %78 : vector<128x64xf32>
    %cst_38 = arith.constant dense<0.000000e+00> : vector<64xf32>
    %86 = vector.multi_reduction <add>, %85, %cst_38 [0] : vector<128x64xf32> to vector<64xf32>
    %87 = vector.shape_cast %86 : vector<64xf32> to vector<1x64xf32>
    %cst_39 = arith.constant 1.280000e+02 : f32
    %88 = vector.broadcast %cst_39 : f32 to vector<1x64xf32>
    %89 = arith.divf %87, %88 : vector<1x64xf32>
    %90 = arith.mulf %84, %84 : vector<1x64xf32>
    %91 = arith.subf %89, %90 : vector<1x64xf32>
    %92 = vector.broadcast %84 : vector<1x64xf32> to vector<128x64xf32>
    %93 = arith.subf %78, %92 : vector<128x64xf32>
    %cst_40 = arith.constant 9.99999974E-6 : f32
    %94 = vector.broadcast %cst_40 : f32 to vector<1x64xf32>
    %95 = arith.addf %91, %94 : vector<1x64xf32>
    %96 = math.rsqrt %95 : vector<1x64xf32>
    %97 = vector.broadcast %96 : vector<1x64xf32> to vector<128x64xf32>
    %98 = arith.mulf %93, %97 : vector<128x64xf32>
    %99 = vector.broadcast %79 : vector<1x64xf32> to vector<128x64xf32>
    %100 = arith.mulf %98, %99 : vector<128x64xf32>
    %101 = vector.broadcast %80 : vector<1x64xf32> to vector<128x64xf32>
    %102 = arith.addf %100, %101 : vector<128x64xf32>
    %cst_41 = arith.constant 0.000000e+00 : f32
    %103 = vector.broadcast %cst_41 : f32 to vector<128x64xf32>
    %104 = arith.maximumf %102, %103 : vector<128x64xf32>
    %c136 = arith.constant 136 : index
    %c0_42 = arith.constant 0 : index
    %105 = vector.load %arg2[%c136, %c0_42] : memref<584x128xf32, #tpu.memory_space<vmem>>, vector<64x128xf32>
    %c9 = arith.constant 9 : index
    %c0_43 = arith.constant 0 : index
    %106 = vector.load %arg4[%c9, %c0_43] : memref<25x256xf32, #tpu.memory_space<vmem>>, vector<1x128xf32>
    %cst_44 = arith.constant dense<0.000000e+00> : vector<128x128xf32>
    %107 = tpu.matmul %104, %105, %cst_44 {dimension_numbers = #tpu.dot_dimension_numbers<[1], [0], [0], [1], [0, 0, 1, 1], [], []>} : vector<128x64xf32>, vector<64x128xf32>, vector<128x128xf32> -> vector<128x128xf32>
    %108 = vector.broadcast %106 : vector<1x128xf32> to vector<128x128xf32>
    %109 = arith.addf %107, %108 : vector<128x128xf32>
    %c10 = arith.constant 10 : index
    %c0_45 = arith.constant 0 : index
    %110 = vector.load %arg4[%c10, %c0_45] : memref<25x256xf32, #tpu.memory_space<vmem>>, vector<1x128xf32>
    %c11 = arith.constant 11 : index
    %c0_46 = arith.constant 0 : index
    %111 = vector.load %arg4[%c11, %c0_46] : memref<25x256xf32, #tpu.memory_space<vmem>>, vector<1x128xf32>
    %cst_47 = arith.constant dense<0.000000e+00> : vector<128xf32>
    %112 = vector.multi_reduction <add>, %109, %cst_47 [0] : vector<128x128xf32> to vector<128xf32>
    %113 = vector.shape_cast %112 : vector<128xf32> to vector<1x128xf32>
    %cst_48 = arith.constant 1.280000e+02 : f32
    %114 = vector.broadcast %cst_48 : f32 to vector<1x128xf32>
    %115 = arith.divf %113, %114 : vector<1x128xf32>
    %116 = arith.mulf %109, %109 : vector<128x128xf32>
    %cst_49 = arith.constant dense<0.000000e+00> : vector<128xf32>
    %117 = vector.multi_reduction <add>, %116, %cst_49 [0] : vector<128x128xf32> to vector<128xf32>
    %118 = vector.shape_cast %117 : vector<128xf32> to vector<1x128xf32>
    %cst_50 = arith.constant 1.280000e+02 : f32
    %119 = vector.broadcast %cst_50 : f32 to vector<1x128xf32>
    %120 = arith.divf %118, %119 : vector<1x128xf32>
    %121 = arith.mulf %115, %115 : vector<1x128xf32>
    %122 = arith.subf %120, %121 : vector<1x128xf32>
    %123 = vector.broadcast %115 : vector<1x128xf32> to vector<128x128xf32>
    %124 = arith.subf %109, %123 : vector<128x128xf32>
    %cst_51 = arith.constant 9.99999974E-6 : f32
    %125 = vector.broadcast %cst_51 : f32 to vector<1x128xf32>
    %126 = arith.addf %122, %125 : vector<1x128xf32>
    %127 = math.rsqrt %126 : vector<1x128xf32>
    %128 = vector.broadcast %127 : vector<1x128xf32> to vector<128x128xf32>
    %129 = arith.mulf %124, %128 : vector<128x128xf32>
    %130 = vector.broadcast %110 : vector<1x128xf32> to vector<128x128xf32>
    %131 = arith.mulf %129, %130 : vector<128x128xf32>
    %132 = vector.broadcast %111 : vector<1x128xf32> to vector<128x128xf32>
    %133 = arith.addf %131, %132 : vector<128x128xf32>
    %cst_52 = arith.constant 0.000000e+00 : f32
    %134 = vector.broadcast %cst_52 : f32 to vector<128x128xf32>
    %135 = arith.maximumf %133, %134 : vector<128x128xf32>
    %c200 = arith.constant 200 : index
    %c0_53 = arith.constant 0 : index
    %136 = vector.load %arg2[%c200, %c0_53] : memref<584x128xf32, #tpu.memory_space<vmem>>, vector<128x32xf32>
    %c12 = arith.constant 12 : index
    %c0_54 = arith.constant 0 : index
    %137 = vector.load %arg4[%c12, %c0_54] : memref<25x256xf32, #tpu.memory_space<vmem>>, vector<1x32xf32>
    %cst_55 = arith.constant dense<0.000000e+00> : vector<128x32xf32>
    %138 = tpu.matmul %135, %136, %cst_55 {dimension_numbers = #tpu.dot_dimension_numbers<[1], [0], [0], [1], [0, 0, 1, 1], [], []>} : vector<128x128xf32>, vector<128x32xf32>, vector<128x32xf32> -> vector<128x32xf32>
    %139 = vector.broadcast %137 : vector<1x32xf32> to vector<128x32xf32>
    %140 = arith.addf %138, %139 : vector<128x32xf32>
    %c13 = arith.constant 13 : index
    %c0_56 = arith.constant 0 : index
    %141 = vector.load %arg4[%c13, %c0_56] : memref<25x256xf32, #tpu.memory_space<vmem>>, vector<1x32xf32>
    %c14 = arith.constant 14 : index
    %c0_57 = arith.constant 0 : index
    %142 = vector.load %arg4[%c14, %c0_57] : memref<25x256xf32, #tpu.memory_space<vmem>>, vector<1x32xf32>
    %cst_58 = arith.constant dense<0.000000e+00> : vector<32xf32>
    %143 = vector.multi_reduction <add>, %140, %cst_58 [0] : vector<128x32xf32> to vector<32xf32>
    %144 = vector.shape_cast %143 : vector<32xf32> to vector<1x32xf32>
    %cst_59 = arith.constant 1.280000e+02 : f32
    %145 = vector.broadcast %cst_59 : f32 to vector<1x32xf32>
    %146 = arith.divf %144, %145 : vector<1x32xf32>
    %147 = arith.mulf %140, %140 : vector<128x32xf32>
    %cst_60 = arith.constant dense<0.000000e+00> : vector<32xf32>
    %148 = vector.multi_reduction <add>, %147, %cst_60 [0] : vector<128x32xf32> to vector<32xf32>
    %149 = vector.shape_cast %148 : vector<32xf32> to vector<1x32xf32>
    %cst_61 = arith.constant 1.280000e+02 : f32
    %150 = vector.broadcast %cst_61 : f32 to vector<1x32xf32>
    %151 = arith.divf %149, %150 : vector<1x32xf32>
    %152 = arith.mulf %146, %146 : vector<1x32xf32>
    %153 = arith.subf %151, %152 : vector<1x32xf32>
    %154 = vector.broadcast %146 : vector<1x32xf32> to vector<128x32xf32>
    %155 = arith.subf %140, %154 : vector<128x32xf32>
    %cst_62 = arith.constant 9.99999974E-6 : f32
    %156 = vector.broadcast %cst_62 : f32 to vector<1x32xf32>
    %157 = arith.addf %153, %156 : vector<1x32xf32>
    %158 = math.rsqrt %157 : vector<1x32xf32>
    %159 = vector.broadcast %158 : vector<1x32xf32> to vector<128x32xf32>
    %160 = arith.mulf %155, %159 : vector<128x32xf32>
    %161 = vector.broadcast %141 : vector<1x32xf32> to vector<128x32xf32>
    %162 = arith.mulf %160, %161 : vector<128x32xf32>
    %163 = vector.broadcast %142 : vector<1x32xf32> to vector<128x32xf32>
    %164 = arith.addf %162, %163 : vector<128x32xf32>
    %cst_63 = arith.constant 0.000000e+00 : f32
    %165 = vector.broadcast %cst_63 : f32 to vector<128x32xf32>
    %166 = arith.maximumf %164, %165 : vector<128x32xf32>
    %167 = vector.extract_strided_slice %166 {offsets = [0, 0], sizes = [64, 32], strides = [1, 1]} : vector<128x32xf32> to vector<64x32xf32>
    %cst_64 = arith.constant dense<0xFF800000> : vector<32xf32>
    %168 = vector.multi_reduction <maximumf>, %167, %cst_64 [0] : vector<64x32xf32> to vector<32xf32>
    %169 = vector.shape_cast %168 : vector<32xf32> to vector<1x32xf32>
    %170 = vector.extract_strided_slice %166 {offsets = [64, 0], sizes = [64, 32], strides = [1, 1]} : vector<128x32xf32> to vector<64x32xf32>
    %cst_65 = arith.constant dense<0xFF800000> : vector<32xf32>
    %171 = vector.multi_reduction <maximumf>, %170, %cst_65 [0] : vector<64x32xf32> to vector<32xf32>
    %172 = vector.shape_cast %171 : vector<32xf32> to vector<1x32xf32>
    %173 = tpu.concatenate %169, %172 in 0 : vector<1x32xf32>, vector<1x32xf32> -> vector<2x32xf32>
    %c0_66 = arith.constant 0 : index
    %c0_67 = arith.constant 0 : index
    %174 = vector.load %arg3[%c0_66, %c0_67] : memref<544x256xf32, #tpu.memory_space<vmem>>, vector<32x256xf32>
    %c15 = arith.constant 15 : index
    %c0_68 = arith.constant 0 : index
    %175 = vector.load %arg4[%c15, %c0_68] : memref<25x256xf32, #tpu.memory_space<vmem>>, vector<1x256xf32>
    %cst_69 = arith.constant dense<0.000000e+00> : vector<2x256xf32>
    %176 = tpu.matmul %173, %174, %cst_69 {dimension_numbers = #tpu.dot_dimension_numbers<[1], [0], [0], [1], [0, 0, 1, 1], [], []>} : vector<2x32xf32>, vector<32x256xf32>, vector<2x256xf32> -> vector<2x256xf32>
    %177 = vector.broadcast %175 : vector<1x256xf32> to vector<2x256xf32>
    %178 = arith.addf %176, %177 : vector<2x256xf32>
    %c16 = arith.constant 16 : index
    %c0_70 = arith.constant 0 : index
    %179 = vector.load %arg4[%c16, %c0_70] : memref<25x256xf32, #tpu.memory_space<vmem>>, vector<1x256xf32>
    %c17 = arith.constant 17 : index
    %c0_71 = arith.constant 0 : index
    %180 = vector.load %arg4[%c17, %c0_71] : memref<25x256xf32, #tpu.memory_space<vmem>>, vector<1x256xf32>
    %cst_72 = arith.constant dense<0.000000e+00> : vector<256xf32>
    %181 = vector.multi_reduction <add>, %178, %cst_72 [0] : vector<2x256xf32> to vector<256xf32>
    %182 = vector.shape_cast %181 : vector<256xf32> to vector<1x256xf32>
    %cst_73 = arith.constant 2.000000e+00 : f32
    %183 = vector.broadcast %cst_73 : f32 to vector<1x256xf32>
    %184 = arith.divf %182, %183 : vector<1x256xf32>
    %185 = arith.mulf %178, %178 : vector<2x256xf32>
    %cst_74 = arith.constant dense<0.000000e+00> : vector<256xf32>
    %186 = vector.multi_reduction <add>, %185, %cst_74 [0] : vector<2x256xf32> to vector<256xf32>
    %187 = vector.shape_cast %186 : vector<256xf32> to vector<1x256xf32>
    %cst_75 = arith.constant 2.000000e+00 : f32
    %188 = vector.broadcast %cst_75 : f32 to vector<1x256xf32>
    %189 = arith.divf %187, %188 : vector<1x256xf32>
    %190 = arith.mulf %184, %184 : vector<1x256xf32>
    %191 = arith.subf %189, %190 : vector<1x256xf32>
    %192 = vector.broadcast %184 : vector<1x256xf32> to vector<2x256xf32>
    %193 = arith.subf %178, %192 : vector<2x256xf32>
    %cst_76 = arith.constant 9.99999974E-6 : f32
    %194 = vector.broadcast %cst_76 : f32 to vector<1x256xf32>
    %195 = arith.addf %191, %194 : vector<1x256xf32>
    %196 = math.rsqrt %195 : vector<1x256xf32>
    %197 = vector.broadcast %196 : vector<1x256xf32> to vector<2x256xf32>
    %198 = arith.mulf %193, %197 : vector<2x256xf32>
    %199 = vector.broadcast %179 : vector<1x256xf32> to vector<2x256xf32>
    %200 = arith.mulf %198, %199 : vector<2x256xf32>
    %201 = vector.broadcast %180 : vector<1x256xf32> to vector<2x256xf32>
    %202 = arith.addf %200, %201 : vector<2x256xf32>
    %cst_77 = arith.constant 0.000000e+00 : f32
    %203 = vector.broadcast %cst_77 : f32 to vector<2x256xf32>
    %204 = arith.maximumf %202, %203 : vector<2x256xf32>
    %c32 = arith.constant 32 : index
    %c0_78 = arith.constant 0 : index
    %205 = vector.load %arg3[%c32, %c0_78] : memref<544x256xf32, #tpu.memory_space<vmem>>, vector<256x256xf32>
    %c18 = arith.constant 18 : index
    %c0_79 = arith.constant 0 : index
    %206 = vector.load %arg4[%c18, %c0_79] : memref<25x256xf32, #tpu.memory_space<vmem>>, vector<1x256xf32>
    %cst_80 = arith.constant dense<0.000000e+00> : vector<2x256xf32>
    %207 = tpu.matmul %204, %205, %cst_80 {dimension_numbers = #tpu.dot_dimension_numbers<[1], [0], [0], [1], [0, 0, 1, 1], [], []>} : vector<2x256xf32>, vector<256x256xf32>, vector<2x256xf32> -> vector<2x256xf32>
    %208 = vector.broadcast %206 : vector<1x256xf32> to vector<2x256xf32>
    %209 = arith.addf %207, %208 : vector<2x256xf32>
    %c19 = arith.constant 19 : index
    %c0_81 = arith.constant 0 : index
    %210 = vector.load %arg4[%c19, %c0_81] : memref<25x256xf32, #tpu.memory_space<vmem>>, vector<1x256xf32>
    %c20 = arith.constant 20 : index
    %c0_82 = arith.constant 0 : index
    %211 = vector.load %arg4[%c20, %c0_82] : memref<25x256xf32, #tpu.memory_space<vmem>>, vector<1x256xf32>
    %cst_83 = arith.constant dense<0.000000e+00> : vector<256xf32>
    %212 = vector.multi_reduction <add>, %209, %cst_83 [0] : vector<2x256xf32> to vector<256xf32>
    %213 = vector.shape_cast %212 : vector<256xf32> to vector<1x256xf32>
    %cst_84 = arith.constant 2.000000e+00 : f32
    %214 = vector.broadcast %cst_84 : f32 to vector<1x256xf32>
    %215 = arith.divf %213, %214 : vector<1x256xf32>
    %216 = arith.mulf %209, %209 : vector<2x256xf32>
    %cst_85 = arith.constant dense<0.000000e+00> : vector<256xf32>
    %217 = vector.multi_reduction <add>, %216, %cst_85 [0] : vector<2x256xf32> to vector<256xf32>
    %218 = vector.shape_cast %217 : vector<256xf32> to vector<1x256xf32>
    %cst_86 = arith.constant 2.000000e+00 : f32
    %219 = vector.broadcast %cst_86 : f32 to vector<1x256xf32>
    %220 = arith.divf %218, %219 : vector<1x256xf32>
    %221 = arith.mulf %215, %215 : vector<1x256xf32>
    %222 = arith.subf %220, %221 : vector<1x256xf32>
    %223 = vector.broadcast %215 : vector<1x256xf32> to vector<2x256xf32>
    %224 = arith.subf %209, %223 : vector<2x256xf32>
    %cst_87 = arith.constant 9.99999974E-6 : f32
    %225 = vector.broadcast %cst_87 : f32 to vector<1x256xf32>
    %226 = arith.addf %222, %225 : vector<1x256xf32>
    %227 = math.rsqrt %226 : vector<1x256xf32>
    %228 = vector.broadcast %227 : vector<1x256xf32> to vector<2x256xf32>
    %229 = arith.mulf %224, %228 : vector<2x256xf32>
    %230 = vector.broadcast %210 : vector<1x256xf32> to vector<2x256xf32>
    %231 = arith.mulf %229, %230 : vector<2x256xf32>
    %232 = vector.broadcast %211 : vector<1x256xf32> to vector<2x256xf32>
    %233 = arith.addf %231, %232 : vector<2x256xf32>
    %cst_88 = arith.constant 0.000000e+00 : f32
    %234 = vector.broadcast %cst_88 : f32 to vector<2x256xf32>
    %235 = arith.maximumf %233, %234 : vector<2x256xf32>
    %c288 = arith.constant 288 : index
    %c0_89 = arith.constant 0 : index
    %236 = vector.load %arg3[%c288, %c0_89] : memref<544x256xf32, #tpu.memory_space<vmem>>, vector<256x256xf32>
    %c21 = arith.constant 21 : index
    %c0_90 = arith.constant 0 : index
    %237 = vector.load %arg4[%c21, %c0_90] : memref<25x256xf32, #tpu.memory_space<vmem>>, vector<1x256xf32>
    %cst_91 = arith.constant dense<0.000000e+00> : vector<2x256xf32>
    %238 = tpu.matmul %235, %236, %cst_91 {dimension_numbers = #tpu.dot_dimension_numbers<[1], [0], [0], [1], [0, 0, 1, 1], [], []>} : vector<2x256xf32>, vector<256x256xf32>, vector<2x256xf32> -> vector<2x256xf32>
    %239 = vector.broadcast %237 : vector<1x256xf32> to vector<2x256xf32>
    %240 = arith.addf %238, %239 : vector<2x256xf32>
    %c22 = arith.constant 22 : index
    %c0_92 = arith.constant 0 : index
    %241 = vector.load %arg4[%c22, %c0_92] : memref<25x256xf32, #tpu.memory_space<vmem>>, vector<1x256xf32>
    %c23 = arith.constant 23 : index
    %c0_93 = arith.constant 0 : index
    %242 = vector.load %arg4[%c23, %c0_93] : memref<25x256xf32, #tpu.memory_space<vmem>>, vector<1x256xf32>
    %cst_94 = arith.constant dense<0.000000e+00> : vector<256xf32>
    %243 = vector.multi_reduction <add>, %240, %cst_94 [0] : vector<2x256xf32> to vector<256xf32>
    %244 = vector.shape_cast %243 : vector<256xf32> to vector<1x256xf32>
    %cst_95 = arith.constant 2.000000e+00 : f32
    %245 = vector.broadcast %cst_95 : f32 to vector<1x256xf32>
    %246 = arith.divf %244, %245 : vector<1x256xf32>
    %247 = arith.mulf %240, %240 : vector<2x256xf32>
    %cst_96 = arith.constant dense<0.000000e+00> : vector<256xf32>
    %248 = vector.multi_reduction <add>, %247, %cst_96 [0] : vector<2x256xf32> to vector<256xf32>
    %249 = vector.shape_cast %248 : vector<256xf32> to vector<1x256xf32>
    %cst_97 = arith.constant 2.000000e+00 : f32
    %250 = vector.broadcast %cst_97 : f32 to vector<1x256xf32>
    %251 = arith.divf %249, %250 : vector<1x256xf32>
    %252 = arith.mulf %246, %246 : vector<1x256xf32>
    %253 = arith.subf %251, %252 : vector<1x256xf32>
    %254 = vector.broadcast %246 : vector<1x256xf32> to vector<2x256xf32>
    %255 = arith.subf %240, %254 : vector<2x256xf32>
    %cst_98 = arith.constant 9.99999974E-6 : f32
    %256 = vector.broadcast %cst_98 : f32 to vector<1x256xf32>
    %257 = arith.addf %253, %256 : vector<1x256xf32>
    %258 = math.rsqrt %257 : vector<1x256xf32>
    %259 = vector.broadcast %258 : vector<1x256xf32> to vector<2x256xf32>
    %260 = arith.mulf %255, %259 : vector<2x256xf32>
    %261 = vector.broadcast %241 : vector<1x256xf32> to vector<2x256xf32>
    %262 = arith.mulf %260, %261 : vector<2x256xf32>
    %263 = vector.broadcast %242 : vector<1x256xf32> to vector<2x256xf32>
    %264 = arith.addf %262, %263 : vector<2x256xf32>
    %cst_99 = arith.constant 0.000000e+00 : f32
    %265 = vector.broadcast %cst_99 : f32 to vector<2x256xf32>
    %266 = arith.maximumf %264, %265 : vector<2x256xf32>
    %c328 = arith.constant 328 : index
    %c0_100 = arith.constant 0 : index
    %267 = vector.load %arg2[%c328, %c0_100] : memref<584x128xf32, #tpu.memory_space<vmem>>, vector<256x24xf32>
    %c24 = arith.constant 24 : index
    %c0_101 = arith.constant 0 : index
    %268 = vector.load %arg4[%c24, %c0_101] : memref<25x256xf32, #tpu.memory_space<vmem>>, vector<1x24xf32>
    %cst_102 = arith.constant dense<0.000000e+00> : vector<2x24xf32>
    %269 = tpu.matmul %266, %267, %cst_102 {dimension_numbers = #tpu.dot_dimension_numbers<[1], [0], [0], [1], [0, 0, 1, 1], [], []>} : vector<2x256xf32>, vector<256x24xf32>, vector<2x24xf32> -> vector<2x24xf32>
    %270 = vector.broadcast %268 : vector<1x24xf32> to vector<2x24xf32>
    %271 = arith.addf %269, %270 : vector<2x24xf32>
    %272 = vector.extract_strided_slice %271 {offsets = [0, 0], sizes = [2, 8], strides = [1, 1]} : vector<2x24xf32> to vector<2x8xf32>
    %273 = vector.extract_strided_slice %271 {offsets = [0, 8], sizes = [2, 8], strides = [1, 1]} : vector<2x24xf32> to vector<2x8xf32>
    %274 = vector.extract_strided_slice %271 {offsets = [0, 16], sizes = [2, 8], strides = [1, 1]} : vector<2x24xf32> to vector<2x8xf32>
    %275 = vector.extract_strided_slice %272 {offsets = [0, 0], sizes = [1, 8], strides = [1, 1]} : vector<2x8xf32> to vector<1x8xf32>
    %276 = vector.extract_strided_slice %273 {offsets = [0, 0], sizes = [1, 8], strides = [1, 1]} : vector<2x8xf32> to vector<1x8xf32>
    %277 = vector.extract_strided_slice %274 {offsets = [0, 0], sizes = [1, 8], strides = [1, 1]} : vector<2x8xf32> to vector<1x8xf32>
    %278 = tpu.concatenate %275, %276, %277 in 0 : vector<1x8xf32>, vector<1x8xf32>, vector<1x8xf32> -> vector<3x8xf32>
    %279 = vector.extract_strided_slice %272 {offsets = [1, 0], sizes = [1, 8], strides = [1, 1]} : vector<2x8xf32> to vector<1x8xf32>
    %280 = vector.extract_strided_slice %273 {offsets = [1, 0], sizes = [1, 8], strides = [1, 1]} : vector<2x8xf32> to vector<1x8xf32>
    %281 = vector.extract_strided_slice %274 {offsets = [1, 0], sizes = [1, 8], strides = [1, 1]} : vector<2x8xf32> to vector<1x8xf32>
    %282 = tpu.concatenate %279, %280, %281 in 0 : vector<1x8xf32>, vector<1x8xf32>, vector<1x8xf32> -> vector<3x8xf32>
    %283 = tpu.concatenate %278, %282 in 0 : vector<3x8xf32>, vector<3x8xf32> -> vector<6x8xf32>
    %c0_103 = arith.constant 0 : index
    %c0_104 = arith.constant 0 : index
    %284 = vector.load %arg5[%c0_103, %c0_104] : memref<6x8xf32, #tpu.memory_space<vmem>>, vector<6x8xf32>
    tpu.vector_store %arg5[%c0_103, %c0_104], %283 {strides = array<i32>} : memref<6x8xf32, #tpu.memory_space<vmem>>, vector<6x8xf32>,
    %cst_105 = arith.constant dense<0.000000e+00> : vector<64x8xf32>
    %285 = tpu.matmul %9, %278, %cst_105 {dimension_numbers = #tpu.dot_dimension_numbers<[1], [0], [0], [1], [0, 0, 1, 1], [], []>} : vector<64x3xf32>, vector<3x8xf32>, vector<64x8xf32> -> vector<64x8xf32>
    %286 = arith.mulf %9, %9 : vector<64x3xf32>
    %cst_106 = arith.constant dense<0.000000e+00> : vector<64xf32>
    %287 = vector.multi_reduction <add>, %286, %cst_106 [1] : vector<64x3xf32> to vector<64xf32>
    %288 = vector.shape_cast %287 : vector<64xf32> to vector<64x1xf32>
    %289 = arith.mulf %278, %278 : vector<3x8xf32>
    %cst_107 = arith.constant dense<0.000000e+00> : vector<8xf32>
    %290 = vector.multi_reduction <add>, %289, %cst_107 [0] : vector<3x8xf32> to vector<8xf32>
    %291 = vector.shape_cast %290 : vector<8xf32> to vector<1x8xf32>
    %cst_108 = arith.constant 2.000000e+00 : f32
    %292 = vector.broadcast %cst_108 : f32 to vector<64x8xf32>
    %293 = arith.mulf %292, %285 : vector<64x8xf32>
    %294 = vector.broadcast %288 : vector<64x1xf32> to vector<64x8xf32>
    %295 = arith.subf %294, %293 : vector<64x8xf32>
    %296 = vector.broadcast %291 : vector<1x8xf32> to vector<64x8xf32>
    %297 = arith.addf %295, %296 : vector<64x8xf32>
    %298 = tpu.iota {dimensions = array<i32: 0>} : vector<64x8xi32>
    %cst_109 = arith.constant dense<0x7F800000> : vector<8xf32>
    %299 = vector.multi_reduction <minimumf>, %297, %cst_109 [0] : vector<64x8xf32> to vector<8xf32>
    %300 = vector.shape_cast %299 : vector<8xf32> to vector<1x8xf32>
    %301 = vector.broadcast %300 : vector<1x8xf32> to vector<64x8xf32>
    %302 = arith.cmpf ole, %297, %301 : vector<64x8xf32>
    %c64_i32 = arith.constant 64 : i32
    %303 = vector.broadcast %c64_i32 : i32 to vector<64x8xi32>
    %304 = arith.select %302, %298, %303 : vector<64x8xi1>, vector<64x8xi32>
    %cst_110 = arith.constant dense<2147483647> : vector<8xi32>
    %305 = vector.multi_reduction <minsi>, %304, %cst_110 [0] : vector<64x8xi32> to vector<8xi32>
    %306 = vector.shape_cast %305 : vector<8xi32> to vector<1x8xi32>
    %307 = vector.broadcast %306 : vector<1x8xi32> to vector<64x8xi32>
    %308 = arith.cmpi eq, %298, %307 : vector<64x8xi32>
    %cst_111 = arith.constant 1.000000e+30 : f32
    %309 = vector.broadcast %cst_111 : f32 to vector<64x8xf32>
    %310 = arith.select %308, %309, %297 : vector<64x8xi1>, vector<64x8xf32>
    %cst_112 = arith.constant dense<0x7F800000> : vector<8xf32>
    %311 = vector.multi_reduction <minimumf>, %310, %cst_112 [0] : vector<64x8xf32> to vector<8xf32>
    %312 = vector.shape_cast %311 : vector<8xf32> to vector<1x8xf32>
    %313 = vector.broadcast %312 : vector<1x8xf32> to vector<64x8xf32>
    %314 = arith.cmpf ole, %310, %313 : vector<64x8xf32>
    %c64_i32_113 = arith.constant 64 : i32
    %315 = vector.broadcast %c64_i32_113 : i32 to vector<64x8xi32>
    %316 = arith.select %314, %298, %315 : vector<64x8xi1>, vector<64x8xi32>
    %cst_114 = arith.constant dense<2147483647> : vector<8xi32>
    %317 = vector.multi_reduction <minsi>, %316, %cst_114 [0] : vector<64x8xi32> to vector<8xi32>
    %318 = vector.shape_cast %317 : vector<8xi32> to vector<1x8xi32>
    %319 = vector.broadcast %318 : vector<1x8xi32> to vector<64x8xi32>
    %320 = arith.cmpi eq, %298, %319 : vector<64x8xi32>
    %cst_115 = arith.constant 1.000000e+30 : f32
    %321 = vector.broadcast %cst_115 : f32 to vector<64x8xf32>
    %322 = arith.select %320, %321, %310 : vector<64x8xi1>, vector<64x8xf32>
    %cst_116 = arith.constant dense<0x7F800000> : vector<8xf32>
    %323 = vector.multi_reduction <minimumf>, %322, %cst_116 [0] : vector<64x8xf32> to vector<8xf32>
    %324 = vector.shape_cast %323 : vector<8xf32> to vector<1x8xf32>
    %325 = vector.broadcast %324 : vector<1x8xf32> to vector<64x8xf32>
    %326 = arith.cmpf ole, %322, %325 : vector<64x8xf32>
    %c64_i32_117 = arith.constant 64 : i32
    %327 = vector.broadcast %c64_i32_117 : i32 to vector<64x8xi32>
    %328 = arith.select %326, %298, %327 : vector<64x8xi1>, vector<64x8xi32>
    %cst_118 = arith.constant dense<2147483647> : vector<8xi32>
    %329 = vector.multi_reduction <minsi>, %328, %cst_118 [0] : vector<64x8xi32> to vector<8xi32>
    %330 = vector.shape_cast %329 : vector<8xi32> to vector<1x8xi32>
    %331 = vector.broadcast %330 : vector<1x8xi32> to vector<64x8xi32>
    %332 = arith.cmpi eq, %298, %331 : vector<64x8xi32>
    %cst_119 = arith.constant 1.000000e+30 : f32
    %333 = vector.broadcast %cst_119 : f32 to vector<64x8xf32>
    %334 = arith.select %332, %333, %322 : vector<64x8xi1>, vector<64x8xf32>
    %cst_120 = arith.constant dense<0x7F800000> : vector<8xf32>
    %335 = vector.multi_reduction <minimumf>, %334, %cst_120 [0] : vector<64x8xf32> to vector<8xf32>
    %336 = vector.shape_cast %335 : vector<8xf32> to vector<1x8xf32>
    %337 = vector.broadcast %336 : vector<1x8xf32> to vector<64x8xf32>
    %338 = arith.cmpf ole, %334, %337 : vector<64x8xf32>
    %c64_i32_121 = arith.constant 64 : i32
    %339 = vector.broadcast %c64_i32_121 : i32 to vector<64x8xi32>
    %340 = arith.select %338, %298, %339 : vector<64x8xi1>, vector<64x8xi32>
    %cst_122 = arith.constant dense<2147483647> : vector<8xi32>
    %341 = vector.multi_reduction <minsi>, %340, %cst_122 [0] : vector<64x8xi32> to vector<8xi32>
    %342 = vector.shape_cast %341 : vector<8xi32> to vector<1x8xi32>
    %343 = vector.broadcast %342 : vector<1x8xi32> to vector<64x8xi32>
    %344 = arith.cmpi eq, %298, %343 : vector<64x8xi32>
    %cst_123 = arith.constant 0.000000e+00 : f32
    %345 = vector.broadcast %cst_123 : f32 to vector<64x8xf32>
    %346 = arith.subf %300, %300 : vector<1x8xf32>
    %cst_124 = arith.constant 1.000000e+00 : f32
    %347 = vector.broadcast %cst_124 : f32 to vector<1x8xf32>
    %348 = arith.mulf %346, %347 : vector<1x8xf32>
    %349 = math.exp %348 : vector<1x8xf32>
    %cst_125 = arith.constant 0.000000e+00 : f32
    %350 = vector.shape_cast %349 : vector<1x8xf32> to vector<1x8xf32>
    %351 = vector.broadcast %350 : vector<1x8xf32> to vector<64x8xf32>
    %352 = vector.broadcast %cst_125 : f32 to vector<64x8xf32>
    %353 = arith.select %308, %351, %352 : vector<64x8xi1>, vector<64x8xf32>
    %354 = arith.addf %345, %353 : vector<64x8xf32>
    %355 = arith.subf %300, %312 : vector<1x8xf32>
    %cst_126 = arith.constant 1.000000e+00 : f32
    %356 = vector.broadcast %cst_126 : f32 to vector<1x8xf32>
    %357 = arith.mulf %355, %356 : vector<1x8xf32>
    %358 = math.exp %357 : vector<1x8xf32>
    %cst_127 = arith.constant 0.000000e+00 : f32
    %359 = vector.shape_cast %358 : vector<1x8xf32> to vector<1x8xf32>
    %360 = vector.broadcast %359 : vector<1x8xf32> to vector<64x8xf32>
    %361 = vector.broadcast %cst_127 : f32 to vector<64x8xf32>
    %362 = arith.select %320, %360, %361 : vector<64x8xi1>, vector<64x8xf32>
    %363 = arith.addf %354, %362 : vector<64x8xf32>
    %364 = arith.subf %300, %324 : vector<1x8xf32>
    %cst_128 = arith.constant 1.000000e+00 : f32
    %365 = vector.broadcast %cst_128 : f32 to vector<1x8xf32>
    %366 = arith.mulf %364, %365 : vector<1x8xf32>
    %367 = math.exp %366 : vector<1x8xf32>
    %cst_129 = arith.constant 0.000000e+00 : f32
    %368 = vector.shape_cast %367 : vector<1x8xf32> to vector<1x8xf32>
    %369 = vector.broadcast %368 : vector<1x8xf32> to vector<64x8xf32>
    %370 = vector.broadcast %cst_129 : f32 to vector<64x8xf32>
    %371 = arith.select %332, %369, %370 : vector<64x8xi1>, vector<64x8xf32>
    %372 = arith.addf %363, %371 : vector<64x8xf32>
    %373 = arith.subf %300, %336 : vector<1x8xf32>
    %cst_130 = arith.constant 1.000000e+00 : f32
    %374 = vector.broadcast %cst_130 : f32 to vector<1x8xf32>
    %375 = arith.mulf %373, %374 : vector<1x8xf32>
    %376 = math.exp %375 : vector<1x8xf32>
    %cst_131 = arith.constant 0.000000e+00 : f32
    %377 = vector.shape_cast %376 : vector<1x8xf32> to vector<1x8xf32>
    %378 = vector.broadcast %377 : vector<1x8xf32> to vector<64x8xf32>
    %379 = vector.broadcast %cst_131 : f32 to vector<64x8xf32>
    %380 = arith.select %344, %378, %379 : vector<64x8xi1>, vector<64x8xf32>
    %381 = arith.addf %372, %380 : vector<64x8xf32>
    %cst_132 = arith.constant dense<0.000000e+00> : vector<3x8xf32>
    %382 = tpu.matmul %6, %381, %cst_132 {dimension_numbers = #tpu.dot_dimension_numbers<[1], [0], [0], [1], [0, 0, 1, 1], [], []>} : vector<3x64xf32>, vector<64x8xf32>, vector<3x8xf32> -> vector<3x8xf32>
    %cst_133 = arith.constant dense<0.000000e+00> : vector<8xf32>
    %383 = vector.multi_reduction <add>, %381, %cst_133 [0] : vector<64x8xf32> to vector<8xf32>
    %384 = vector.shape_cast %383 : vector<8xf32> to vector<1x8xf32>
    %385 = vector.broadcast %384 : vector<1x8xf32> to vector<3x8xf32>
    %386 = arith.divf %382, %385 : vector<3x8xf32>
    %cst_134 = arith.constant dense<0.000000e+00> : vector<64x8xf32>
    %387 = tpu.matmul %10, %282, %cst_134 {dimension_numbers = #tpu.dot_dimension_numbers<[1], [0], [0], [1], [0, 0, 1, 1], [], []>} : vector<64x3xf32>, vector<3x8xf32>, vector<64x8xf32> -> vector<64x8xf32>
    %388 = arith.mulf %10, %10 : vector<64x3xf32>
    %cst_135 = arith.constant dense<0.000000e+00> : vector<64xf32>
    %389 = vector.multi_reduction <add>, %388, %cst_135 [1] : vector<64x3xf32> to vector<64xf32>
    %390 = vector.shape_cast %389 : vector<64xf32> to vector<64x1xf32>
    %391 = arith.mulf %282, %282 : vector<3x8xf32>
    %cst_136 = arith.constant dense<0.000000e+00> : vector<8xf32>
    %392 = vector.multi_reduction <add>, %391, %cst_136 [0] : vector<3x8xf32> to vector<8xf32>
    %393 = vector.shape_cast %392 : vector<8xf32> to vector<1x8xf32>
    %cst_137 = arith.constant 2.000000e+00 : f32
    %394 = vector.broadcast %cst_137 : f32 to vector<64x8xf32>
    %395 = arith.mulf %394, %387 : vector<64x8xf32>
    %396 = vector.broadcast %390 : vector<64x1xf32> to vector<64x8xf32>
    %397 = arith.subf %396, %395 : vector<64x8xf32>
    %398 = vector.broadcast %393 : vector<1x8xf32> to vector<64x8xf32>
    %399 = arith.addf %397, %398 : vector<64x8xf32>
    %400 = tpu.iota {dimensions = array<i32: 0>} : vector<64x8xi32>
    %cst_138 = arith.constant dense<0x7F800000> : vector<8xf32>
    %401 = vector.multi_reduction <minimumf>, %399, %cst_138 [0] : vector<64x8xf32> to vector<8xf32>
    %402 = vector.shape_cast %401 : vector<8xf32> to vector<1x8xf32>
    %403 = vector.broadcast %402 : vector<1x8xf32> to vector<64x8xf32>
    %404 = arith.cmpf ole, %399, %403 : vector<64x8xf32>
    %c64_i32_139 = arith.constant 64 : i32
    %405 = vector.broadcast %c64_i32_139 : i32 to vector<64x8xi32>
    %406 = arith.select %404, %400, %405 : vector<64x8xi1>, vector<64x8xi32>
    %cst_140 = arith.constant dense<2147483647> : vector<8xi32>
    %407 = vector.multi_reduction <minsi>, %406, %cst_140 [0] : vector<64x8xi32> to vector<8xi32>
    %408 = vector.shape_cast %407 : vector<8xi32> to vector<1x8xi32>
    %409 = vector.broadcast %408 : vector<1x8xi32> to vector<64x8xi32>
    %410 = arith.cmpi eq, %400, %409 : vector<64x8xi32>
    %cst_141 = arith.constant 1.000000e+30 : f32
    %411 = vector.broadcast %cst_141 : f32 to vector<64x8xf32>
    %412 = arith.select %410, %411, %399 : vector<64x8xi1>, vector<64x8xf32>
    %cst_142 = arith.constant dense<0x7F800000> : vector<8xf32>
    %413 = vector.multi_reduction <minimumf>, %412, %cst_142 [0] : vector<64x8xf32> to vector<8xf32>
    %414 = vector.shape_cast %413 : vector<8xf32> to vector<1x8xf32>
    %415 = vector.broadcast %414 : vector<1x8xf32> to vector<64x8xf32>
    %416 = arith.cmpf ole, %412, %415 : vector<64x8xf32>
    %c64_i32_143 = arith.constant 64 : i32
    %417 = vector.broadcast %c64_i32_143 : i32 to vector<64x8xi32>
    %418 = arith.select %416, %400, %417 : vector<64x8xi1>, vector<64x8xi32>
    %cst_144 = arith.constant dense<2147483647> : vector<8xi32>
    %419 = vector.multi_reduction <minsi>, %418, %cst_144 [0] : vector<64x8xi32> to vector<8xi32>
    %420 = vector.shape_cast %419 : vector<8xi32> to vector<1x8xi32>
    %421 = vector.broadcast %420 : vector<1x8xi32> to vector<64x8xi32>
    %422 = arith.cmpi eq, %400, %421 : vector<64x8xi32>
    %cst_145 = arith.constant 1.000000e+30 : f32
    %423 = vector.broadcast %cst_145 : f32 to vector<64x8xf32>
    %424 = arith.select %422, %423, %412 : vector<64x8xi1>, vector<64x8xf32>
    %cst_146 = arith.constant dense<0x7F800000> : vector<8xf32>
    %425 = vector.multi_reduction <minimumf>, %424, %cst_146 [0] : vector<64x8xf32> to vector<8xf32>
    %426 = vector.shape_cast %425 : vector<8xf32> to vector<1x8xf32>
    %427 = vector.broadcast %426 : vector<1x8xf32> to vector<64x8xf32>
    %428 = arith.cmpf ole, %424, %427 : vector<64x8xf32>
    %c64_i32_147 = arith.constant 64 : i32
    %429 = vector.broadcast %c64_i32_147 : i32 to vector<64x8xi32>
    %430 = arith.select %428, %400, %429 : vector<64x8xi1>, vector<64x8xi32>
    %cst_148 = arith.constant dense<2147483647> : vector<8xi32>
    %431 = vector.multi_reduction <minsi>, %430, %cst_148 [0] : vector<64x8xi32> to vector<8xi32>
    %432 = vector.shape_cast %431 : vector<8xi32> to vector<1x8xi32>
    %433 = vector.broadcast %432 : vector<1x8xi32> to vector<64x8xi32>
    %434 = arith.cmpi eq, %400, %433 : vector<64x8xi32>
    %cst_149 = arith.constant 1.000000e+30 : f32
    %435 = vector.broadcast %cst_149 : f32 to vector<64x8xf32>
    %436 = arith.select %434, %435, %424 : vector<64x8xi1>, vector<64x8xf32>
    %cst_150 = arith.constant dense<0x7F800000> : vector<8xf32>
    %437 = vector.multi_reduction <minimumf>, %436, %cst_150 [0] : vector<64x8xf32> to vector<8xf32>
    %438 = vector.shape_cast %437 : vector<8xf32> to vector<1x8xf32>
    %439 = vector.broadcast %438 : vector<1x8xf32> to vector<64x8xf32>
    %440 = arith.cmpf ole, %436, %439 : vector<64x8xf32>
    %c64_i32_151 = arith.constant 64 : i32
    %441 = vector.broadcast %c64_i32_151 : i32 to vector<64x8xi32>
    %442 = arith.select %440, %400, %441 : vector<64x8xi1>, vector<64x8xi32>
    %cst_152 = arith.constant dense<2147483647> : vector<8xi32>
    %443 = vector.multi_reduction <minsi>, %442, %cst_152 [0] : vector<64x8xi32> to vector<8xi32>
    %444 = vector.shape_cast %443 : vector<8xi32> to vector<1x8xi32>
    %445 = vector.broadcast %444 : vector<1x8xi32> to vector<64x8xi32>
    %446 = arith.cmpi eq, %400, %445 : vector<64x8xi32>
    %cst_153 = arith.constant 0.000000e+00 : f32
    %447 = vector.broadcast %cst_153 : f32 to vector<64x8xf32>
    %448 = arith.subf %402, %402 : vector<1x8xf32>
    %cst_154 = arith.constant 1.000000e+00 : f32
    %449 = vector.broadcast %cst_154 : f32 to vector<1x8xf32>
    %450 = arith.mulf %448, %449 : vector<1x8xf32>
    %451 = math.exp %450 : vector<1x8xf32>
    %cst_155 = arith.constant 0.000000e+00 : f32
    %452 = vector.shape_cast %451 : vector<1x8xf32> to vector<1x8xf32>
    %453 = vector.broadcast %452 : vector<1x8xf32> to vector<64x8xf32>
    %454 = vector.broadcast %cst_155 : f32 to vector<64x8xf32>
    %455 = arith.select %410, %453, %454 : vector<64x8xi1>, vector<64x8xf32>
    %456 = arith.addf %447, %455 : vector<64x8xf32>
    %457 = arith.subf %402, %414 : vector<1x8xf32>
    %cst_156 = arith.constant 1.000000e+00 : f32
    %458 = vector.broadcast %cst_156 : f32 to vector<1x8xf32>
    %459 = arith.mulf %457, %458 : vector<1x8xf32>
    %460 = math.exp %459 : vector<1x8xf32>
    %cst_157 = arith.constant 0.000000e+00 : f32
    %461 = vector.shape_cast %460 : vector<1x8xf32> to vector<1x8xf32>
    %462 = vector.broadcast %461 : vector<1x8xf32> to vector<64x8xf32>
    %463 = vector.broadcast %cst_157 : f32 to vector<64x8xf32>
    %464 = arith.select %422, %462, %463 : vector<64x8xi1>, vector<64x8xf32>
    %465 = arith.addf %456, %464 : vector<64x8xf32>
    %466 = arith.subf %402, %426 : vector<1x8xf32>
    %cst_158 = arith.constant 1.000000e+00 : f32
    %467 = vector.broadcast %cst_158 : f32 to vector<1x8xf32>
    %468 = arith.mulf %466, %467 : vector<1x8xf32>
    %469 = math.exp %468 : vector<1x8xf32>
    %cst_159 = arith.constant 0.000000e+00 : f32
    %470 = vector.shape_cast %469 : vector<1x8xf32> to vector<1x8xf32>
    %471 = vector.broadcast %470 : vector<1x8xf32> to vector<64x8xf32>
    %472 = vector.broadcast %cst_159 : f32 to vector<64x8xf32>
    %473 = arith.select %434, %471, %472 : vector<64x8xi1>, vector<64x8xf32>
    %474 = arith.addf %465, %473 : vector<64x8xf32>
    %475 = arith.subf %402, %438 : vector<1x8xf32>
    %cst_160 = arith.constant 1.000000e+00 : f32
    %476 = vector.broadcast %cst_160 : f32 to vector<1x8xf32>
    %477 = arith.mulf %475, %476 : vector<1x8xf32>
    %478 = math.exp %477 : vector<1x8xf32>
    %cst_161 = arith.constant 0.000000e+00 : f32
    %479 = vector.shape_cast %478 : vector<1x8xf32> to vector<1x8xf32>
    %480 = vector.broadcast %479 : vector<1x8xf32> to vector<64x8xf32>
    %481 = vector.broadcast %cst_161 : f32 to vector<64x8xf32>
    %482 = arith.select %446, %480, %481 : vector<64x8xi1>, vector<64x8xf32>
    %483 = arith.addf %474, %482 : vector<64x8xf32>
    %cst_162 = arith.constant dense<0.000000e+00> : vector<3x8xf32>
    %484 = tpu.matmul %8, %483, %cst_162 {dimension_numbers = #tpu.dot_dimension_numbers<[1], [0], [0], [1], [0, 0, 1, 1], [], []>} : vector<3x64xf32>, vector<64x8xf32>, vector<3x8xf32> -> vector<3x8xf32>
    %cst_163 = arith.constant dense<0.000000e+00> : vector<8xf32>
    %485 = vector.multi_reduction <add>, %483, %cst_163 [0] : vector<64x8xf32> to vector<8xf32>
    %486 = vector.shape_cast %485 : vector<8xf32> to vector<1x8xf32>
    %487 = vector.broadcast %486 : vector<1x8xf32> to vector<3x8xf32>
    %488 = arith.divf %484, %487 : vector<3x8xf32>
    %489 = tpu.concatenate %386, %488 in 0 : vector<3x8xf32>, vector<3x8xf32> -> vector<6x8xf32>
    %c0_164 = arith.constant 0 : index
    %c0_165 = arith.constant 0 : index
    %490 = vector.load %arg6[%c0_164, %c0_165] : memref<6x8xf32, #tpu.memory_space<vmem>>, vector<6x8xf32>
    tpu.vector_store %arg6[%c0_164, %c0_165], %489 {strides = array<i32>} : memref<6x8xf32, #tpu.memory_space<vmem>>, vector<6x8xf32>,
    return
  }
  func.func @transform_0(%arg0: i32) -> (i32, i32, i32) {
    %c0_i32 = arith.constant 0 : i32
    %c0_i32_0 = arith.constant 0 : i32
    %c0_i32_1 = arith.constant 0 : i32
    %c0_i32_2 = arith.constant 0 : i32
    return %c0_i32, %c0_i32_0, %c0_i32_1 : i32, i32, i32
  }
  func.func @transform_1(%arg0: i32) -> (i32, i32) {
    %c0_i32 = arith.constant 0 : i32
    %c0_i32_0 = arith.constant 0 : i32
    %c0_i32_1 = arith.constant 0 : i32
    return %c0_i32, %c0_i32_0 : i32, i32
  }
  func.func @transform_2(%arg0: i32) -> (i32, i32) {
    %c0_i32 = arith.constant 0 : i32
    %c0_i32_0 = arith.constant 0 : i32
    %c0_i32_1 = arith.constant 0 : i32
    return %c0_i32, %c0_i32_0 : i32, i32
  }
  func.func @transform_3(%arg0: i32) -> (i32, i32) {
    %c0_i32 = arith.constant 0 : i32
    %c0_i32_0 = arith.constant 0 : i32
    %c0_i32_1 = arith.constant 0 : i32
    return %c0_i32, %c0_i32_0 : i32, i32
  }
  func.func @transform_4(%arg0: i32) -> (i32, i32) {
    %c0_i32 = arith.constant 0 : i32
    %c0_i32_0 = arith.constant 0 : i32
    %c0_i32_1 = arith.constant 0 : i32
    return %c0_i32, %c0_i32_0 : i32, i32
  }
  func.func @transform_5(%arg0: i32) -> (i32, i32) {
    %c0_i32 = arith.constant 0 : i32
    %c0_i32_0 = arith.constant 0 : i32
    %c0_i32_1 = arith.constant 0 : i32
    return %c0_i32, %c0_i32_0 : i32, i32
  }
}

</mosaic_0001>

<llo_original>
// kernel: samplenet_forward.1
$region0: #{samplenet_forward.1}
  #allocation0 [shape = 'u32[]', space=smem, size = 0x4, offset = 0x4, fixed_abs, tag = 'smem constant byte address 0x4 - core index']
  #allocation1 [shape = 'u32[72,128]{1,0:T(1,128)}', space=vmem, size = 0x9000, scoped, tag = 'internal scratch']
  %s0 = inlined_call_operand.vmem [shape: f32[2,3,64], index: 0, kind: input, shape index: {}]
  %s1 = inlined_call_operand.hbm [shape: f32[584,128], index: 1, kind: input, shape index: {}]
  %s2 = inlined_call_operand.hbm [shape: f32[544,256], index: 2, kind: input, shape index: {}]
  %s3 = inlined_call_operand.hbm [shape: f32[25,256], index: 3, kind: input, shape index: {}]
  %s4 = inlined_call_operand.vmem [shape: f32[6,8], index: 4, kind: output, shape index: {0}]
  %s5 = inlined_call_operand.vmem [shape: f32[6,8], index: 5, kind: output, shape index: {1}]
  %6 = xla_tuple %s4, %s5
  %s7 = sld [smem:[#allocation0]]
  $region46: #{samplenet_forward.1} parent=0
    _
  %s9 = ssub.s32 1, %s7
  %s10 = scalar_select 0, %s9, %s7
  $region1: #{samplenet_forward.1} parent=0
    #allocation2 [shape = 'u8[299008]{0}', space=vmem, size = 0x49000, scoped, tag = 'input window, operand 1, single buffered']
    #allocation3 [shape = 's32[1]{0}', space=sflag, size = 0x4, scoped, tag = 'scoped memory for samplenet_forward.1']
    #allocation4 [shape = 'u8[557056]{0}', space=vmem, size = 0x88000, scoped, tag = 'input window, operand 2, single buffered']
    #allocation5 [shape = 's32[1]{0}', space=sflag, size = 0x4, scoped, tag = 'scoped memory for samplenet_forward.1']
    #allocation6 [shape = 'u8[32768]{0}', space=vmem, size = 0x8000, scoped, tag = 'input window, operand 3, single buffered']
    %11 = vsyncpa [#allocation3], 0
    %12 = vsyncpa [#allocation5], 0
    // Predicated region
    $region2: #{samplenet_forward.1} parent=1 // pred_check
      _
    $region3: #{samplenet_forward.1} parent=1 // pred_check_branch
      %14 = sbr.rel (0) target = $region5
    $region4: #{samplenet_forward.1} parent=1 // pred_region
      _
    $region5: #{samplenet_forward.1} parent=1 // pred_fallthru
      _
    // Predicated region
    $region6: #{samplenet_forward.1} parent=1 // pred_check
      _
    $region7: #{samplenet_forward.1} parent=1 // pred_check_branch
      %16 = sbr.rel (0) target = $region9
    $region8: #{samplenet_forward.1} parent=1 // pred_region
      %18 = vsyncadd [#allocation3], 0
      %s19 = sshll.u32 %s1, 4
      %s20 = int_to_ptr.hbm [resolvable:$true] %s19
      %s21 = sshll.u32 [#allocation2], 4
      %s22 = int_to_ptr.vmem [resolvable:$true] %s21
      %27 = dma.hbm_to_vmem [thread:$0]  %s20, 9344, %s22, [#allocation3], 128, 128, 8
    $region9: #{samplenet_forward.1} parent=1 // pred_fallthru
      _
    // Predicated region
    $region10: #{samplenet_forward.1} parent=1 // pred_check
      _
    $region11: #{samplenet_forward.1} parent=1 // pred_check_branch
      %29 = sbr.rel (0) target = $region13
    $region12: #{samplenet_forward.1} parent=1 // pred_region
      %31 = vsyncadd [#allocation5], 0
      %s32 = sshll.u32 %s2, 4
      %s33 = int_to_ptr.hbm [resolvable:$true] %s32
      %s34 = sshll.u32 [#allocation4], 4
      %s35 = int_to_ptr.vmem [resolvable:$true] %s34
      %40 = dma.hbm_to_vmem [thread:$0]  %s33, 17408, %s35, [#allocation5], 256, 256, 16
    $region13: #{samplenet_forward.1} parent=1 // pred_fallthru
      _
    // Predicated region
    $region14: #{samplenet_forward.1} parent=1 // pred_check
      _
    $region15: #{samplenet_forward.1} parent=1 // pred_check_branch
      %42 = sbr.rel (0) target = $region17
    $region16: #{samplenet_forward.1} parent=1 // pred_region
      %44 = vsyncadd [#allocation5], 0
      %s45 = sshll.u32 %s3, 4
      %s46 = int_to_ptr.hbm [resolvable:$true] %s45
      %s47 = sshll.u32 [#allocation6], 4
      %s48 = int_to_ptr.vmem [resolvable:$true] %s47
      %53 = dma.hbm_to_vmem [thread:$0]  %s46, 1024, %s48, [#allocation5], 256, 256, 16
    $region17: #{samplenet_forward.1} parent=1 // pred_fallthru
      _
    // Predicated region
    $region18: #{samplenet_forward.1} parent=1 // pred_check
      _
    $region19: #{samplenet_forward.1} parent=1 // pred_check_branch
      %55 = sbr.rel (0) target = $region21
    $region20: #{samplenet_forward.1} parent=1 // pred_region
      %57 = dma.done [#allocation3], 9344
    $region21: #{samplenet_forward.1} parent=1 // pred_fallthru
      _
    // Predicated region
    $region22: #{samplenet_forward.1} parent=1 // pred_check
      _
    $region23: #{samplenet_forward.1} parent=1 // pred_check_branch
      %59 = sbr.rel (0) target = $region25
    $region24: #{samplenet_forward.1} parent=1 // pred_region
      %61 = dma.done [#allocation5], 17408
    $region25: #{samplenet_forward.1} parent=1 // pred_fallthru
      _
    // Predicated region
    $region26: #{samplenet_forward.1} parent=1 // pred_check
      _
    $region27: #{samplenet_forward.1} parent=1 // pred_check_branch
      %63 = sbr.rel (0) target = $region29
    $region28: #{samplenet_forward.1} parent=1 // pred_region
      %65 = dma.done [#allocation5], 1024
    $region29: #{samplenet_forward.1} parent=1 // pred_fallthru
      _
    %v66 = vlaneseq
    %v67 = vshrl.u32 %v66, 7
    %v68 = vadd.s32 %v67, 8
    %v69 = vadd.s32 %v67, 16
    %v70 = vadd.s32 %v67, 24
    %v71 = vadd.s32 %v67, 32
    %v72 = vadd.s32 %v67, 40
    %v73 = vadd.s32 %v67, 48
    %v74 = vadd.s32 %v67, 56
    %v75 = vlaneseq
    %v76 = vand.u32 %v75, 127
    %vm77 = vcmp.eq.s32.totalorder %v67, %v76
    %vm78 = vcmp.eq.s32.totalorder %v68, %v76
    %vm79 = vcmp.eq.s32.totalorder %v69, %v76
    %vm80 = vcmp.eq.s32.totalorder %v70, %v76
    %vm81 = vcmp.eq.s32.totalorder %v71, %v76
    %vm82 = vcmp.eq.s32.totalorder %v72, %v76
    %vm83 = vcmp.eq.s32.totalorder %v73, %v76
    %vm84 = vcmp.eq.s32.totalorder %v74, %v76
    %v85 = vsel %vm77, 1, 0
    %v86 = vsel %vm78, 1, 0
    %v87 = vsel %vm79, 1, 0
    %v88 = vsel %vm80, 1, 0
    %v89 = vsel %vm81, 1, 0
    %v90 = vsel %vm82, 1, 0
    %v91 = vsel %vm83, 1, 0
    %v92 = vsel %vm84, 1, 0
    %v93 = vcvt.s32.f32 %v85
    %v94 = vcvt.s32.f32 %v86
    %v95 = vcvt.s32.f32 %v87
    %v96 = vcvt.s32.f32 %v88
    %v97 = vcvt.s32.f32 %v89
    %v98 = vcvt.s32.f32 %v90
    %v99 = vcvt.s32.f32 %v91
    %v100 = vcvt.s32.f32 %v92
    %v101 = vld [vmem:[%s0] sm:$0x7]
    %s102 = scalar_lea.vmem %s0, 4
    %v103 = vld [vmem:[%s102] sm:$0x7]
    %vm104 = vcmask 523264
    %v106 = vsel %vm104, %v93, 0
    %v109 = vsel %vm104, %v94, 0
    %v112 = vsel %vm104, %v95, 0
    %v115 = vsel %vm104, %v96, 0
    %v118 = vsel %vm104, %v97, 0
    %v121 = vsel %vm104, %v98, 0
    %v124 = vsel %vm104, %v99, 0
    %v127 = vsel %vm104, %v100, 0
    %v130 = vsel %vm104, %v101, 0
    %132 = vmatpush.xpose.msra.mxu0 0.0
    %133 = vmatpush.xpose.msra.mxu0 0.0
    %134 = vmatpush.xpose.msra.mxu0 0.0
    %135 = vmatpush.xpose.msra.mxu0 0.0
    %136 = vmatpush.xpose.msra.mxu0 0.0
    %137 = vmatpush.xpose.msra.mxu0 0.0
    %138 = vmatpush.xpose.msra.mxu0 0.0
    %139 = vmatpush.xpose.msra.mxu0 0.0
    %140 = vmatpush.xpose.msra.mxu0 0.0
    %141 = vmatpush.xpose.msra.mxu0 0.0
    %142 = vmatpush.xpose.msra.mxu0 0.0
    %143 = vmatpush.xpose.msra.mxu0 0.0
    %144 = vmatpush.xpose.msra.mxu0 0.0
    %145 = vmatpush.xpose.msra.mxu0 0.0
    %146 = vmatpush.xpose.msra.mxu0 0.0
    %147 = vmatpush.xpose.msra.mxu0 %v130
    %148 = vmatmul.f32.gmra.mxu0 %v106
    %v149 = vpop.f32.mrf.mxu0
    %v150 = vadd.f32 0.0, %v149
    %151 = vmatmul.f32.gmra.mxu0 %v109
    %v152 = vpop.f32.mrf.mxu0
    %v153 = vadd.f32 0.0, %v152
    %154 = vmatmul.f32.gmra.mxu0 %v112
    %v155 = vpop.f32.mrf.mxu0
    %v156 = vadd.f32 0.0, %v155
    %157 = vmatmul.f32.gmra.mxu0 %v115
    %v158 = vpop.f32.mrf.mxu0
    %v159 = vadd.f32 0.0, %v158
    %160 = vmatmul.f32.gmra.mxu0 %v118
    %v161 = vpop.f32.mrf.mxu0
    %v162 = vadd.f32 0.0, %v161
    %163 = vmatmul.f32.gmra.mxu0 %v121
    %v164 = vpop.f32.mrf.mxu0
    %v165 = vadd.f32 0.0, %v164
    %166 = vmatmul.f32.gmra.mxu0 %v124
    %v167 = vpop.f32.mrf.mxu0
    %v168 = vadd.f32 0.0, %v167
    %169 = vmatmul.f32.gmra.mxu0 %v127
    %v170 = vpop.f32.mrf.mxu0
    %v171 = vadd.f32 0.0, %v170
    %172 = vdwg.mxu0
    %v174 = vsel %vm104, %v103, 0
    %176 = vmatpush.xpose.msra.mxu0 0.0
    %177 = vmatpush.xpose.msra.mxu0 0.0
    %178 = vmatpush.xpose.msra.mxu0 0.0
    %179 = vmatpush.xpose.msra.mxu0 0.0
    %180 = vmatpush.xpose.msra.mxu0 0.0
    %181 = vmatpush.xpose.msra.mxu0 0.0
    %182 = vmatpush.xpose.msra.mxu0 0.0
    %183 = vmatpush.xpose.msra.mxu0 0.0
    %184 = vmatpush.xpose.msra.mxu0 0.0
    %185 = vmatpush.xpose.msra.mxu0 0.0
    %186 = vmatpush.xpose.msra.mxu0 0.0
    %187 = vmatpush.xpose.msra.mxu0 0.0
    %188 = vmatpush.xpose.msra.mxu0 0.0
    %189 = vmatpush.xpose.msra.mxu0 0.0
    %190 = vmatpush.xpose.msra.mxu0 0.0
    %191 = vmatpush.xpose.msra.mxu0 %v174
    %192 = vmatmul.f32.gmra.mxu0 %v106
    %v193 = vpop.f32.mrf.mxu0
    %v194 = vadd.f32 0.0, %v193
    %195 = vmatmul.f32.gmra.mxu0 %v109
    %v196 = vpop.f32.mrf.mxu0
    %v197 = vadd.f32 0.0, %v196
    %198 = vmatmul.f32.gmra.mxu0 %v112
    %v199 = vpop.f32.mrf.mxu0
    %v200 = vadd.f32 0.0, %v199
    %201 = vmatmul.f32.gmra.mxu0 %v115
    %v202 = vpop.f32.mrf.mxu0
    %v203 = vadd.f32 0.0, %v202
    %204 = vmatmul.f32.gmra.mxu0 %v118
    %v205 = vpop.f32.mrf.mxu0
    %v206 = vadd.f32 0.0, %v205
    %207 = vmatmul.f32.gmra.mxu0 %v121
    %v208 = vpop.f32.mrf.mxu0
    %v209 = vadd.f32 0.0, %v208
    %210 = vmatmul.f32.gmra.mxu0 %v124
    %v211 = vpop.f32.mrf.mxu0
    %v212 = vadd.f32 0.0, %v211
    %213 = vmatmul.f32.gmra.mxu0 %v127
    %v214 = vpop.f32.mrf.mxu0
    %v215 = vadd.f32 0.0, %v214
    %216 = vdwg.mxu0
    %v217 = vld [vmem:[#allocation2] sm:$0x7]
    %v218 = vld [vmem:[#allocation6] ss:$0 sm:$0xff]
    %vm219 = vcmask 23552
    %v221 = vsel %vm219, %v150, 0
    %v224 = vsel %vm219, %v153, 0
    %v227 = vsel %vm219, %v156, 0
    %v230 = vsel %vm219, %v159, 0
    %v233 = vsel %vm219, %v162, 0
    %v236 = vsel %vm219, %v165, 0
    %v239 = vsel %vm219, %v168, 0
    %v242 = vsel %vm219, %v171, 0
    %v245 = vsel %vm219, %v194, 0
    %v248 = vsel %vm219, %v197, 0
    %v251 = vsel %vm219, %v200, 0
    %v254 = vsel %vm219, %v203, 0
    %v257 = vsel %vm219, %v206, 0
    %v260 = vsel %vm219, %v209, 0
    %v263 = vsel %vm219, %v212, 0
    %v266 = vsel %vm219, %v215, 0
    %vm268 = vcmask 1042432
    %v270 = vsel %vm268, %v217, 0
    %272 = vmatpush.msra.mxu0 0.0
    %273 = vmatpush.msra.mxu0 0.0
    %274 = vmatpush.msra.mxu0 0.0
    %275 = vmatpush.msra.mxu0 0.0
    %276 = vmatpush.msra.mxu0 0.0
    %277 = vmatpush.msra.mxu0 0.0
    %278 = vmatpush.msra.mxu0 0.0
    %279 = vmatpush.msra.mxu0 0.0
    %280 = vmatpush.msra.mxu0 0.0
    %281 = vmatpush.msra.mxu0 0.0
    %282 = vmatpush.msra.mxu0 0.0
    %283 = vmatpush.msra.mxu0 0.0
    %284 = vmatpush.msra.mxu0 0.0
    %285 = vmatpush.msra.mxu0 0.0
    %286 = vmatpush.msra.mxu0 0.0
    %287 = vmatpush.msra.mxu0 %v270
    %288 = vmatmul.f32.gmra.mxu0 %v221
    %v289 = vpop.f32.mrf.mxu0
    %v290 = vadd.f32 %v218, %v289
    %291 = vmatmul.f32.gmra.mxu0 %v224
    %v292 = vpop.f32.mrf.mxu0
    %v293 = vadd.f32 %v218, %v292
    %294 = vmatmul.f32.gmra.mxu0 %v227
    %v295 = vpop.f32.mrf.mxu0
    %v296 = vadd.f32 %v218, %v295
    %297 = vmatmul.f32.gmra.mxu0 %v230
    %v298 = vpop.f32.mrf.mxu0
    %v299 = vadd.f32 %v218, %v298
    %300 = vmatmul.f32.gmra.mxu0 %v233
    %v301 = vpop.f32.mrf.mxu0
    %v302 = vadd.f32 %v218, %v301
    %303 = vmatmul.f32.gmra.mxu0 %v236
    %v304 = vpop.f32.mrf.mxu0
    %v305 = vadd.f32 %v218, %v304
    %306 = vmatmul.f32.gmra.mxu0 %v239
    %v307 = vpop.f32.mrf.mxu0
    %v308 = vadd.f32 %v218, %v307
    %309 = vmatmul.f32.gmra.mxu0 %v242
    %v310 = vpop.f32.mrf.mxu0
    %v311 = vadd.f32 %v218, %v310
    %312 = vmatmul.f32.gmra.mxu0 %v245
    %v313 = vpop.f32.mrf.mxu0
    %v314 = vadd.f32 %v218, %v313
    %315 = vmatmul.f32.gmra.mxu0 %v248
    %v316 = vpop.f32.mrf.mxu0
    %v317 = vadd.f32 %v218, %v316
    %318 = vmatmul.f32.gmra.mxu0 %v251
    %v319 = vpop.f32.mrf.mxu0
    %v320 = vadd.f32 %v218, %v319
    %321 = vmatmul.f32.gmra.mxu0 %v254
    %v322 = vpop.f32.mrf.mxu0
    %v323 = vadd.f32 %v218, %v322
    %324 = vmatmul.f32.gmra.mxu0 %v257
    %v325 = vpop.f32.mrf.mxu0
    %v326 = vadd.f32 %v218, %v325
    %327 = vmatmul.f32.gmra.mxu0 %v260
    %v328 = vpop.f32.mrf.mxu0
    %v329 = vadd.f32 %v218, %v328
    %330 = vmatmul.f32.gmra.mxu0 %v263
    %v331 = vpop.f32.mrf.mxu0
    %v332 = vadd.f32 %v218, %v331
    %333 = vmatmul.f32.gmra.mxu0 %v266
    %v334 = vpop.f32.mrf.mxu0
    %v335 = vadd.f32 %v218, %v334
    %336 = vdwg.mxu0
    %v337 = vld [vmem:[#allocation6 + $0x1] ss:$0 sm:$0xff]
    %v338 = vld [vmem:[#allocation6 + $0x2] ss:$0 sm:$0xff]
    %v339 = vsel %vm104, %v290, 0.0
    %v340 = vsel %vm104, %v293, 0.0
    %v341 = vadd.f32 %v339, %v340
    %v342 = vsel %vm104, %v296, 0.0
    %v343 = vadd.f32 %v341, %v342
    %v344 = vsel %vm104, %v299, 0.0
    %v345 = vadd.f32 %v343, %v344
    %v346 = vsel %vm104, %v302, 0.0
    %v347 = vadd.f32 %v345, %v346
    %v348 = vsel %vm104, %v305, 0.0
    %v349 = vadd.f32 %v347, %v348
    %v350 = vsel %vm104, %v308, 0.0
    %v351 = vadd.f32 %v349, %v350
    %v352 = vsel %vm104, %v311, 0.0
    %v353 = vadd.f32 %v351, %v352
    %v354 = vsel %vm104, %v314, 0.0
    %v355 = vadd.f32 %v353, %v354
    %v356 = vsel %vm104, %v317, 0.0
    %v357 = vadd.f32 %v355, %v356
    %v358 = vsel %vm104, %v320, 0.0
    %v359 = vadd.f32 %v357, %v358
    %v360 = vsel %vm104, %v323, 0.0
    %v361 = vadd.f32 %v359, %v360
    %v362 = vsel %vm104, %v326, 0.0
    %v363 = vadd.f32 %v361, %v362
    %v364 = vsel %vm104, %v329, 0.0
    %v365 = vadd.f32 %v363, %v364
    %v366 = vsel %vm104, %v332, 0.0
    %v367 = vadd.f32 %v365, %v366
    %v368 = vsel %vm104, %v335, 0.0
    %v369 = vadd.f32 %v367, %v368
    %v370 = vrot.slane %v369, 4
    %v371 = vadd.f32 %v369, %v370
    %v372 = vrot.slane %v371, 2
    %v373 = vadd.f32 %v371, %v372
    %v374 = vrot.slane %v373, 1
    %v375 = vadd.f32 %v373, %v374
    %v376 = vrcp.pop 128.0
    %v377 = vmul.f32 128.0, %v376
    %v378 = vsub.f32 1.0, %v377
    %v379 = vmul.f32 %v376, %v378
    %v380 = vadd.f32 %v376, %v379
    %vm381 = vweird.f32 %v376
    %v382 = vsel %vm381, %v376, %v380
    %v383 = vmul.f32 %v375, %v382
    %v384 = vmul.f32 %v290, %v290
    %v385 = vmul.f32 %v293, %v293
    %v386 = vmul.f32 %v296, %v296
    %v387 = vmul.f32 %v299, %v299
    %v388 = vmul.f32 %v302, %v302
    %v389 = vmul.f32 %v305, %v305
    %v390 = vmul.f32 %v308, %v308
    %v391 = vmul.f32 %v311, %v311
    %v392 = vmul.f32 %v314, %v314
    %v393 = vmul.f32 %v317, %v317
    %v394 = vmul.f32 %v320, %v320
    %v395 = vmul.f32 %v323, %v323
    %v396 = vmul.f32 %v326, %v326
    %v397 = vmul.f32 %v329, %v329
    %v398 = vmul.f32 %v332, %v332
    %v399 = vmul.f32 %v335, %v335
    %v400 = vsel %vm104, %v384, 0.0
    %v401 = vsel %vm104, %v385, 0.0
    %v402 = vadd.f32 %v400, %v401
    %v403 = vsel %vm104, %v386, 0.0
    %v404 = vadd.f32 %v402, %v403
    %v405 = vsel %vm104, %v387, 0.0
    %v406 = vadd.f32 %v404, %v405
    %v407 = vsel %vm104, %v388, 0.0
    %v408 = vadd.f32 %v406, %v407
    %v409 = vsel %vm104, %v389, 0.0
    %v410 = vadd.f32 %v408, %v409
    %v411 = vsel %vm104, %v390, 0.0
    %v412 = vadd.f32 %v410, %v411
    %v413 = vsel %vm104, %v391, 0.0
    %v414 = vadd.f32 %v412, %v413
    %v415 = vsel %vm104, %v392, 0.0
    %v416 = vadd.f32 %v414, %v415
    %v417 = vsel %vm104, %v393, 0.0
    %v418 = vadd.f32 %v416, %v417
    %v419 = vsel %vm104, %v394, 0.0
    %v420 = vadd.f32 %v418, %v419
    %v421 = vsel %vm104, %v395, 0.0
    %v422 = vadd.f32 %v420, %v421
    %v423 = vsel %vm104, %v396, 0.0
    %v424 = vadd.f32 %v422, %v423
    %v425 = vsel %vm104, %v397, 0.0
    %v426 = vadd.f32 %v424, %v425
    %v427 = vsel %vm104, %v398, 0.0
    %v428 = vadd.f32 %v426, %v427
    %v429 = vsel %vm104, %v399, 0.0
    %v430 = vadd.f32 %v428, %v429
    %v431 = vrot.slane %v430, 4
    %v432 = vadd.f32 %v430, %v431
    %v433 = vrot.slane %v432, 2
    %v434 = vadd.f32 %v432, %v433
    %v435 = vrot.slane %v434, 1
    %v436 = vadd.f32 %v434, %v435
    %v437 = vmul.f32 %v436, %v382
    %v438 = vmul.f32 %v383, %v383
    %v439 = vsub.f32 %v437, %v438
    %v440 = vsub.f32 %v290, %v383
    %v441 = vsub.f32 %v293, %v383
    %v442 = vsub.f32 %v296, %v383
    %v443 = vsub.f32 %v299, %v383
    %v444 = vsub.f32 %v302, %v383
    %v445 = vsub.f32 %v305, %v383
    %v446 = vsub.f32 %v308, %v383
    %v447 = vsub.f32 %v311, %v383
    %v448 = vsub.f32 %v314, %v383
    %v449 = vsub.f32 %v317, %v383
    %v450 = vsub.f32 %v320, %v383
    %v451 = vsub.f32 %v323, %v383
    %v452 = vsub.f32 %v326, %v383
    %v453 = vsub.f32 %v329, %v383
    %v454 = vsub.f32 %v332, %v383
    %v455 = vsub.f32 %v335, %v383
    %v456 = vadd.f32 %v439, 1e-05
    %v457 = vrsqrt.pop %v456
    %v458 = vmul.f32 %v457, %v456
    %v459 = vmul.f32 %v458, %v457
    %v460 = vmul.f32 0.5, %v459
    %v461 = vsub.f32 1.5, %v460
    %v462 = vmul.f32 %v457, %v461
    %vm463 = vweird.f32 %v456
    %vm464 = vweird.f32 %v457
    %vm465 = vmor %vm463, %vm464
    %v466 = vsel %vm465, %v457, %v462
    %v467 = vmul.f32 %v440, %v466
    %v468 = vmul.f32 %v441, %v466
    %v469 = vmul.f32 %v442, %v466
    %v470 = vmul.f32 %v443, %v466
    %v471 = vmul.f32 %v444, %v466
    %v472 = vmul.f32 %v445, %v466
    %v473 = vmul.f32 %v446, %v466
    %v474 = vmul.f32 %v447, %v466
    %v475 = vmul.f32 %v448, %v466
    %v476 = vmul.f32 %v449, %v466
    %v477 = vmul.f32 %v450, %v466
    %v478 = vmul.f32 %v451, %v466
    %v479 = vmul.f32 %v452, %v466
    %v480 = vmul.f32 %v453, %v466
    %v481 = vmul.f32 %v454, %v466
    %v482 = vmul.f32 %v455, %v466
    %v483 = vmul.f32 %v467, %v337
    %v484 = vmul.f32 %v468, %v337
    %v485 = vmul.f32 %v469, %v337
    %v486 = vmul.f32 %v470, %v337
    %v487 = vmul.f32 %v471, %v337
    %v488 = vmul.f32 %v472, %v337
    %v489 = vmul.f32 %v473, %v337
    %v490 = vmul.f32 %v474, %v337
    %v491 = vmul.f32 %v475, %v337
    %v492 = vmul.f32 %v476, %v337
    %v493 = vmul.f32 %v477, %v337
    %v494 = vmul.f32 %v478, %v337
    %v495 = vmul.f32 %v479, %v337
    %v496 = vmul.f32 %v480, %v337
    %v497 = vmul.f32 %v481, %v337
    %v498 = vmul.f32 %v482, %v337
    %v499 = vadd.f32 %v483, %v338
    %v500 = vadd.f32 %v484, %v338
    %v501 = vadd.f32 %v485, %v338
    %v502 = vadd.f32 %v486, %v338
    %v503 = vadd.f32 %v487, %v338
    %v504 = vadd.f32 %v488, %v338
    %v505 = vadd.f32 %v489, %v338
    %v506 = vadd.f32 %v490, %v338
    %v507 = vadd.f32 %v491, %v338
    %v508 = vadd.f32 %v492, %v338
    %v509 = vadd.f32 %v493, %v338
    %v510 = vadd.f32 %v494, %v338
    %v511 = vadd.f32 %v495, %v338
    %v512 = vadd.f32 %v496, %v338
    %v513 = vadd.f32 %v497, %v338
    %v514 = vadd.f32 %v498, %v338
    %v515 = vmax.f32 %v499, 0.0
    %v516 = vmax.f32 %v500, 0.0
    %v517 = vmax.f32 %v501, 0.0
    %v518 = vmax.f32 %v502, 0.0
    %v519 = vmax.f32 %v503, 0.0
    %v520 = vmax.f32 %v504, 0.0
    %v521 = vmax.f32 %v505, 0.0
    %v522 = vmax.f32 %v506, 0.0
    %v523 = vmax.f32 %v507, 0.0
    %v524 = vmax.f32 %v508, 0.0
    %v525 = vmax.f32 %v509, 0.0
    %v526 = vmax.f32 %v510, 0.0
    %v527 = vmax.f32 %v511, 0.0
    %v528 = vmax.f32 %v512, 0.0
    %v529 = vmax.f32 %v513, 0.0
    %v530 = vmax.f32 %v514, 0.0
    %v531 = vld [vmem:[#allocation2 + $0x8] sm:$0xff]
    %v532 = vld [vmem:[#allocation2 + $0x10] sm:$0xff]
    %v533 = vld [vmem:[#allocation2 + $0x18] sm:$0xff]
    %v534 = vld [vmem:[#allocation2 + $0x20] sm:$0xff]
    %v535 = vld [vmem:[#allocation2 + $0x28] sm:$0xff]
    %v536 = vld [vmem:[#allocation2 + $0x30] sm:$0xff]
    %v537 = vld [vmem:[#allocation2 + $0x38] sm:$0xff]
    %v538 = vld [vmem:[#allocation2 + $0x40] sm:$0xff]
    %v539 = vld [vmem:[#allocation6 + $0x3] ss:$0 sm:$0xff]
    %v541 = vsel %vm104, %v515, 0
    %v544 = vsel %vm104, %v516, 0
    %v547 = vsel %vm104, %v517, 0
    %v550 = vsel %vm104, %v518, 0
    %v553 = vsel %vm104, %v519, 0
    %v556 = vsel %vm104, %v520, 0
    %v559 = vsel %vm104, %v521, 0
    %v562 = vsel %vm104, %v522, 0
    %v565 = vsel %vm104, %v523, 0
    %v568 = vsel %vm104, %v524, 0
    %v571 = vsel %vm104, %v525, 0
    %v574 = vsel %vm104, %v526, 0
    %v577 = vsel %vm104, %v527, 0
    %v580 = vsel %vm104, %v528, 0
    %v583 = vsel %vm104, %v529, 0
    %v586 = vsel %vm104, %v530, 0
    %588 = vmatpush.msra.mxu0 0.0
    %589 = vmatpush.msra.mxu0 0.0
    %590 = vmatpush.msra.mxu0 0.0
    %591 = vmatpush.msra.mxu0 0.0
    %592 = vmatpush.msra.mxu0 0.0
    %593 = vmatpush.msra.mxu0 0.0
    %594 = vmatpush.msra.mxu0 0.0
    %595 = vmatpush.msra.mxu0 0.0
    %596 = vmatpush.msra.mxu0 %v538
    %597 = vmatpush.msra.mxu0 %v537
    %598 = vmatpush.msra.mxu0 %v536
    %599 = vmatpush.msra.mxu0 %v535
    %600 = vmatpush.msra.mxu0 %v534
    %601 = vmatpush.msra.mxu0 %v533
    %602 = vmatpush.msra.mxu0 %v532
    %603 = vmatpush.msra.mxu0 %v531
    %604 = vmatmul.f32.gmra.mxu0 %v541
    %v605 = vpop.f32.mrf.mxu0
    %v606 = vadd.f32 %v539, %v605
    %607 = vmatmul.f32.gmra.mxu0 %v544
    %v608 = vpop.f32.mrf.mxu0
    %v609 = vadd.f32 %v539, %v608
    %610 = vmatmul.f32.gmra.mxu0 %v547
    %v611 = vpop.f32.mrf.mxu0
    %v612 = vadd.f32 %v539, %v611
    %613 = vmatmul.f32.gmra.mxu0 %v550
    %v614 = vpop.f32.mrf.mxu0
    %v615 = vadd.f32 %v539, %v614
    %616 = vmatmul.f32.gmra.mxu0 %v553
    %v617 = vpop.f32.mrf.mxu0
    %v618 = vadd.f32 %v539, %v617
    %619 = vmatmul.f32.gmra.mxu0 %v556
    %v620 = vpop.f32.mrf.mxu0
    %v621 = vadd.f32 %v539, %v620
    %622 = vmatmul.f32.gmra.mxu0 %v559
    %v623 = vpop.f32.mrf.mxu0
    %v624 = vadd.f32 %v539, %v623
    %625 = vmatmul.f32.gmra.mxu0 %v562
    %v626 = vpop.f32.mrf.mxu0
    %v627 = vadd.f32 %v539, %v626
    %628 = vmatmul.f32.gmra.mxu0 %v565
    %v629 = vpop.f32.mrf.mxu0
    %v630 = vadd.f32 %v539, %v629
    %631 = vmatmul.f32.gmra.mxu0 %v568
    %v632 = vpop.f32.mrf.mxu0
    %v633 = vadd.f32 %v539, %v632
    %634 = vmatmul.f32.gmra.mxu0 %v571
    %v635 = vpop.f32.mrf.mxu0
    %v636 = vadd.f32 %v539, %v635
    %637 = vmatmul.f32.gmra.mxu0 %v574
    %v638 = vpop.f32.mrf.mxu0
    %v639 = vadd.f32 %v539, %v638
    %640 = vmatmul.f32.gmra.mxu0 %v577
    %v641 = vpop.f32.mrf.mxu0
    %v642 = vadd.f32 %v539, %v641
    %643 = vmatmul.f32.gmra.mxu0 %v580
    %v644 = vpop.f32.mrf.mxu0
    %v645 = vadd.f32 %v539, %v644
    %646 = vmatmul.f32.gmra.mxu0 %v583
    %v647 = vpop.f32.mrf.mxu0
    %v648 = vadd.f32 %v539, %v647
    %649 = vmatmul.f32.gmra.mxu0 %v586
    %v650 = vpop.f32.mrf.mxu0
    %v651 = vadd.f32 %v539, %v650
    %652 = vdwg.mxu0
    %v653 = vld [vmem:[#allocation6 + $0x4] ss:$0 sm:$0xff]
    %v654 = vld [vmem:[#allocation6 + $0x5] ss:$0 sm:$0xff]
    %v655 = vsel %vm104, %v606, 0.0
    %v656 = vsel %vm104, %v609, 0.0
    %v657 = vadd.f32 %v655, %v656
    %v658 = vsel %vm104, %v612, 0.0
    %v659 = vadd.f32 %v657, %v658
    %v660 = vsel %vm104, %v615, 0.0
    %v661 = vadd.f32 %v659, %v660
    %v662 = vsel %vm104, %v618, 0.0
    %v663 = vadd.f32 %v661, %v662
    %v664 = vsel %vm104, %v621, 0.0
    %v665 = vadd.f32 %v663, %v664
    %v666 = vsel %vm104, %v624, 0.0
    %v667 = vadd.f32 %v665, %v666
    %v668 = vsel %vm104, %v627, 0.0
    %v669 = vadd.f32 %v667, %v668
    %v670 = vsel %vm104, %v630, 0.0
    %v671 = vadd.f32 %v669, %v670
    %v672 = vsel %vm104, %v633, 0.0
    %v673 = vadd.f32 %v671, %v672
    %v674 = vsel %vm104, %v636, 0.0
    %v675 = vadd.f32 %v673, %v674
    %v676 = vsel %vm104, %v639, 0.0
    %v677 = vadd.f32 %v675, %v676
    %v678 = vsel %vm104, %v642, 0.0
    %v679 = vadd.f32 %v677, %v678
    %v680 = vsel %vm104, %v645, 0.0
    %v681 = vadd.f32 %v679, %v680
    %v682 = vsel %vm104, %v648, 0.0
    %v683 = vadd.f32 %v681, %v682
    %v684 = vsel %vm104, %v651, 0.0
    %v685 = vadd.f32 %v683, %v684
    %v686 = vrot.slane %v685, 4
    %v687 = vadd.f32 %v685, %v686
    %v688 = vrot.slane %v687, 2
    %v689 = vadd.f32 %v687, %v688
    %v690 = vrot.slane %v689, 1
    %v691 = vadd.f32 %v689, %v690
    %v692 = vmul.f32 %v691, %v382
    %v693 = vmul.f32 %v606, %v606
    %v694 = vmul.f32 %v609, %v609
    %v695 = vmul.f32 %v612, %v612
    %v696 = vmul.f32 %v615, %v615
    %v697 = vmul.f32 %v618, %v618
    %v698 = vmul.f32 %v621, %v621
    %v699 = vmul.f32 %v624, %v624
    %v700 = vmul.f32 %v627, %v627
    %v701 = vmul.f32 %v630, %v630
    %v702 = vmul.f32 %v633, %v633
    %v703 = vmul.f32 %v636, %v636
    %v704 = vmul.f32 %v639, %v639
    %v705 = vmul.f32 %v642, %v642
    %v706 = vmul.f32 %v645, %v645
    %v707 = vmul.f32 %v648, %v648
    %v708 = vmul.f32 %v651, %v651
    %v709 = vsel %vm104, %v693, 0.0
    %v710 = vsel %vm104, %v694, 0.0
    %v711 = vadd.f32 %v709, %v710
    %v712 = vsel %vm104, %v695, 0.0
    %v713 = vadd.f32 %v711, %v712
    %v714 = vsel %vm104, %v696, 0.0
    %v715 = vadd.f32 %v713, %v714
    %v716 = vsel %vm104, %v697, 0.0
    %v717 = vadd.f32 %v715, %v716
    %v718 = vsel %vm104, %v698, 0.0
    %v719 = vadd.f32 %v717, %v718
    %v720 = vsel %vm104, %v699, 0.0
    %v721 = vadd.f32 %v719, %v720
    %v722 = vsel %vm104, %v700, 0.0
    %v723 = vadd.f32 %v721, %v722
    %v724 = vsel %vm104, %v701, 0.0
    %v725 = vadd.f32 %v723, %v724
    %v726 = vsel %vm104, %v702, 0.0
    %v727 = vadd.f32 %v725, %v726
    %v728 = vsel %vm104, %v703, 0.0
    %v729 = vadd.f32 %v727, %v728
    %v730 = vsel %vm104, %v704, 0.0
    %v731 = vadd.f32 %v729, %v730
    %v732 = vsel %vm104, %v705, 0.0
    %v733 = vadd.f32 %v731, %v732
    %v734 = vsel %vm104, %v706, 0.0
    %v735 = vadd.f32 %v733, %v734
    %v736 = vsel %vm104, %v707, 0.0
    %v737 = vadd.f32 %v735, %v736
    %v738 = vsel %vm104, %v708, 0.0
    %v739 = vadd.f32 %v737, %v738
    %v740 = vrot.slane %v739, 4
    %v741 = vadd.f32 %v739, %v740
    %v742 = vrot.slane %v741, 2
    %v743 = vadd.f32 %v741, %v742
    %v744 = vrot.slane %v743, 1
    %v745 = vadd.f32 %v743, %v744
    %v746 = vmul.f32 %v745, %v382
    %v747 = vmul.f32 %v692, %v692
    %v748 = vsub.f32 %v746, %v747
    %v749 = vsub.f32 %v606, %v692
    %v750 = vsub.f32 %v609, %v692
    %v751 = vsub.f32 %v612, %v692
    %v752 = vsub.f32 %v615, %v692
    %v753 = vsub.f32 %v618, %v692
    %v754 = vsub.f32 %v621, %v692
    %v755 = vsub.f32 %v624, %v692
    %v756 = vsub.f32 %v627, %v692
    %v757 = vsub.f32 %v630, %v692
    %v758 = vsub.f32 %v633, %v692
    %v759 = vsub.f32 %v636, %v692
    %v760 = vsub.f32 %v639, %v692
    %v761 = vsub.f32 %v642, %v692
    %v762 = vsub.f32 %v645, %v692
    %v763 = vsub.f32 %v648, %v692
    %v764 = vsub.f32 %v651, %v692
    %v765 = vadd.f32 %v748, 1e-05
    %v766 = vrsqrt.pop %v765
    %v767 = vmul.f32 %v766, %v765
    %v768 = vmul.f32 %v767, %v766
    %v769 = vmul.f32 0.5, %v768
    %v770 = vsub.f32 1.5, %v769
    %v771 = vmul.f32 %v766, %v770
    %vm772 = vweird.f32 %v765
    %vm773 = vweird.f32 %v766
    %vm774 = vmor %vm772, %vm773
    %v775 = vsel %vm774, %v766, %v771
    %v776 = vmul.f32 %v749, %v775
    %v777 = vmul.f32 %v750, %v775
    %v778 = vmul.f32 %v751, %v775
    %v779 = vmul.f32 %v752, %v775
    %v780 = vmul.f32 %v753, %v775
    %v781 = vmul.f32 %v754, %v775
    %v782 = vmul.f32 %v755, %v775
    %v783 = vmul.f32 %v756, %v775
    %v784 = vmul.f32 %v757, %v775
    %v785 = vmul.f32 %v758, %v775
    %v786 = vmul.f32 %v759, %v775
    %v787 = vmul.f32 %v760, %v775
    %v788 = vmul.f32 %v761, %v775
    %v789 = vmul.f32 %v762, %v775
    %v790 = vmul.f32 %v763, %v775
    %v791 = vmul.f32 %v764, %v775
    %v792 = vmul.f32 %v776, %v653
    %v793 = vmul.f32 %v777, %v653
    %v794 = vmul.f32 %v778, %v653
    %v795 = vmul.f32 %v779, %v653
    %v796 = vmul.f32 %v780, %v653
    %v797 = vmul.f32 %v781, %v653
    %v798 = vmul.f32 %v782, %v653
    %v799 = vmul.f32 %v783, %v653
    %v800 = vmul.f32 %v784, %v653
    %v801 = vmul.f32 %v785, %v653
    %v802 = vmul.f32 %v786, %v653
    %v803 = vmul.f32 %v787, %v653
    %v804 = vmul.f32 %v788, %v653
    %v805 = vmul.f32 %v789, %v653
    %v806 = vmul.f32 %v790, %v653
    %v807 = vmul.f32 %v791, %v653
    %v808 = vadd.f32 %v792, %v654
    %v809 = vadd.f32 %v793, %v654
    %v810 = vadd.f32 %v794, %v654
    %v811 = vadd.f32 %v795, %v654
    %v812 = vadd.f32 %v796, %v654
    %v813 = vadd.f32 %v797, %v654
    %v814 = vadd.f32 %v798, %v654
    %v815 = vadd.f32 %v799, %v654
    %v816 = vadd.f32 %v800, %v654
    %v817 = vadd.f32 %v801, %v654
    %v818 = vadd.f32 %v802, %v654
    %v819 = vadd.f32 %v803, %v654
    %v820 = vadd.f32 %v804, %v654
    %v821 = vadd.f32 %v805, %v654
    %v822 = vadd.f32 %v806, %v654
    %v823 = vadd.f32 %v807, %v654
    %v824 = vmax.f32 %v808, 0.0
    %v825 = vmax.f32 %v809, 0.0
    %v826 = vmax.f32 %v810, 0.0
    %v827 = vmax.f32 %v811, 0.0
    %v828 = vmax.f32 %v812, 0.0
    %v829 = vmax.f32 %v813, 0.0
    %v830 = vmax.f32 %v814, 0.0
    %v831 = vmax.f32 %v815, 0.0
    %v832 = vmax.f32 %v816, 0.0
    %v833 = vmax.f32 %v817, 0.0
    %v834 = vmax.f32 %v818, 0.0
    %v835 = vmax.f32 %v819, 0.0
    %v836 = vmax.f32 %v820, 0.0
    %v837 = vmax.f32 %v821, 0.0
    %v838 = vmax.f32 %v822, 0.0
    %v839 = vmax.f32 %v823, 0.0
    %v840 = vld [vmem:[#allocation2 + $0x48] sm:$0xff]
    %v841 = vld [vmem:[#allocation2 + $0x50] sm:$0xff]
    %v842 = vld [vmem:[#allocation2 + $0x58] sm:$0xff]
    %v843 = vld [vmem:[#allocation2 + $0x60] sm:$0xff]
    %v844 = vld [vmem:[#allocation2 + $0x68] sm:$0xff]
    %v845 = vld [vmem:[#allocation2 + $0x70] sm:$0xff]
    %v846 = vld [vmem:[#allocation2 + $0x78] sm:$0xff]
    %v847 = vld [vmem:[#allocation2 + $0x80] sm:$0xff]
    %v848 = vld [vmem:[#allocation6 + $0x6] ss:$0 sm:$0xff]
    %v850 = vsel %vm104, %v824, 0
    %v853 = vsel %vm104, %v825, 0
    %v856 = vsel %vm104, %v826, 0
    %v859 = vsel %vm104, %v827, 0
    %v862 = vsel %vm104, %v828, 0
    %v865 = vsel %vm104, %v829, 0
    %v868 = vsel %vm104, %v830, 0
    %v871 = vsel %vm104, %v831, 0
    %v874 = vsel %vm104, %v832, 0
    %v877 = vsel %vm104, %v833, 0
    %v880 = vsel %vm104, %v834, 0
    %v883 = vsel %vm104, %v835, 0
    %v886 = vsel %vm104, %v836, 0
    %v889 = vsel %vm104, %v837, 0
    %v892 = vsel %vm104, %v838, 0
    %v895 = vsel %vm104, %v839, 0
    %897 = vmatpush.msra.mxu0 0.0
    %898 = vmatpush.msra.mxu0 0.0
    %899 = vmatpush.msra.mxu0 0.0
    %900 = vmatpush.msra.mxu0 0.0
    %901 = vmatpush.msra.mxu0 0.0
    %902 = vmatpush.msra.mxu0 0.0
    %903 = vmatpush.msra.mxu0 0.0
    %904 = vmatpush.msra.mxu0 0.0
    %905 = vmatpush.msra.mxu0 %v847
    %906 = vmatpush.msra.mxu0 %v846
    %907 = vmatpush.msra.mxu0 %v845
    %908 = vmatpush.msra.mxu0 %v844
    %909 = vmatpush.msra.mxu0 %v843
    %910 = vmatpush.msra.mxu0 %v842
    %911 = vmatpush.msra.mxu0 %v841
    %912 = vmatpush.msra.mxu0 %v840
    %913 = vmatmul.f32.gmra.mxu0 %v850
    %v914 = vpop.f32.mrf.mxu0
    %v915 = vadd.f32 %v848, %v914
    %916 = vmatmul.f32.gmra.mxu0 %v853
    %v917 = vpop.f32.mrf.mxu0
    %v918 = vadd.f32 %v848, %v917
    %919 = vmatmul.f32.gmra.mxu0 %v856
    %v920 = vpop.f32.mrf.mxu0
    %v921 = vadd.f32 %v848, %v920
    %922 = vmatmul.f32.gmra.mxu0 %v859
    %v923 = vpop.f32.mrf.mxu0
    %v924 = vadd.f32 %v848, %v923
    %925 = vmatmul.f32.gmra.mxu0 %v862
    %v926 = vpop.f32.mrf.mxu0
    %v927 = vadd.f32 %v848, %v926
    %928 = vmatmul.f32.gmra.mxu0 %v865
    %v929 = vpop.f32.mrf.mxu0
    %v930 = vadd.f32 %v848, %v929
    %931 = vmatmul.f32.gmra.mxu0 %v868
    %v932 = vpop.f32.mrf.mxu0
    %v933 = vadd.f32 %v848, %v932
    %934 = vmatmul.f32.gmra.mxu0 %v871
    %v935 = vpop.f32.mrf.mxu0
    %v936 = vadd.f32 %v848, %v935
    %937 = vmatmul.f32.gmra.mxu0 %v874
    %v938 = vpop.f32.mrf.mxu0
    %v939 = vadd.f32 %v848, %v938
    %940 = vmatmul.f32.gmra.mxu0 %v877
    %v941 = vpop.f32.mrf.mxu0
    %v942 = vadd.f32 %v848, %v941
    %943 = vmatmul.f32.gmra.mxu0 %v880
    %v944 = vpop.f32.mrf.mxu0
    %v945 = vadd.f32 %v848, %v944
    %946 = vmatmul.f32.gmra.mxu0 %v883
    %v947 = vpop.f32.mrf.mxu0
    %v948 = vadd.f32 %v848, %v947
    %949 = vmatmul.f32.gmra.mxu0 %v886
    %v950 = vpop.f32.mrf.mxu0
    %v951 = vadd.f32 %v848, %v950
    %952 = vmatmul.f32.gmra.mxu0 %v889
    %v953 = vpop.f32.mrf.mxu0
    %v954 = vadd.f32 %v848, %v953
    %955 = vmatmul.f32.gmra.mxu0 %v892
    %v956 = vpop.f32.mrf.mxu0
    %v957 = vadd.f32 %v848, %v956
    %958 = vmatmul.f32.gmra.mxu0 %v895
    %v959 = vpop.f32.mrf.mxu0
    %v960 = vadd.f32 %v848, %v959
    %961 = vdwg.mxu0
    %v962 = vld [vmem:[#allocation6 + $0x7] ss:$0 sm:$0xff]
    %v963 = vld [vmem:[#allocation6 + $0x10] ss:$0 sm:$0xff]
    %v964 = vsel %vm104, %v915, 0.0
    %v965 = vsel %vm104, %v918, 0.0
    %v966 = vadd.f32 %v964, %v965
    %v967 = vsel %vm104, %v921, 0.0
    %v968 = vadd.f32 %v966, %v967
    %v969 = vsel %vm104, %v924, 0.0
    %v970 = vadd.f32 %v968, %v969
    %v971 = vsel %vm104, %v927, 0.0
    %v972 = vadd.f32 %v970, %v971
    %v973 = vsel %vm104, %v930, 0.0
    %v974 = vadd.f32 %v972, %v973
    %v975 = vsel %vm104, %v933, 0.0
    %v976 = vadd.f32 %v974, %v975
    %v977 = vsel %vm104, %v936, 0.0
    %v978 = vadd.f32 %v976, %v977
    %v979 = vsel %vm104, %v939, 0.0
    %v980 = vadd.f32 %v978, %v979
    %v981 = vsel %vm104, %v942, 0.0
    %v982 = vadd.f32 %v980, %v981
    %v983 = vsel %vm104, %v945, 0.0
    %v984 = vadd.f32 %v982, %v983
    %v985 = vsel %vm104, %v948, 0.0
    %v986 = vadd.f32 %v984, %v985
    %v987 = vsel %vm104, %v951, 0.0
    %v988 = vadd.f32 %v986, %v987
    %v989 = vsel %vm104, %v954, 0.0
    %v990 = vadd.f32 %v988, %v989
    %v991 = vsel %vm104, %v957, 0.0
    %v992 = vadd.f32 %v990, %v991
    %v993 = vsel %vm104, %v960, 0.0
    %v994 = vadd.f32 %v992, %v993
    %v995 = vrot.slane %v994, 4
    %v996 = vadd.f32 %v994, %v995
    %v997 = vrot.slane %v996, 2
    %v998 = vadd.f32 %v996, %v997
    %v999 = vrot.slane %v998, 1
    %v1000 = vadd.f32 %v998, %v999
    %v1001 = vmul.f32 %v1000, %v382
    %v1002 = vmul.f32 %v915, %v915
    %v1003 = vmul.f32 %v918, %v918
    %v1004 = vmul.f32 %v921, %v921
    %v1005 = vmul.f32 %v924, %v924
    %v1006 = vmul.f32 %v927, %v927
    %v1007 = vmul.f32 %v930, %v930
    %v1008 = vmul.f32 %v933, %v933
    %v1009 = vmul.f32 %v936, %v936
    %v1010 = vmul.f32 %v939, %v939
    %v1011 = vmul.f32 %v942, %v942
    %v1012 = vmul.f32 %v945, %v945
    %v1013 = vmul.f32 %v948, %v948
    %v1014 = vmul.f32 %v951, %v951
    %v1015 = vmul.f32 %v954, %v954
    %v1016 = vmul.f32 %v957, %v957
    %v1017 = vmul.f32 %v960, %v960
    %v1018 = vsel %vm104, %v1002, 0.0
    %v1019 = vsel %vm104, %v1003, 0.0
    %v1020 = vadd.f32 %v1018, %v1019
    %v1021 = vsel %vm104, %v1004, 0.0
    %v1022 = vadd.f32 %v1020, %v1021
    %v1023 = vsel %vm104, %v1005, 0.0
    %v1024 = vadd.f32 %v1022, %v1023
    %v1025 = vsel %vm104, %v1006, 0.0
    %v1026 = vadd.f32 %v1024, %v1025
    %v1027 = vsel %vm104, %v1007, 0.0
    %v1028 = vadd.f32 %v1026, %v1027
    %v1029 = vsel %vm104, %v1008, 0.0
    %v1030 = vadd.f32 %v1028, %v1029
    %v1031 = vsel %vm104, %v1009, 0.0
    %v1032 = vadd.f32 %v1030, %v1031
    %v1033 = vsel %vm104, %v1010, 0.0
    %v1034 = vadd.f32 %v1032, %v1033
    %v1035 = vsel %vm104, %v1011, 0.0
    %v1036 = vadd.f32 %v1034, %v1035
    %v1037 = vsel %vm104, %v1012, 0.0
    %v1038 = vadd.f32 %v1036, %v1037
    %v1039 = vsel %vm104, %v1013, 0.0
    %v1040 = vadd.f32 %v1038, %v1039
    %v1041 = vsel %vm104, %v1014, 0.0
    %v1042 = vadd.f32 %v1040, %v1041
    %v1043 = vsel %vm104, %v1015, 0.0
    %v1044 = vadd.f32 %v1042, %v1043
    %v1045 = vsel %vm104, %v1016, 0.0
    %v1046 = vadd.f32 %v1044, %v1045
    %v1047 = vsel %vm104, %v1017, 0.0
    %v1048 = vadd.f32 %v1046, %v1047
    %v1049 = vrot.slane %v1048, 4
    %v1050 = vadd.f32 %v1048, %v1049
    %v1051 = vrot.slane %v1050, 2
    %v1052 = vadd.f32 %v1050, %v1051
    %v1053 = vrot.slane %v1052, 1
    %v1054 = vadd.f32 %v1052, %v1053
    %v1055 = vmul.f32 %v1054, %v382
    %v1056 = vmul.f32 %v1001, %v1001
    %v1057 = vsub.f32 %v1055, %v1056
    %v1058 = vsub.f32 %v915, %v1001
    %v1059 = vsub.f32 %v918, %v1001
    %v1060 = vsub.f32 %v921, %v1001
    %v1061 = vsub.f32 %v924, %v1001
    %v1062 = vsub.f32 %v927, %v1001
    %v1063 = vsub.f32 %v930, %v1001
    %v1064 = vsub.f32 %v933, %v1001
    %v1065 = vsub.f32 %v936, %v1001
    %v1066 = vsub.f32 %v939, %v1001
    %v1067 = vsub.f32 %v942, %v1001
    %v1068 = vsub.f32 %v945, %v1001
    %v1069 = vsub.f32 %v948, %v1001
    %v1070 = vsub.f32 %v951, %v1001
    %v1071 = vsub.f32 %v954, %v1001
    %v1072 = vsub.f32 %v957, %v1001
    %v1073 = vsub.f32 %v960, %v1001
    %v1074 = vadd.f32 %v1057, 1e-05
    %v1075 = vrsqrt.pop %v1074
    %v1076 = vmul.f32 %v1075, %v1074
    %v1077 = vmul.f32 %v1076, %v1075
    %v1078 = vmul.f32 0.5, %v1077
    %v1079 = vsub.f32 1.5, %v1078
    %v1080 = vmul.f32 %v1075, %v1079
    %vm1081 = vweird.f32 %v1074
    %vm1082 = vweird.f32 %v1075
    %vm1083 = vmor %vm1081, %vm1082
    %v1084 = vsel %vm1083, %v1075, %v1080
    %v1085 = vmul.f32 %v1058, %v1084
    %v1086 = vmul.f32 %v1059, %v1084
    %v1087 = vmul.f32 %v1060, %v1084
    %v1088 = vmul.f32 %v1061, %v1084
    %v1089 = vmul.f32 %v1062, %v1084
    %v1090 = vmul.f32 %v1063, %v1084
    %v1091 = vmul.f32 %v1064, %v1084
    %v1092 = vmul.f32 %v1065, %v1084
    %v1093 = vmul.f32 %v1066, %v1084
    %v1094 = vmul.f32 %v1067, %v1084
    %v1095 = vmul.f32 %v1068, %v1084
    %v1096 = vmul.f32 %v1069, %v1084
    %v1097 = vmul.f32 %v1070, %v1084
    %v1098 = vmul.f32 %v1071, %v1084
    %v1099 = vmul.f32 %v1072, %v1084
    %v1100 = vmul.f32 %v1073, %v1084
    %v1101 = vmul.f32 %v1085, %v962
    %v1102 = vmul.f32 %v1086, %v962
    %v1103 = vmul.f32 %v1087, %v962
    %v1104 = vmul.f32 %v1088, %v962
    %v1105 = vmul.f32 %v1089, %v962
    %v1106 = vmul.f32 %v1090, %v962
    %v1107 = vmul.f32 %v1091, %v962
    %v1108 = vmul.f32 %v1092, %v962
    %v1109 = vmul.f32 %v1093, %v962
    %v1110 = vmul.f32 %v1094, %v962
    %v1111 = vmul.f32 %v1095, %v962
    %v1112 = vmul.f32 %v1096, %v962
    %v1113 = vmul.f32 %v1097, %v962
    %v1114 = vmul.f32 %v1098, %v962
    %v1115 = vmul.f32 %v1099, %v962
    %v1116 = vmul.f32 %v1100, %v962
    %v1117 = vadd.f32 %v1101, %v963
    %v1118 = vadd.f32 %v1102, %v963
    %v1119 = vadd.f32 %v1103, %v963
    %v1120 = vadd.f32 %v1104, %v963
    %v1121 = vadd.f32 %v1105, %v963
    %v1122 = vadd.f32 %v1106, %v963
    %v1123 = vadd.f32 %v1107, %v963
    %v1124 = vadd.f32 %v1108, %v963
    %v1125 = vadd.f32 %v1109, %v963
    %v1126 = vadd.f32 %v1110, %v963
    %v1127 = vadd.f32 %v1111, %v963
    %v1128 = vadd.f32 %v1112, %v963
    %v1129 = vadd.f32 %v1113, %v963
    %v1130 = vadd.f32 %v1114, %v963
    %v1131 = vadd.f32 %v1115, %v963
    %v1132 = vadd.f32 %v1116, %v963
    %v1133 = vmax.f32 %v1117, 0.0
    %v1134 = vmax.f32 %v1118, 0.0
    %v1135 = vmax.f32 %v1119, 0.0
    %v1136 = vmax.f32 %v1120, 0.0
    %v1137 = vmax.f32 %v1121, 0.0
    %v1138 = vmax.f32 %v1122, 0.0
    %v1139 = vmax.f32 %v1123, 0.0
    %v1140 = vmax.f32 %v1124, 0.0
    %v1141 = vmax.f32 %v1125, 0.0
    %v1142 = vmax.f32 %v1126, 0.0
    %v1143 = vmax.f32 %v1127, 0.0
    %v1144 = vmax.f32 %v1128, 0.0
    %v1145 = vmax.f32 %v1129, 0.0
    %v1146 = vmax.f32 %v1130, 0.0
    %v1147 = vmax.f32 %v1131, 0.0
    %v1148 = vmax.f32 %v1132, 0.0
    %v1149 = vld [vmem:[#allocation2 + $0x88] sm:$0xff]
    %v1150 = vld [vmem:[#allocation2 + $0x90] sm:$0xff]
    %v1151 = vld [vmem:[#allocation2 + $0x98] sm:$0xff]
    %v1152 = vld [vmem:[#allocation2 + $0xa0] sm:$0xff]
    %v1153 = vld [vmem:[#allocation2 + $0xa8] sm:$0xff]
    %v1154 = vld [vmem:[#allocation2 + $0xb0] sm:$0xff]
    %v1155 = vld [vmem:[#allocation2 + $0xb8] sm:$0xff]
    %v1156 = vld [vmem:[#allocation2 + $0xc0] sm:$0xff]
    %v1157 = vld [vmem:[#allocation6 + $0x11] ss:$0 sm:$0xff]
    %v1159 = vsel %vm104, %v1133, 0
    %v1162 = vsel %vm104, %v1134, 0
    %v1165 = vsel %vm104, %v1135, 0
    %v1168 = vsel %vm104, %v1136, 0
    %v1171 = vsel %vm104, %v1137, 0
    %v1174 = vsel %vm104, %v1138, 0
    %v1177 = vsel %vm104, %v1139, 0
    %v1180 = vsel %vm104, %v1140, 0
    %v1183 = vsel %vm104, %v1141, 0
    %v1186 = vsel %vm104, %v1142, 0
    %v1189 = vsel %vm104, %v1143, 0
    %v1192 = vsel %vm104, %v1144, 0
    %v1195 = vsel %vm104, %v1145, 0
    %v1198 = vsel %vm104, %v1146, 0
    %v1201 = vsel %vm104, %v1147, 0
    %v1204 = vsel %vm104, %v1148, 0
    %1206 = vmatpush.msra.mxu0 0.0
    %1207 = vmatpush.msra.mxu0 0.0
    %1208 = vmatpush.msra.mxu0 0.0
    %1209 = vmatpush.msra.mxu0 0.0
    %1210 = vmatpush.msra.mxu0 0.0
    %1211 = vmatpush.msra.mxu0 0.0
    %1212 = vmatpush.msra.mxu0 0.0
    %1213 = vmatpush.msra.mxu0 0.0
    %1214 = vmatpush.msra.mxu0 %v1156
    %1215 = vmatpush.msra.mxu0 %v1155
    %1216 = vmatpush.msra.mxu0 %v1154
    %1217 = vmatpush.msra.mxu0 %v1153
    %1218 = vmatpush.msra.mxu0 %v1152
    %1219 = vmatpush.msra.mxu0 %v1151
    %1220 = vmatpush.msra.mxu0 %v1150
    %1221 = vmatpush.msra.mxu0 %v1149
    %1222 = vmatmul.f32.gmra.mxu0 %v1159
    %v1223 = vpop.f32.mrf.mxu0
    %v1224 = vadd.f32 %v1157, %v1223
    %1225 = vmatmul.f32.gmra.mxu0 %v1162
    %v1226 = vpop.f32.mrf.mxu0
    %v1227 = vadd.f32 %v1157, %v1226
    %1228 = vmatmul.f32.gmra.mxu0 %v1165
    %v1229 = vpop.f32.mrf.mxu0
    %v1230 = vadd.f32 %v1157, %v1229
    %1231 = vmatmul.f32.gmra.mxu0 %v1168
    %v1232 = vpop.f32.mrf.mxu0
    %v1233 = vadd.f32 %v1157, %v1232
    %1234 = vmatmul.f32.gmra.mxu0 %v1171
    %v1235 = vpop.f32.mrf.mxu0
    %v1236 = vadd.f32 %v1157, %v1235
    %1237 = vmatmul.f32.gmra.mxu0 %v1174
    %v1238 = vpop.f32.mrf.mxu0
    %v1239 = vadd.f32 %v1157, %v1238
    %1240 = vmatmul.f32.gmra.mxu0 %v1177
    %v1241 = vpop.f32.mrf.mxu0
    %v1242 = vadd.f32 %v1157, %v1241
    %1243 = vmatmul.f32.gmra.mxu0 %v1180
    %v1244 = vpop.f32.mrf.mxu0
    %v1245 = vadd.f32 %v1157, %v1244
    %1246 = vmatmul.f32.gmra.mxu0 %v1183
    %v1247 = vpop.f32.mrf.mxu0
    %v1248 = vadd.f32 %v1157, %v1247
    %1249 = vmatmul.f32.gmra.mxu0 %v1186
    %v1250 = vpop.f32.mrf.mxu0
    %v1251 = vadd.f32 %v1157, %v1250
    %1252 = vmatmul.f32.gmra.mxu0 %v1189
    %v1253 = vpop.f32.mrf.mxu0
    %v1254 = vadd.f32 %v1157, %v1253
    %1255 = vmatmul.f32.gmra.mxu0 %v1192
    %v1256 = vpop.f32.mrf.mxu0
    %v1257 = vadd.f32 %v1157, %v1256
    %1258 = vmatmul.f32.gmra.mxu0 %v1195
    %v1259 = vpop.f32.mrf.mxu0
    %v1260 = vadd.f32 %v1157, %v1259
    %1261 = vmatmul.f32.gmra.mxu0 %v1198
    %v1262 = vpop.f32.mrf.mxu0
    %v1263 = vadd.f32 %v1157, %v1262
    %1264 = vmatmul.f32.gmra.mxu0 %v1201
    %v1265 = vpop.f32.mrf.mxu0
    %v1266 = vadd.f32 %v1157, %v1265
    %1267 = vmatmul.f32.gmra.mxu0 %v1204
    %v1268 = vpop.f32.mrf.mxu0
    %v1269 = vadd.f32 %v1157, %v1268
    %1270 = vdwg.mxu0
    %v1271 = vld [vmem:[#allocation6 + $0x12] ss:$0 sm:$0xff]
    %v1272 = vld [vmem:[#allocation6 + $0x13] ss:$0 sm:$0xff]
    %v1273 = vadd.f32 %v1224, %v1227
    %v1274 = vadd.f32 %v1273, %v1230
    %v1275 = vadd.f32 %v1274, %v1233
    %v1276 = vadd.f32 %v1275, %v1236
    %v1277 = vadd.f32 %v1276, %v1239
    %v1278 = vadd.f32 %v1277, %v1242
    %v1279 = vadd.f32 %v1278, %v1245
    %v1280 = vadd.f32 %v1279, %v1248
    %v1281 = vadd.f32 %v1280, %v1251
    %v1282 = vadd.f32 %v1281, %v1254
    %v1283 = vadd.f32 %v1282, %v1257
    %v1284 = vadd.f32 %v1283, %v1260
    %v1285 = vadd.f32 %v1284, %v1263
    %v1286 = vadd.f32 %v1285, %v1266
    %v1287 = vadd.f32 %v1286, %v1269
    %v1288 = vrot.slane %v1287, 4
    %v1289 = vadd.f32 %v1287, %v1288
    %v1290 = vrot.slane %v1289, 2
    %v1291 = vadd.f32 %v1289, %v1290
    %v1292 = vrot.slane %v1291, 1
    %v1293 = vadd.f32 %v1291, %v1292
    %v1294 = vmul.f32 %v1293, %v382
    %v1295 = vmul.f32 %v1224, %v1224
    %v1296 = vmul.f32 %v1227, %v1227
    %v1297 = vmul.f32 %v1230, %v1230
    %v1298 = vmul.f32 %v1233, %v1233
    %v1299 = vmul.f32 %v1236, %v1236
    %v1300 = vmul.f32 %v1239, %v1239
    %v1301 = vmul.f32 %v1242, %v1242
    %v1302 = vmul.f32 %v1245, %v1245
    %v1303 = vmul.f32 %v1248, %v1248
    %v1304 = vmul.f32 %v1251, %v1251
    %v1305 = vmul.f32 %v1254, %v1254
    %v1306 = vmul.f32 %v1257, %v1257
    %v1307 = vmul.f32 %v1260, %v1260
    %v1308 = vmul.f32 %v1263, %v1263
    %v1309 = vmul.f32 %v1266, %v1266
    %v1310 = vmul.f32 %v1269, %v1269
    %v1311 = vadd.f32 %v1295, %v1296
    %v1312 = vadd.f32 %v1311, %v1297
    %v1313 = vadd.f32 %v1312, %v1298
    %v1314 = vadd.f32 %v1313, %v1299
    %v1315 = vadd.f32 %v1314, %v1300
    %v1316 = vadd.f32 %v1315, %v1301
    %v1317 = vadd.f32 %v1316, %v1302
    %v1318 = vadd.f32 %v1317, %v1303
    %v1319 = vadd.f32 %v1318, %v1304
    %v1320 = vadd.f32 %v1319, %v1305
    %v1321 = vadd.f32 %v1320, %v1306
    %v1322 = vadd.f32 %v1321, %v1307
    %v1323 = vadd.f32 %v1322, %v1308
    %v1324 = vadd.f32 %v1323, %v1309
    %v1325 = vadd.f32 %v1324, %v1310
    %v1326 = vrot.slane %v1325, 4
    %v1327 = vadd.f32 %v1325, %v1326
    %v1328 = vrot.slane %v1327, 2
    %v1329 = vadd.f32 %v1327, %v1328
    %v1330 = vrot.slane %v1329, 1
    %v1331 = vadd.f32 %v1329, %v1330
    %v1332 = vmul.f32 %v1331, %v382
    %v1333 = vmul.f32 %v1294, %v1294
    %v1334 = vsub.f32 %v1332, %v1333
    %v1335 = vsub.f32 %v1224, %v1294
    %v1336 = vsub.f32 %v1227, %v1294
    %v1337 = vsub.f32 %v1230, %v1294
    %v1338 = vsub.f32 %v1233, %v1294
    %v1339 = vsub.f32 %v1236, %v1294
    %v1340 = vsub.f32 %v1239, %v1294
    %v1341 = vsub.f32 %v1242, %v1294
    %v1342 = vsub.f32 %v1245, %v1294
    %v1343 = vsub.f32 %v1248, %v1294
    %v1344 = vsub.f32 %v1251, %v1294
    %v1345 = vsub.f32 %v1254, %v1294
    %v1346 = vsub.f32 %v1257, %v1294
    %v1347 = vsub.f32 %v1260, %v1294
    %v1348 = vsub.f32 %v1263, %v1294
    %v1349 = vsub.f32 %v1266, %v1294
    %v1350 = vsub.f32 %v1269, %v1294
    %v1351 = vadd.f32 %v1334, 1e-05
    %v1352 = vrsqrt.pop %v1351
    %v1353 = vmul.f32 %v1352, %v1351
    %v1354 = vmul.f32 %v1353, %v1352
    %v1355 = vmul.f32 0.5, %v1354
    %v1356 = vsub.f32 1.5, %v1355
    %v1357 = vmul.f32 %v1352, %v1356
    %vm1358 = vweird.f32 %v1351
    %vm1359 = vweird.f32 %v1352
    %vm1360 = vmor %vm1358, %vm1359
    %v1361 = vsel %vm1360, %v1352, %v1357
    %v1362 = vmul.f32 %v1335, %v1361
    %v1363 = vmul.f32 %v1336, %v1361
    %v1364 = vmul.f32 %v1337, %v1361
    %v1365 = vmul.f32 %v1338, %v1361
    %v1366 = vmul.f32 %v1339, %v1361
    %v1367 = vmul.f32 %v1340, %v1361
    %v1368 = vmul.f32 %v1341, %v1361
    %v1369 = vmul.f32 %v1342, %v1361
    %v1370 = vmul.f32 %v1343, %v1361
    %v1371 = vmul.f32 %v1344, %v1361
    %v1372 = vmul.f32 %v1345, %v1361
    %v1373 = vmul.f32 %v1346, %v1361
    %v1374 = vmul.f32 %v1347, %v1361
    %v1375 = vmul.f32 %v1348, %v1361
    %v1376 = vmul.f32 %v1349, %v1361
    %v1377 = vmul.f32 %v1350, %v1361
    %v1378 = vmul.f32 %v1362, %v1271
    %v1379 = vmul.f32 %v1363, %v1271
    %v1380 = vmul.f32 %v1364, %v1271
    %v1381 = vmul.f32 %v1365, %v1271
    %v1382 = vmul.f32 %v1366, %v1271
    %v1383 = vmul.f32 %v1367, %v1271
    %v1384 = vmul.f32 %v1368, %v1271
    %v1385 = vmul.f32 %v1369, %v1271
    %v1386 = vmul.f32 %v1370, %v1271
    %v1387 = vmul.f32 %v1371, %v1271
    %v1388 = vmul.f32 %v1372, %v1271
    %v1389 = vmul.f32 %v1373, %v1271
    %v1390 = vmul.f32 %v1374, %v1271
    %v1391 = vmul.f32 %v1375, %v1271
    %v1392 = vmul.f32 %v1376, %v1271
    %v1393 = vmul.f32 %v1377, %v1271
    %v1394 = vadd.f32 %v1378, %v1272
    %v1395 = vadd.f32 %v1379, %v1272
    %v1396 = vadd.f32 %v1380, %v1272
    %v1397 = vadd.f32 %v1381, %v1272
    %v1398 = vadd.f32 %v1382, %v1272
    %v1399 = vadd.f32 %v1383, %v1272
    %v1400 = vadd.f32 %v1384, %v1272
    %v1401 = vadd.f32 %v1385, %v1272
    %v1402 = vadd.f32 %v1386, %v1272
    %v1403 = vadd.f32 %v1387, %v1272
    %v1404 = vadd.f32 %v1388, %v1272
    %v1405 = vadd.f32 %v1389, %v1272
    %v1406 = vadd.f32 %v1390, %v1272
    %v1407 = vadd.f32 %v1391, %v1272
    %v1408 = vadd.f32 %v1392, %v1272
    %v1409 = vadd.f32 %v1393, %v1272
    %v1410 = vmax.f32 %v1394, 0.0
    %v1411 = vmax.f32 %v1395, 0.0
    %v1412 = vmax.f32 %v1396, 0.0
    %v1413 = vmax.f32 %v1397, 0.0
    %v1414 = vmax.f32 %v1398, 0.0
    %v1415 = vmax.f32 %v1399, 0.0
    %v1416 = vmax.f32 %v1400, 0.0
    %v1417 = vmax.f32 %v1401, 0.0
    %v1418 = vmax.f32 %v1402, 0.0
    %v1419 = vmax.f32 %v1403, 0.0
    %v1420 = vmax.f32 %v1404, 0.0
    %v1421 = vmax.f32 %v1405, 0.0
    %v1422 = vmax.f32 %v1406, 0.0
    %v1423 = vmax.f32 %v1407, 0.0
    %v1424 = vmax.f32 %v1408, 0.0
    %v1425 = vmax.f32 %v1409, 0.0
    %v1426 = vld [vmem:[#allocation2 + $0xc8] sm:$0xff]
    %v1427 = vld [vmem:[#allocation2 + $0xd0] sm:$0xff]
    %v1428 = vld [vmem:[#allocation2 + $0xd8] sm:$0xff]
    %v1429 = vld [vmem:[#allocation2 + $0xe0] sm:$0xff]
    %v1430 = vld [vmem:[#allocation2 + $0xe8] sm:$0xff]
    %v1431 = vld [vmem:[#allocation2 + $0xf0] sm:$0xff]
    %v1432 = vld [vmem:[#allocation2 + $0xf8] sm:$0xff]
    %v1433 = vld [vmem:[#allocation2 + $0x100] sm:$0xff]
    %v1434 = vld [vmem:[#allocation2 + $0x108] sm:$0xff]
    %v1435 = vld [vmem:[#allocation2 + $0x110] sm:$0xff]
    %v1436 = vld [vmem:[#allocation2 + $0x118] sm:$0xff]
    %v1437 = vld [vmem:[#allocation2 + $0x120] sm:$0xff]
    %v1438 = vld [vmem:[#allocation2 + $0x128] sm:$0xff]
    %v1439 = vld [vmem:[#allocation2 + $0x130] sm:$0xff]
    %v1440 = vld [vmem:[#allocation2 + $0x138] sm:$0xff]
    %v1441 = vld [vmem:[#allocation2 + $0x140] sm:$0xff]
    %v1442 = vld [vmem:[#allocation6 + $0x14] ss:$0 sm:$0xff]
    %1443 = vmatpush.msra.mxu0 %v1441
    %1444 = vmatpush.msra.mxu0 %v1440
    %1445 = vmatpush.msra.mxu0 %v1439
    %1446 = vmatpush.msra.mxu0 %v1438
    %1447 = vmatpush.msra.mxu0 %v1437
    %1448 = vmatpush.msra.mxu0 %v1436
    %1449 = vmatpush.msra.mxu0 %v1435
    %1450 = vmatpush.msra.mxu0 %v1434
    %1451 = vmatpush.msra.mxu0 %v1433
    %1452 = vmatpush.msra.mxu0 %v1432
    %1453 = vmatpush.msra.mxu0 %v1431
    %1454 = vmatpush.msra.mxu0 %v1430
    %1455 = vmatpush.msra.mxu0 %v1429
    %1456 = vmatpush.msra.mxu0 %v1428
    %1457 = vmatpush.msra.mxu0 %v1427
    %1458 = vmatpush.msra.mxu0 %v1426
    %1459 = vmatmul.f32.gmra.mxu0 %v1410
    %v1460 = vpop.f32.mrf.mxu0
    %v1461 = vadd.f32 %v1442, %v1460
    %1462 = vmatmul.f32.gmra.mxu0 %v1411
    %v1463 = vpop.f32.mrf.mxu0
    %v1464 = vadd.f32 %v1442, %v1463
    %1465 = vmatmul.f32.gmra.mxu0 %v1412
    %v1466 = vpop.f32.mrf.mxu0
    %v1467 = vadd.f32 %v1442, %v1466
    %1468 = vmatmul.f32.gmra.mxu0 %v1413
    %v1469 = vpop.f32.mrf.mxu0
    %v1470 = vadd.f32 %v1442, %v1469
    %1471 = vmatmul.f32.gmra.mxu0 %v1414
    %v1472 = vpop.f32.mrf.mxu0
    %v1473 = vadd.f32 %v1442, %v1472
    %1474 = vmatmul.f32.gmra.mxu0 %v1415
    %v1475 = vpop.f32.mrf.mxu0
    %v1476 = vadd.f32 %v1442, %v1475
    %1477 = vmatmul.f32.gmra.mxu0 %v1416
    %v1478 = vpop.f32.mrf.mxu0
    %v1479 = vadd.f32 %v1442, %v1478
    %1480 = vmatmul.f32.gmra.mxu0 %v1417
    %v1481 = vpop.f32.mrf.mxu0
    %v1482 = vadd.f32 %v1442, %v1481
    %1483 = vmatmul.f32.gmra.mxu0 %v1418
    %v1484 = vpop.f32.mrf.mxu0
    %v1485 = vadd.f32 %v1442, %v1484
    %1486 = vmatmul.f32.gmra.mxu0 %v1419
    %v1487 = vpop.f32.mrf.mxu0
    %v1488 = vadd.f32 %v1442, %v1487
    %1489 = vmatmul.f32.gmra.mxu0 %v1420
    %v1490 = vpop.f32.mrf.mxu0
    %v1491 = vadd.f32 %v1442, %v1490
    %1492 = vmatmul.f32.gmra.mxu0 %v1421
    %v1493 = vpop.f32.mrf.mxu0
    %v1494 = vadd.f32 %v1442, %v1493
    %1495 = vmatmul.f32.gmra.mxu0 %v1422
    %v1496 = vpop.f32.mrf.mxu0
    %v1497 = vadd.f32 %v1442, %v1496
    %1498 = vmatmul.f32.gmra.mxu0 %v1423
    %v1499 = vpop.f32.mrf.mxu0
    %v1500 = vadd.f32 %v1442, %v1499
    %1501 = vmatmul.f32.gmra.mxu0 %v1424
    %v1502 = vpop.f32.mrf.mxu0
    %v1503 = vadd.f32 %v1442, %v1502
    %1504 = vmatmul.f32.gmra.mxu0 %v1425
    %v1505 = vpop.f32.mrf.mxu0
    %v1506 = vadd.f32 %v1442, %v1505
    %1507 = vdwg.mxu0
    %v1508 = vld [vmem:[#allocation6 + $0x15] ss:$0 sm:$0xff]
    %v1509 = vld [vmem:[#allocation6 + $0x16] ss:$0 sm:$0xff]
    %vm1510 = vcmask 261120
    %v1511 = vsel %vm1510, %v1461, 0.0
    %v1512 = vsel %vm1510, %v1464, 0.0
    %v1513 = vadd.f32 %v1511, %v1512
    %v1514 = vsel %vm1510, %v1467, 0.0
    %v1515 = vadd.f32 %v1513, %v1514
    %v1516 = vsel %vm1510, %v1470, 0.0
    %v1517 = vadd.f32 %v1515, %v1516
    %v1518 = vsel %vm1510, %v1473, 0.0
    %v1519 = vadd.f32 %v1517, %v1518
    %v1520 = vsel %vm1510, %v1476, 0.0
    %v1521 = vadd.f32 %v1519, %v1520
    %v1522 = vsel %vm1510, %v1479, 0.0
    %v1523 = vadd.f32 %v1521, %v1522
    %v1524 = vsel %vm1510, %v1482, 0.0
    %v1525 = vadd.f32 %v1523, %v1524
    %v1526 = vsel %vm1510, %v1485, 0.0
    %v1527 = vadd.f32 %v1525, %v1526
    %v1528 = vsel %vm1510, %v1488, 0.0
    %v1529 = vadd.f32 %v1527, %v1528
    %v1530 = vsel %vm1510, %v1491, 0.0
    %v1531 = vadd.f32 %v1529, %v1530
    %v1532 = vsel %vm1510, %v1494, 0.0
    %v1533 = vadd.f32 %v1531, %v1532
    %v1534 = vsel %vm1510, %v1497, 0.0
    %v1535 = vadd.f32 %v1533, %v1534
    %v1536 = vsel %vm1510, %v1500, 0.0
    %v1537 = vadd.f32 %v1535, %v1536
    %v1538 = vsel %vm1510, %v1503, 0.0
    %v1539 = vadd.f32 %v1537, %v1538
    %v1540 = vsel %vm1510, %v1506, 0.0
    %v1541 = vadd.f32 %v1539, %v1540
    %v1542 = vrot.slane %v1541, 4
    %v1543 = vadd.f32 %v1541, %v1542
    %v1544 = vrot.slane %v1543, 2
    %v1545 = vadd.f32 %v1543, %v1544
    %v1546 = vrot.slane %v1545, 1
    %v1547 = vadd.f32 %v1545, %v1546
    %v1548 = vmul.f32 %v1547, %v382
    %v1549 = vmul.f32 %v1461, %v1461
    %v1550 = vmul.f32 %v1464, %v1464
    %v1551 = vmul.f32 %v1467, %v1467
    %v1552 = vmul.f32 %v1470, %v1470
    %v1553 = vmul.f32 %v1473, %v1473
    %v1554 = vmul.f32 %v1476, %v1476
    %v1555 = vmul.f32 %v1479, %v1479
    %v1556 = vmul.f32 %v1482, %v1482
    %v1557 = vmul.f32 %v1485, %v1485
    %v1558 = vmul.f32 %v1488, %v1488
    %v1559 = vmul.f32 %v1491, %v1491
    %v1560 = vmul.f32 %v1494, %v1494
    %v1561 = vmul.f32 %v1497, %v1497
    %v1562 = vmul.f32 %v1500, %v1500
    %v1563 = vmul.f32 %v1503, %v1503
    %v1564 = vmul.f32 %v1506, %v1506
    %v1565 = vsel %vm1510, %v1549, 0.0
    %v1566 = vsel %vm1510, %v1550, 0.0
    %v1567 = vadd.f32 %v1565, %v1566
    %v1568 = vsel %vm1510, %v1551, 0.0
    %v1569 = vadd.f32 %v1567, %v1568
    %v1570 = vsel %vm1510, %v1552, 0.0
    %v1571 = vadd.f32 %v1569, %v1570
    %v1572 = vsel %vm1510, %v1553, 0.0
    %v1573 = vadd.f32 %v1571, %v1572
    %v1574 = vsel %vm1510, %v1554, 0.0
    %v1575 = vadd.f32 %v1573, %v1574
    %v1576 = vsel %vm1510, %v1555, 0.0
    %v1577 = vadd.f32 %v1575, %v1576
    %v1578 = vsel %vm1510, %v1556, 0.0
    %v1579 = vadd.f32 %v1577, %v1578
    %v1580 = vsel %vm1510, %v1557, 0.0
    %v1581 = vadd.f32 %v1579, %v1580
    %v1582 = vsel %vm1510, %v1558, 0.0
    %v1583 = vadd.f32 %v1581, %v1582
    %v1584 = vsel %vm1510, %v1559, 0.0
    %v1585 = vadd.f32 %v1583, %v1584
    %v1586 = vsel %vm1510, %v1560, 0.0
    %v1587 = vadd.f32 %v1585, %v1586
    %v1588 = vsel %vm1510, %v1561, 0.0
    %v1589 = vadd.f32 %v1587, %v1588
    %v1590 = vsel %vm1510, %v1562, 0.0
    %v1591 = vadd.f32 %v1589, %v1590
    %v1592 = vsel %vm1510, %v1563, 0.0
    %v1593 = vadd.f32 %v1591, %v1592
    %v1594 = vsel %vm1510, %v1564, 0.0
    %v1595 = vadd.f32 %v1593, %v1594
    %v1596 = vrot.slane %v1595, 4
    %v1597 = vadd.f32 %v1595, %v1596
    %v1598 = vrot.slane %v1597, 2
    %v1599 = vadd.f32 %v1597, %v1598
    %v1600 = vrot.slane %v1599, 1
    %v1601 = vadd.f32 %v1599, %v1600
    %v1602 = vmul.f32 %v1601, %v382
    %v1603 = vmul.f32 %v1548, %v1548
    %v1604 = vsub.f32 %v1602, %v1603
    %v1605 = vsub.f32 %v1461, %v1548
    %v1606 = vsub.f32 %v1464, %v1548
    %v1607 = vsub.f32 %v1467, %v1548
    %v1608 = vsub.f32 %v1470, %v1548
    %v1609 = vsub.f32 %v1473, %v1548
    %v1610 = vsub.f32 %v1476, %v1548
    %v1611 = vsub.f32 %v1479, %v1548
    %v1612 = vsub.f32 %v1482, %v1548
    %v1613 = vsub.f32 %v1485, %v1548
    %v1614 = vsub.f32 %v1488, %v1548
    %v1615 = vsub.f32 %v1491, %v1548
    %v1616 = vsub.f32 %v1494, %v1548
    %v1617 = vsub.f32 %v1497, %v1548
    %v1618 = vsub.f32 %v1500, %v1548
    %v1619 = vsub.f32 %v1503, %v1548
    %v1620 = vsub.f32 %v1506, %v1548
    %v1621 = vadd.f32 %v1604, 1e-05
    %v1622 = vrsqrt.pop %v1621
    %v1623 = vmul.f32 %v1622, %v1621
    %v1624 = vmul.f32 %v1623, %v1622
    %v1625 = vmul.f32 0.5, %v1624
    %v1626 = vsub.f32 1.5, %v1625
    %v1627 = vmul.f32 %v1622, %v1626
    %vm1628 = vweird.f32 %v1621
    %vm1629 = vweird.f32 %v1622
    %vm1630 = vmor %vm1628, %vm1629
    %v1631 = vsel %vm1630, %v1622, %v1627
    %v1632 = vmul.f32 %v1605, %v1631
    %v1633 = vmul.f32 %v1606, %v1631
    %v1634 = vmul.f32 %v1607, %v1631
    %v1635 = vmul.f32 %v1608, %v1631
    %v1636 = vmul.f32 %v1609, %v1631
    %v1637 = vmul.f32 %v1610, %v1631
    %v1638 = vmul.f32 %v1611, %v1631
    %v1639 = vmul.f32 %v1612, %v1631
    %v1640 = vmul.f32 %v1613, %v1631
    %v1641 = vmul.f32 %v1614, %v1631
    %v1642 = vmul.f32 %v1615, %v1631
    %v1643 = vmul.f32 %v1616, %v1631
    %v1644 = vmul.f32 %v1617, %v1631
    %v1645 = vmul.f32 %v1618, %v1631
    %v1646 = vmul.f32 %v1619, %v1631
    %v1647 = vmul.f32 %v1620, %v1631
    %v1648 = vmul.f32 %v1632, %v1508
    %v1649 = vmul.f32 %v1633, %v1508
    %v1650 = vmul.f32 %v1634, %v1508
    %v1651 = vmul.f32 %v1635, %v1508
    %v1652 = vmul.f32 %v1636, %v1508
    %v1653 = vmul.f32 %v1637, %v1508
    %v1654 = vmul.f32 %v1638, %v1508
    %v1655 = vmul.f32 %v1639, %v1508
    %v1656 = vmul.f32 %v1640, %v1508
    %v1657 = vmul.f32 %v1641, %v1508
    %v1658 = vmul.f32 %v1642, %v1508
    %v1659 = vmul.f32 %v1643, %v1508
    %v1660 = vmul.f32 %v1644, %v1508
    %v1661 = vmul.f32 %v1645, %v1508
    %v1662 = vmul.f32 %v1646, %v1508
    %v1663 = vmul.f32 %v1647, %v1508
    %v1664 = vadd.f32 %v1648, %v1509
    %v1665 = vadd.f32 %v1649, %v1509
    %v1666 = vadd.f32 %v1650, %v1509
    %v1667 = vadd.f32 %v1651, %v1509
    %v1668 = vadd.f32 %v1652, %v1509
    %v1669 = vadd.f32 %v1653, %v1509
    %v1670 = vadd.f32 %v1654, %v1509
    %v1671 = vadd.f32 %v1655, %v1509
    %v1672 = vadd.f32 %v1656, %v1509
    %v1673 = vadd.f32 %v1657, %v1509
    %v1674 = vadd.f32 %v1658, %v1509
    %v1675 = vadd.f32 %v1659, %v1509
    %v1676 = vadd.f32 %v1660, %v1509
    %v1677 = vadd.f32 %v1661, %v1509
    %v1678 = vadd.f32 %v1662, %v1509
    %v1679 = vadd.f32 %v1663, %v1509
    %v1680 = vmax.f32 %v1664, 0.0
    %v1681 = vmax.f32 %v1665, 0.0
    %v1682 = vmax.f32 %v1666, 0.0
    %v1683 = vmax.f32 %v1667, 0.0
    %v1684 = vmax.f32 %v1668, 0.0
    %v1685 = vmax.f32 %v1669, 0.0
    %v1686 = vmax.f32 %v1670, 0.0
    %v1687 = vmax.f32 %v1671, 0.0
    %v1688 = vmax.f32 %v1672, 0.0
    %v1689 = vmax.f32 %v1673, 0.0
    %v1690 = vmax.f32 %v1674, 0.0
    %v1691 = vmax.f32 %v1675, 0.0
    %v1692 = vmax.f32 %v1676, 0.0
    %v1693 = vmax.f32 %v1677, 0.0
    %v1694 = vmax.f32 %v1678, 0.0
    %v1695 = vmax.f32 %v1679, 0.0
    %v1696 = vsel %vm1510, %v1680, -inf
    %v1697 = vsel %vm1510, %v1681, -inf
    %v1698 = vsel %vm1510, %v1682, -inf
    %v1699 = vsel %vm1510, %v1683, -inf
    %v1700 = vsel %vm1510, %v1684, -inf
    %v1701 = vmax.f32 %v1696, %v1700
    %v1702 = vsel %vm1510, %v1685, -inf
    %v1703 = vmax.f32 %v1697, %v1702
    %v1704 = vsel %vm1510, %v1686, -inf
    %v1705 = vmax.f32 %v1698, %v1704
    %v1706 = vsel %vm1510, %v1687, -inf
    %v1707 = vmax.f32 %v1699, %v1706
    %v1708 = vmax.f32 %v1701, %v1703
    %v1709 = vmax.f32 %v1705, %v1707
    %v1710 = vmax.f32 %v1708, %v1709
    %v1711 = vrot.slane %v1710, 4
    %v1712 = vmax.f32 %v1710, %v1711
    %v1713 = vrot.slane %v1712, 2
    %v1714 = vmax.f32 %v1712, %v1713
    %v1715 = vrot.slane %v1714, 1
    %v1716 = vmax.f32 %v1714, %v1715
    %v1717 = vsel %vm1510, %v1688, -inf
    %v1718 = vsel %vm1510, %v1689, -inf
    %v1719 = vsel %vm1510, %v1690, -inf
    %v1720 = vsel %vm1510, %v1691, -inf
    %v1721 = vsel %vm1510, %v1692, -inf
    %v1722 = vmax.f32 %v1717, %v1721
    %v1723 = vsel %vm1510, %v1693, -inf
    %v1724 = vmax.f32 %v1718, %v1723
    %v1725 = vsel %vm1510, %v1694, -inf
    %v1726 = vmax.f32 %v1719, %v1725
    %v1727 = vsel %vm1510, %v1695, -inf
    %v1728 = vmax.f32 %v1720, %v1727
    %v1729 = vmax.f32 %v1722, %v1724
    %v1730 = vmax.f32 %v1726, %v1728
    %v1731 = vmax.f32 %v1729, %v1730
    %v1732 = vrot.slane %v1731, 4
    %v1733 = vmax.f32 %v1731, %v1732
    %v1734 = vrot.slane %v1733, 2
    %v1735 = vmax.f32 %v1733, %v1734
    %v1736 = vrot.slane %v1735, 1
    %v1737 = vmax.f32 %v1735, %v1736
    %vm1738 = vcmask 1040384
    %v1739 = vsel %vm1738, %v1716, %v1737
    %v1740 = vld [vmem:[#allocation4] sm:$0xff]
    %v1741 = vld [vmem:[#allocation4 + $0x8] sm:$0xff]
    %v1742 = vld [vmem:[#allocation4 + $0x10] sm:$0xff]
    %v1743 = vld [vmem:[#allocation4 + $0x18] sm:$0xff]
    %v1744 = vld [vmem:[#allocation4 + $0x20] sm:$0xff]
    %v1745 = vld [vmem:[#allocation4 + $0x28] sm:$0xff]
    %v1746 = vld [vmem:[#allocation4 + $0x30] sm:$0xff]
    %v1747 = vld [vmem:[#allocation4 + $0x38] sm:$0xff]
    %s1748 = scalar_lea.vmem [#allocation6], 23
    %v1749 = vld [vmem:[%s1748] ss:$8 sm:$0x3]
    %v1751 = vperm.slane %v1749, 0
    %v1752 = vperm.slane %v1749, 1
    %v1756 = vsel %vm1510, %v1739, 0
    %1758 = vmatpush.msra.mxu0 0.0
    %1759 = vmatpush.msra.mxu0 0.0
    %1760 = vmatpush.msra.mxu0 0.0
    %1761 = vmatpush.msra.mxu0 0.0
    %1762 = vmatpush.msra.mxu0 0.0
    %1763 = vmatpush.msra.mxu0 0.0
    %1764 = vmatpush.msra.mxu0 0.0
    %1765 = vmatpush.msra.mxu0 0.0
    %1766 = vmatpush.msra.mxu0 0.0
    %1767 = vmatpush.msra.mxu0 0.0
    %1768 = vmatpush.msra.mxu0 0.0
    %1769 = vmatpush.msra.mxu0 0.0
    %1770 = vmatpush.msra.mxu0 %v1746
    %1771 = vmatpush.msra.mxu0 %v1744
    %1772 = vmatpush.msra.mxu0 %v1742
    %1773 = vmatpush.msra.mxu0 %v1740
    %1774 = vmatmul.f32.gmra.mxu0 %v1756
    %v1775 = vpop.f32.mrf.mxu0
    %v1776 = vadd.f32 %v1751, %v1775
    %1777 = vdwg.mxu0
    %1778 = vmatpush.msra.mxu0 0.0
    %1779 = vmatpush.msra.mxu0 0.0
    %1780 = vmatpush.msra.mxu0 0.0
    %1781 = vmatpush.msra.mxu0 0.0
    %1782 = vmatpush.msra.mxu0 0.0
    %1783 = vmatpush.msra.mxu0 0.0
    %1784 = vmatpush.msra.mxu0 0.0
    %1785 = vmatpush.msra.mxu0 0.0
    %1786 = vmatpush.msra.mxu0 0.0
    %1787 = vmatpush.msra.mxu0 0.0
    %1788 = vmatpush.msra.mxu0 0.0
    %1789 = vmatpush.msra.mxu0 0.0
    %1790 = vmatpush.msra.mxu0 %v1747
    %1791 = vmatpush.msra.mxu0 %v1745
    %1792 = vmatpush.msra.mxu0 %v1743
    %1793 = vmatpush.msra.mxu0 %v1741
    %1794 = vmatmul.f32.gmra.mxu0 %v1756
    %v1795 = vpop.f32.mrf.mxu0
    %v1796 = vadd.f32 %v1752, %v1795
    %1797 = vdwg.mxu0
    %s1798 = scalar_lea.vmem [#allocation6], 32
    %v1799 = vld [vmem:[%s1798] ss:$8 sm:$0x3]
    %s1800 = scalar_lea.vmem [#allocation6], 33
    %v1801 = vld [vmem:[%s1800] ss:$8 sm:$0x3]
    %vm1802 = vcmask 1041408
    %v1803 = vsel %vm1802, %v1776, 0.0
    %v1804 = vrot.slane %v1803, 4
    %v1805 = vadd.f32 %v1803, %v1804
    %v1806 = vrot.slane %v1805, 2
    %v1807 = vadd.f32 %v1805, %v1806
    %v1808 = vrot.slane %v1807, 1
    %v1809 = vadd.f32 %v1807, %v1808
    %v1810 = vsel %vm1802, %v1796, 0.0
    %v1811 = vrot.slane %v1810, 4
    %v1812 = vadd.f32 %v1810, %v1811
    %v1813 = vrot.slane %v1812, 2
    %v1814 = vadd.f32 %v1812, %v1813
    %v1815 = vrot.slane %v1814, 1
    %v1816 = vadd.f32 %v1814, %v1815
    %v1817 = vrcp.pop 2.0
    %v1818 = vmul.f32 2.0, %v1817
    %v1819 = vsub.f32 1.0, %v1818
    %v1820 = vmul.f32 %v1817, %v1819
    %v1821 = vadd.f32 %v1817, %v1820
    %vm1822 = vweird.f32 %v1817
    %v1823 = vsel %vm1822, %v1817, %v1821
    %v1824 = vmul.f32 %v1809, %v1823
    %v1825 = vmul.f32 %v1816, %v1823
    %v1826 = vmul.f32 %v1776, %v1776
    %v1827 = vmul.f32 %v1796, %v1796
    %v1828 = vsel %vm1802, %v1826, 0.0
    %v1829 = vrot.slane %v1828, 4
    %v1830 = vadd.f32 %v1828, %v1829
    %v1831 = vrot.slane %v1830, 2
    %v1832 = vadd.f32 %v1830, %v1831
    %v1833 = vrot.slane %v1832, 1
    %v1834 = vadd.f32 %v1832, %v1833
    %v1835 = vsel %vm1802, %v1827, 0.0
    %v1836 = vrot.slane %v1835, 4
    %v1837 = vadd.f32 %v1835, %v1836
    %v1838 = vrot.slane %v1837, 2
    %v1839 = vadd.f32 %v1837, %v1838
    %v1840 = vrot.slane %v1839, 1
    %v1841 = vadd.f32 %v1839, %v1840
    %v1842 = vmul.f32 %v1834, %v1823
    %v1843 = vmul.f32 %v1841, %v1823
    %v1844 = vmul.f32 %v1824, %v1824
    %v1845 = vmul.f32 %v1825, %v1825
    %v1846 = vsub.f32 %v1842, %v1844
    %v1847 = vsub.f32 %v1843, %v1845
    %v1848 = vsub.f32 %v1776, %v1824
    %v1849 = vsub.f32 %v1796, %v1825
    %v1850 = vadd.f32 %v1846, 1e-05
    %v1851 = vadd.f32 %v1847, 1e-05
    %v1852 = vrsqrt.pop %v1850
    %v1853 = vmul.f32 %v1852, %v1850
    %v1854 = vmul.f32 %v1853, %v1852
    %v1855 = vmul.f32 0.5, %v1854
    %v1856 = vsub.f32 1.5, %v1855
    %v1857 = vmul.f32 %v1852, %v1856
    %vm1858 = vweird.f32 %v1850
    %vm1859 = vweird.f32 %v1852
    %vm1860 = vmor %vm1858, %vm1859
    %v1861 = vsel %vm1860, %v1852, %v1857
    %v1862 = vrsqrt.pop %v1851
    %v1863 = vmul.f32 %v1862, %v1851
    %v1864 = vmul.f32 %v1863, %v1862
    %v1865 = vmul.f32 0.5, %v1864
    %v1866 = vsub.f32 1.5, %v1865
    %v1867 = vmul.f32 %v1862, %v1866
    %vm1868 = vweird.f32 %v1851
    %vm1869 = vweird.f32 %v1862
    %vm1870 = vmor %vm1868, %vm1869
    %v1871 = vsel %vm1870, %v1862, %v1867
    %v1872 = vmul.f32 %v1848, %v1861
    %v1873 = vmul.f32 %v1849, %v1871
    %v1875 = vperm.slane %v1799, 0
    %v1876 = vperm.slane %v1799, 1
    %v1879 = vmul.f32 %v1872, %v1875
    %v1880 = vmul.f32 %v1873, %v1876
    %v1882 = vperm.slane %v1801, 0
    %v1883 = vperm.slane %v1801, 1
    %v1886 = vadd.f32 %v1879, %v1882
    %v1887 = vadd.f32 %v1880, %v1883
    %v1888 = vmax.f32 %v1886, 0.0
    %v1889 = vmax.f32 %v1887, 0.0
    %v1890 = vld [vmem:[#allocation4 + $0x40] sm:$0xff]
    %v1891 = vld [vmem:[#allocation4 + $0x48] sm:$0xff]
    %v1892 = vld [vmem:[#allocation4 + $0x50] sm:$0xff]
    %v1893 = vld [vmem:[#allocation4 + $0x58] sm:$0xff]
    %v1894 = vld [vmem:[#allocation4 + $0x60] sm:$0xff]
    %v1895 = vld [vmem:[#allocation4 + $0x68] sm:$0xff]
    %v1896 = vld [vmem:[#allocation4 + $0x70] sm:$0xff]
    %v1897 = vld [vmem:[#allocation4 + $0x78] sm:$0xff]
    %v1898 = vld [vmem:[#allocation4 + $0x80] sm:$0xff]
    %v1899 = vld [vmem:[#allocation4 + $0x88] sm:$0xff]
    %v1900 = vld [vmem:[#allocation4 + $0x90] sm:$0xff]
    %v1901 = vld [vmem:[#allocation4 + $0x98] sm:$0xff]
    %v1902 = vld [vmem:[#allocation4 + $0xa0] sm:$0xff]
    %v1903 = vld [vmem:[#allocation4 + $0xa8] sm:$0xff]
    %v1904 = vld [vmem:[#allocation4 + $0xb0] sm:$0xff]
    %v1905 = vld [vmem:[#allocation4 + $0xb8] sm:$0xff]
    %v1906 = vld [vmem:[#allocation4 + $0xc0] sm:$0xff]
    %v1907 = vld [vmem:[#allocation4 + $0xc8] sm:$0xff]
    %v1908 = vld [vmem:[#allocation4 + $0xd0] sm:$0xff]
    %v1909 = vld [vmem:[#allocation4 + $0xd8] sm:$0xff]
    %v1910 = vld [vmem:[#allocation4 + $0xe0] sm:$0xff]
    %v1911 = vld [vmem:[#allocation4 + $0xe8] sm:$0xff]
    %v1912 = vld [vmem:[#allocation4 + $0xf0] sm:$0xff]
    %v1913 = vld [vmem:[#allocation4 + $0xf8] sm:$0xff]
    %v1914 = vld [vmem:[#allocation4 + $0x100] sm:$0xff]
    %v1915 = vld [vmem:[#allocation4 + $0x108] sm:$0xff]
    %v1916 = vld [vmem:[#allocation4 + $0x110] sm:$0xff]
    %v1917 = vld [vmem:[#allocation4 + $0x118] sm:$0xff]
    %v1918 = vld [vmem:[#allocation4 + $0x120] sm:$0xff]
    %v1919 = vld [vmem:[#allocation4 + $0x128] sm:$0xff]
    %v1920 = vld [vmem:[#allocation4 + $0x130] sm:$0xff]
    %v1921 = vld [vmem:[#allocation4 + $0x138] sm:$0xff]
    %v1922 = vld [vmem:[#allocation4 + $0x140] sm:$0xff]
    %v1923 = vld [vmem:[#allocation4 + $0x148] sm:$0xff]
    %v1924 = vld [vmem:[#allocation4 + $0x150] sm:$0xff]
    %v1925 = vld [vmem:[#allocation4 + $0x158] sm:$0xff]
    %v1926 = vld [vmem:[#allocation4 + $0x160] sm:$0xff]
    %v1927 = vld [vmem:[#allocation4 + $0x168] sm:$0xff]
    %v1928 = vld [vmem:[#allocation4 + $0x170] sm:$0xff]
    %v1929 = vld [vmem:[#allocation4 + $0x178] sm:$0xff]
    %v1930 = vld [vmem:[#allocation4 + $0x180] sm:$0xff]
    %v1931 = vld [vmem:[#allocation4 + $0x188] sm:$0xff]
    %v1932 = vld [vmem:[#allocation4 + $0x190] sm:$0xff]
    %v1933 = vld [vmem:[#allocation4 + $0x198] sm:$0xff]
    %v1934 = vld [vmem:[#allocation4 + $0x1a0] sm:$0xff]
    %v1935 = vld [vmem:[#allocation4 + $0x1a8] sm:$0xff]
    %v1936 = vld [vmem:[#allocation4 + $0x1b0] sm:$0xff]
    %v1937 = vld [vmem:[#allocation4 + $0x1b8] sm:$0xff]
    %v1938 = vld [vmem:[#allocation4 + $0x1c0] sm:$0xff]
    %v1939 = vld [vmem:[#allocation4 + $0x1c8] sm:$0xff]
    %v1940 = vld [vmem:[#allocation4 + $0x1d0] sm:$0xff]
    %v1941 = vld [vmem:[#allocation4 + $0x1d8] sm:$0xff]
    %v1942 = vld [vmem:[#allocation4 + $0x1e0] sm:$0xff]
    %v1943 = vld [vmem:[#allocation4 + $0x1e8] sm:$0xff]
    %v1944 = vld [vmem:[#allocation4 + $0x1f0] sm:$0xff]
    %v1945 = vld [vmem:[#allocation4 + $0x1f8] sm:$0xff]
    %v1946 = vld [vmem:[#allocation4 + $0x200] sm:$0xff]
    %v1947 = vld [vmem:[#allocation4 + $0x208] sm:$0xff]
    %v1948 = vld [vmem:[#allocation4 + $0x210] sm:$0xff]
    %v1949 = vld [vmem:[#allocation4 + $0x218] sm:$0xff]
    %v1950 = vld [vmem:[#allocation4 + $0x220] sm:$0xff]
    %v1951 = vld [vmem:[#allocation4 + $0x228] sm:$0xff]
    %v1952 = vld [vmem:[#allocation4 + $0x230] sm:$0xff]
    %v1953 = vld [vmem:[#allocation4 + $0x238] sm:$0xff]
    %s1954 = scalar_lea.vmem [#allocation6], 34
    %v1955 = vld [vmem:[%s1954] ss:$8 sm:$0x3]
    %v1957 = vperm.slane %v1955, 0
    %v1958 = vperm.slane %v1955, 1
    %1961 = vmatpush.msra.mxu0 %v1920
    %1962 = vmatpush.msra.mxu0 %v1918
    %1963 = vmatpush.msra.mxu0 %v1916
    %1964 = vmatpush.msra.mxu0 %v1914
    %1965 = vmatpush.msra.mxu0 %v1912
    %1966 = vmatpush.msra.mxu0 %v1910
    %1967 = vmatpush.msra.mxu0 %v1908
    %1968 = vmatpush.msra.mxu0 %v1906
    %1969 = vmatpush.msra.mxu0 %v1904
    %1970 = vmatpush.msra.mxu0 %v1902
    %1971 = vmatpush.msra.mxu0 %v1900
    %1972 = vmatpush.msra.mxu0 %v1898
    %1973 = vmatpush.msra.mxu0 %v1896
    %1974 = vmatpush.msra.mxu0 %v1894
    %1975 = vmatpush.msra.mxu0 %v1892
    %1976 = vmatpush.msra.mxu0 %v1890
    %1977 = vmatmul.f32.gmra.mxu0 %v1888
    %v1978 = vpop.f32.mrf.mxu0
    %v1979 = vadd.f32 %v1957, %v1978
    %1980 = vdwg.mxu0
    %1981 = vmatpush.msra.mxu0 %v1952
    %1982 = vmatpush.msra.mxu0 %v1950
    %1983 = vmatpush.msra.mxu0 %v1948
    %1984 = vmatpush.msra.mxu0 %v1946
    %1985 = vmatpush.msra.mxu0 %v1944
    %1986 = vmatpush.msra.mxu0 %v1942
    %1987 = vmatpush.msra.mxu0 %v1940
    %1988 = vmatpush.msra.mxu0 %v1938
    %1989 = vmatpush.msra.mxu0 %v1936
    %1990 = vmatpush.msra.mxu0 %v1934
    %1991 = vmatpush.msra.mxu0 %v1932
    %1992 = vmatpush.msra.mxu0 %v1930
    %1993 = vmatpush.msra.mxu0 %v1928
    %1994 = vmatpush.msra.mxu0 %v1926
    %1995 = vmatpush.msra.mxu0 %v1924
    %1996 = vmatpush.msra.mxu0 %v1922
    %1997 = vmatmul.f32.gmra.mxu0 %v1889
    %v1998 = vpop.f32.mrf.mxu0
    %v1999 = vadd.f32 %v1979, %v1998
    %2000 = vdwg.mxu0
    %2001 = vmatpush.msra.mxu0 %v1921
    %2002 = vmatpush.msra.mxu0 %v1919
    %2003 = vmatpush.msra.mxu0 %v1917
    %2004 = vmatpush.msra.mxu0 %v1915
    %2005 = vmatpush.msra.mxu0 %v1913
    %2006 = vmatpush.msra.mxu0 %v1911
    %2007 = vmatpush.msra.mxu0 %v1909
    %2008 = vmatpush.msra.mxu0 %v1907
    %2009 = vmatpush.msra.mxu0 %v1905
    %2010 = vmatpush.msra.mxu0 %v1903
    %2011 = vmatpush.msra.mxu0 %v1901
    %2012 = vmatpush.msra.mxu0 %v1899
    %2013 = vmatpush.msra.mxu0 %v1897
    %2014 = vmatpush.msra.mxu0 %v1895
    %2015 = vmatpush.msra.mxu0 %v1893
    %2016 = vmatpush.msra.mxu0 %v1891
    %2017 = vmatmul.f32.gmra.mxu0 %v1888
    %v2018 = vpop.f32.mrf.mxu0
    %v2019 = vadd.f32 %v1958, %v2018
    %2020 = vdwg.mxu0
    %2021 = vmatpush.msra.mxu0 %v1953
    %2022 = vmatpush.msra.mxu0 %v1951
    %2023 = vmatpush.msra.mxu0 %v1949
    %2024 = vmatpush.msra.mxu0 %v1947
    %2025 = vmatpush.msra.mxu0 %v1945
    %2026 = vmatpush.msra.mxu0 %v1943
    %2027 = vmatpush.msra.mxu0 %v1941
    %2028 = vmatpush.msra.mxu0 %v1939
    %2029 = vmatpush.msra.mxu0 %v1937
    %2030 = vmatpush.msra.mxu0 %v1935
    %2031 = vmatpush.msra.mxu0 %v1933
    %2032 = vmatpush.msra.mxu0 %v1931
    %2033 = vmatpush.msra.mxu0 %v1929
    %2034 = vmatpush.msra.mxu0 %v1927
    %2035 = vmatpush.msra.mxu0 %v1925
    %2036 = vmatpush.msra.mxu0 %v1923
    %2037 = vmatmul.f32.gmra.mxu0 %v1889
    %v2038 = vpop.f32.mrf.mxu0
    %v2039 = vadd.f32 %v2019, %v2038
    %2040 = vdwg.mxu0
    %s2041 = scalar_lea.vmem [#allocation6], 35
    %v2042 = vld [vmem:[%s2041] ss:$8 sm:$0x3]
    %s2043 = scalar_lea.vmem [#allocation6], 36
    %v2044 = vld [vmem:[%s2043] ss:$8 sm:$0x3]
    %v2045 = vsel %vm1802, %v1999, 0.0
    %v2046 = vrot.slane %v2045, 4
    %v2047 = vadd.f32 %v2045, %v2046
    %v2048 = vrot.slane %v2047, 2
    %v2049 = vadd.f32 %v2047, %v2048
    %v2050 = vrot.slane %v2049, 1
    %v2051 = vadd.f32 %v2049, %v2050
    %v2052 = vsel %vm1802, %v2039, 0.0
    %v2053 = vrot.slane %v2052, 4
    %v2054 = vadd.f32 %v2052, %v2053
    %v2055 = vrot.slane %v2054, 2
    %v2056 = vadd.f32 %v2054, %v2055
    %v2057 = vrot.slane %v2056, 1
    %v2058 = vadd.f32 %v2056, %v2057
    %v2059 = vmul.f32 %v2051, %v1823
    %v2060 = vmul.f32 %v2058, %v1823
    %v2061 = vmul.f32 %v1999, %v1999
    %v2062 = vmul.f32 %v2039, %v2039
    %v2063 = vsel %vm1802, %v2061, 0.0
    %v2064 = vrot.slane %v2063, 4
    %v2065 = vadd.f32 %v2063, %v2064
    %v2066 = vrot.slane %v2065, 2
    %v2067 = vadd.f32 %v2065, %v2066
    %v2068 = vrot.slane %v2067, 1
    %v2069 = vadd.f32 %v2067, %v2068
    %v2070 = vsel %vm1802, %v2062, 0.0
    %v2071 = vrot.slane %v2070, 4
    %v2072 = vadd.f32 %v2070, %v2071
    %v2073 = vrot.slane %v2072, 2
    %v2074 = vadd.f32 %v2072, %v2073
    %v2075 = vrot.slane %v2074, 1
    %v2076 = vadd.f32 %v2074, %v2075
    %v2077 = vmul.f32 %v2069, %v1823
    %v2078 = vmul.f32 %v2076, %v1823
    %v2079 = vmul.f32 %v2059, %v2059
    %v2080 = vmul.f32 %v2060, %v2060
    %v2081 = vsub.f32 %v2077, %v2079
    %v2082 = vsub.f32 %v2078, %v2080
    %v2083 = vsub.f32 %v1999, %v2059
    %v2084 = vsub.f32 %v2039, %v2060
    %v2085 = vadd.f32 %v2081, 1e-05
    %v2086 = vadd.f32 %v2082, 1e-05
    %v2087 = vrsqrt.pop %v2085
    %v2088 = vmul.f32 %v2087, %v2085
    %v2089 = vmul.f32 %v2088, %v2087
    %v2090 = vmul.f32 0.5, %v2089
    %v2091 = vsub.f32 1.5, %v2090
    %v2092 = vmul.f32 %v2087, %v2091
    %vm2093 = vweird.f32 %v2085
    %vm2094 = vweird.f32 %v2087
    %vm2095 = vmor %vm2093, %vm2094
    %v2096 = vsel %vm2095, %v2087, %v2092
    %v2097 = vrsqrt.pop %v2086
    %v2098 = vmul.f32 %v2097, %v2086
    %v2099 = vmul.f32 %v2098, %v2097
    %v2100 = vmul.f32 0.5, %v2099
    %v2101 = vsub.f32 1.5, %v2100
    %v2102 = vmul.f32 %v2097, %v2101
    %vm2103 = vweird.f32 %v2086
    %vm2104 = vweird.f32 %v2097
    %vm2105 = vmor %vm2103, %vm2104
    %v2106 = vsel %vm2105, %v2097, %v2102
    %v2107 = vmul.f32 %v2083, %v2096
    %v2108 = vmul.f32 %v2084, %v2106
    %v2110 = vperm.slane %v2042, 0
    %v2111 = vperm.slane %v2042, 1
    %v2114 = vmul.f32 %v2107, %v2110
    %v2115 = vmul.f32 %v2108, %v2111
    %v2117 = vperm.slane %v2044, 0
    %v2118 = vperm.slane %v2044, 1
    %v2121 = vadd.f32 %v2114, %v2117
    %v2122 = vadd.f32 %v2115, %v2118
    %v2123 = vmax.f32 %v2121, 0.0
    %v2124 = vmax.f32 %v2122, 0.0
    %v2125 = vld [vmem:[#allocation4 + $0x240] sm:$0xff]
    %v2126 = vld [vmem:[#allocation4 + $0x248] sm:$0xff]
    %v2127 = vld [vmem:[#allocation4 + $0x250] sm:$0xff]
    %v2128 = vld [vmem:[#allocation4 + $0x258] sm:$0xff]
    %v2129 = vld [vmem:[#allocation4 + $0x260] sm:$0xff]
    %v2130 = vld [vmem:[#allocation4 + $0x268] sm:$0xff]
    %v2131 = vld [vmem:[#allocation4 + $0x270] sm:$0xff]
    %v2132 = vld [vmem:[#allocation4 + $0x278] sm:$0xff]
    %v2133 = vld [vmem:[#allocation4 + $0x280] sm:$0xff]
    %v2134 = vld [vmem:[#allocation4 + $0x288] sm:$0xff]
    %v2135 = vld [vmem:[#allocation4 + $0x290] sm:$0xff]
    %v2136 = vld [vmem:[#allocation4 + $0x298] sm:$0xff]
    %v2137 = vld [vmem:[#allocation4 + $0x2a0] sm:$0xff]
    %v2138 = vld [vmem:[#allocation4 + $0x2a8] sm:$0xff]
    %v2139 = vld [vmem:[#allocation4 + $0x2b0] sm:$0xff]
    %v2140 = vld [vmem:[#allocation4 + $0x2b8] sm:$0xff]
    %v2141 = vld [vmem:[#allocation4 + $0x2c0] sm:$0xff]
    %v2142 = vld [vmem:[#allocation4 + $0x2c8] sm:$0xff]
    %v2143 = vld [vmem:[#allocation4 + $0x2d0] sm:$0xff]
    %v2144 = vld [vmem:[#allocation4 + $0x2d8] sm:$0xff]
    %v2145 = vld [vmem:[#allocation4 + $0x2e0] sm:$0xff]
    %v2146 = vld [vmem:[#allocation4 + $0x2e8] sm:$0xff]
    %v2147 = vld [vmem:[#allocation4 + $0x2f0] sm:$0xff]
    %v2148 = vld [vmem:[#allocation4 + $0x2f8] sm:$0xff]
    %v2149 = vld [vmem:[#allocation4 + $0x300] sm:$0xff]
    %v2150 = vld [vmem:[#allocation4 + $0x308] sm:$0xff]
    %v2151 = vld [vmem:[#allocation4 + $0x310] sm:$0xff]
    %v2152 = vld [vmem:[#allocation4 + $0x318] sm:$0xff]
    %v2153 = vld [vmem:[#allocation4 + $0x320] sm:$0xff]
    %v2154 = vld [vmem:[#allocation4 + $0x328] sm:$0xff]
    %v2155 = vld [vmem:[#allocation4 + $0x330] sm:$0xff]
    %v2156 = vld [vmem:[#allocation4 + $0x338] sm:$0xff]
    %v2157 = vld [vmem:[#allocation4 + $0x340] sm:$0xff]
    %v2158 = vld [vmem:[#allocation4 + $0x348] sm:$0xff]
    %v2159 = vld [vmem:[#allocation4 + $0x350] sm:$0xff]
    %v2160 = vld [vmem:[#allocation4 + $0x358] sm:$0xff]
    %v2161 = vld [vmem:[#allocation4 + $0x360] sm:$0xff]
    %v2162 = vld [vmem:[#allocation4 + $0x368] sm:$0xff]
    %v2163 = vld [vmem:[#allocation4 + $0x370] sm:$0xff]
    %v2164 = vld [vmem:[#allocation4 + $0x378] sm:$0xff]
    %v2165 = vld [vmem:[#allocation4 + $0x380] sm:$0xff]
    %v2166 = vld [vmem:[#allocation4 + $0x388] sm:$0xff]
    %v2167 = vld [vmem:[#allocation4 + $0x390] sm:$0xff]
    %v2168 = vld [vmem:[#allocation4 + $0x398] sm:$0xff]
    %v2169 = vld [vmem:[#allocation4 + $0x3a0] sm:$0xff]
    %v2170 = vld [vmem:[#allocation4 + $0x3a8] sm:$0xff]
    %v2171 = vld [vmem:[#allocation4 + $0x3b0] sm:$0xff]
    %v2172 = vld [vmem:[#allocation4 + $0x3b8] sm:$0xff]
    %v2173 = vld [vmem:[#allocation4 + $0x3c0] sm:$0xff]
    %v2174 = vld [vmem:[#allocation4 + $0x3c8] sm:$0xff]
    %v2175 = vld [vmem:[#allocation4 + $0x3d0] sm:$0xff]
    %v2176 = vld [vmem:[#allocation4 + $0x3d8] sm:$0xff]
    %v2177 = vld [vmem:[#allocation4 + $0x3e0] sm:$0xff]
    %v2178 = vld [vmem:[#allocation4 + $0x3e8] sm:$0xff]
    %v2179 = vld [vmem:[#allocation4 + $0x3f0] sm:$0xff]
    %v2180 = vld [vmem:[#allocation4 + $0x3f8] sm:$0xff]
    %v2181 = vld [vmem:[#allocation4 + $0x400] sm:$0xff]
    %v2182 = vld [vmem:[#allocation4 + $0x408] sm:$0xff]
    %v2183 = vld [vmem:[#allocation4 + $0x410] sm:$0xff]
    %v2184 = vld [vmem:[#allocation4 + $0x418] sm:$0xff]
    %v2185 = vld [vmem:[#allocation4 + $0x420] sm:$0xff]
    %v2186 = vld [vmem:[#allocation4 + $0x428] sm:$0xff]
    %v2187 = vld [vmem:[#allocation4 + $0x430] sm:$0xff]
    %v2188 = vld [vmem:[#allocation4 + $0x438] sm:$0xff]
    %s2189 = scalar_lea.vmem [#allocation6], 37
    %v2190 = vld [vmem:[%s2189] ss:$8 sm:$0x3]
    %v2192 = vperm.slane %v2190, 0
    %v2193 = vperm.slane %v2190, 1
    %2196 = vmatpush.msra.mxu0 %v2155
    %2197 = vmatpush.msra.mxu0 %v2153
    %2198 = vmatpush.msra.mxu0 %v2151
    %2199 = vmatpush.msra.mxu0 %v2149
    %2200 = vmatpush.msra.mxu0 %v2147
    %2201 = vmatpush.msra.mxu0 %v2145
    %2202 = vmatpush.msra.mxu0 %v2143
    %2203 = vmatpush.msra.mxu0 %v2141
    %2204 = vmatpush.msra.mxu0 %v2139
    %2205 = vmatpush.msra.mxu0 %v2137
    %2206 = vmatpush.msra.mxu0 %v2135
    %2207 = vmatpush.msra.mxu0 %v2133
    %2208 = vmatpush.msra.mxu0 %v2131
    %2209 = vmatpush.msra.mxu0 %v2129
    %2210 = vmatpush.msra.mxu0 %v2127
    %2211 = vmatpush.msra.mxu0 %v2125
    %2212 = vmatmul.f32.gmra.mxu0 %v2123
    %v2213 = vpop.f32.mrf.mxu0
    %v2214 = vadd.f32 %v2192, %v2213
    %2215 = vdwg.mxu0
    %2216 = vmatpush.msra.mxu0 %v2187
    %2217 = vmatpush.msra.mxu0 %v2185
    %2218 = vmatpush.msra.mxu0 %v2183
    %2219 = vmatpush.msra.mxu0 %v2181
    %2220 = vmatpush.msra.mxu0 %v2179
    %2221 = vmatpush.msra.mxu0 %v2177
    %2222 = vmatpush.msra.mxu0 %v2175
    %2223 = vmatpush.msra.mxu0 %v2173
    %2224 = vmatpush.msra.mxu0 %v2171
    %2225 = vmatpush.msra.mxu0 %v2169
    %2226 = vmatpush.msra.mxu0 %v2167
    %2227 = vmatpush.msra.mxu0 %v2165
    %2228 = vmatpush.msra.mxu0 %v2163
    %2229 = vmatpush.msra.mxu0 %v2161
    %2230 = vmatpush.msra.mxu0 %v2159
    %2231 = vmatpush.msra.mxu0 %v2157
    %2232 = vmatmul.f32.gmra.mxu0 %v2124
    %v2233 = vpop.f32.mrf.mxu0
    %v2234 = vadd.f32 %v2214, %v2233
    %2235 = vdwg.mxu0
    %2236 = vmatpush.msra.mxu0 %v2156
    %2237 = vmatpush.msra.mxu0 %v2154
    %2238 = vmatpush.msra.mxu0 %v2152
    %2239 = vmatpush.msra.mxu0 %v2150
    %2240 = vmatpush.msra.mxu0 %v2148
    %2241 = vmatpush.msra.mxu0 %v2146
    %2242 = vmatpush.msra.mxu0 %v2144
    %2243 = vmatpush.msra.mxu0 %v2142
    %2244 = vmatpush.msra.mxu0 %v2140
    %2245 = vmatpush.msra.mxu0 %v2138
    %2246 = vmatpush.msra.mxu0 %v2136
    %2247 = vmatpush.msra.mxu0 %v2134
    %2248 = vmatpush.msra.mxu0 %v2132
    %2249 = vmatpush.msra.mxu0 %v2130
    %2250 = vmatpush.msra.mxu0 %v2128
    %2251 = vmatpush.msra.mxu0 %v2126
    %2252 = vmatmul.f32.gmra.mxu0 %v2123
    %v2253 = vpop.f32.mrf.mxu0
    %v2254 = vadd.f32 %v2193, %v2253
    %2255 = vdwg.mxu0
    %2256 = vmatpush.msra.mxu0 %v2188
    %2257 = vmatpush.msra.mxu0 %v2186
    %2258 = vmatpush.msra.mxu0 %v2184
    %2259 = vmatpush.msra.mxu0 %v2182
    %2260 = vmatpush.msra.mxu0 %v2180
    %2261 = vmatpush.msra.mxu0 %v2178
    %2262 = vmatpush.msra.mxu0 %v2176
    %2263 = vmatpush.msra.mxu0 %v2174
    %2264 = vmatpush.msra.mxu0 %v2172
    %2265 = vmatpush.msra.mxu0 %v2170
    %2266 = vmatpush.msra.mxu0 %v2168
    %2267 = vmatpush.msra.mxu0 %v2166
    %2268 = vmatpush.msra.mxu0 %v2164
    %2269 = vmatpush.msra.mxu0 %v2162
    %2270 = vmatpush.msra.mxu0 %v2160
    %2271 = vmatpush.msra.mxu0 %v2158
    %2272 = vmatmul.f32.gmra.mxu0 %v2124
    %v2273 = vpop.f32.mrf.mxu0
    %v2274 = vadd.f32 %v2254, %v2273
    %2275 = vdwg.mxu0
    %s2276 = scalar_lea.vmem [#allocation6], 38
    %v2277 = vld [vmem:[%s2276] ss:$8 sm:$0x3]
    %s2278 = scalar_lea.vmem [#allocation6], 39
    %v2279 = vld [vmem:[%s2278] ss:$8 sm:$0x3]
    %v2280 = vsel %vm1802, %v2234, 0.0
    %v2281 = vrot.slane %v2280, 4
    %v2282 = vadd.f32 %v2280, %v2281
    %v2283 = vrot.slane %v2282, 2
    %v2284 = vadd.f32 %v2282, %v2283
    %v2285 = vrot.slane %v2284, 1
    %v2286 = vadd.f32 %v2284, %v2285
    %v2287 = vsel %vm1802, %v2274, 0.0
    %v2288 = vrot.slane %v2287, 4
    %v2289 = vadd.f32 %v2287, %v2288
    %v2290 = vrot.slane %v2289, 2
    %v2291 = vadd.f32 %v2289, %v2290
    %v2292 = vrot.slane %v2291, 1
    %v2293 = vadd.f32 %v2291, %v2292
    %v2294 = vmul.f32 %v2286, %v1823
    %v2295 = vmul.f32 %v2293, %v1823
    %v2296 = vmul.f32 %v2234, %v2234
    %v2297 = vmul.f32 %v2274, %v2274
    %v2298 = vsel %vm1802, %v2296, 0.0
    %v2299 = vrot.slane %v2298, 4
    %v2300 = vadd.f32 %v2298, %v2299
    %v2301 = vrot.slane %v2300, 2
    %v2302 = vadd.f32 %v2300, %v2301
    %v2303 = vrot.slane %v2302, 1
    %v2304 = vadd.f32 %v2302, %v2303
    %v2305 = vsel %vm1802, %v2297, 0.0
    %v2306 = vrot.slane %v2305, 4
    %v2307 = vadd.f32 %v2305, %v2306
    %v2308 = vrot.slane %v2307, 2
    %v2309 = vadd.f32 %v2307, %v2308
    %v2310 = vrot.slane %v2309, 1
    %v2311 = vadd.f32 %v2309, %v2310
    %v2312 = vmul.f32 %v2304, %v1823
    %v2313 = vmul.f32 %v2311, %v1823
    %v2314 = vmul.f32 %v2294, %v2294
    %v2315 = vmul.f32 %v2295, %v2295
    %v2316 = vsub.f32 %v2312, %v2314
    %v2317 = vsub.f32 %v2313, %v2315
    %v2318 = vsub.f32 %v2234, %v2294
    %v2319 = vsub.f32 %v2274, %v2295
    %v2320 = vadd.f32 %v2316, 1e-05
    %v2321 = vadd.f32 %v2317, 1e-05
    %v2322 = vrsqrt.pop %v2320
    %v2323 = vmul.f32 %v2322, %v2320
    %v2324 = vmul.f32 %v2323, %v2322
    %v2325 = vmul.f32 0.5, %v2324
    %v2326 = vsub.f32 1.5, %v2325
    %v2327 = vmul.f32 %v2322, %v2326
    %vm2328 = vweird.f32 %v2320
    %vm2329 = vweird.f32 %v2322
    %vm2330 = vmor %vm2328, %vm2329
    %v2331 = vsel %vm2330, %v2322, %v2327
    %v2332 = vrsqrt.pop %v2321
    %v2333 = vmul.f32 %v2332, %v2321
    %v2334 = vmul.f32 %v2333, %v2332
    %v2335 = vmul.f32 0.5, %v2334
    %v2336 = vsub.f32 1.5, %v2335
    %v2337 = vmul.f32 %v2332, %v2336
    %vm2338 = vweird.f32 %v2321
    %vm2339 = vweird.f32 %v2332
    %vm2340 = vmor %vm2338, %vm2339
    %v2341 = vsel %vm2340, %v2332, %v2337
    %v2342 = vmul.f32 %v2318, %v2331
    %v2343 = vmul.f32 %v2319, %v2341
    %v2345 = vperm.slane %v2277, 0
    %v2346 = vperm.slane %v2277, 1
    %v2349 = vmul.f32 %v2342, %v2345
    %v2350 = vmul.f32 %v2343, %v2346
    %v2352 = vperm.slane %v2279, 0
    %v2353 = vperm.slane %v2279, 1
    %v2356 = vadd.f32 %v2349, %v2352
    %v2357 = vadd.f32 %v2350, %v2353
    %v2358 = vmax.f32 %v2356, 0.0
    %v2359 = vmax.f32 %v2357, 0.0
    %v2360 = vld [vmem:[#allocation2 + $0x148] sm:$0xff]
    %v2361 = vld [vmem:[#allocation2 + $0x150] sm:$0xff]
    %v2362 = vld [vmem:[#allocation2 + $0x158] sm:$0xff]
    %v2363 = vld [vmem:[#allocation2 + $0x160] sm:$0xff]
    %v2364 = vld [vmem:[#allocation2 + $0x168] sm:$0xff]
    %v2365 = vld [vmem:[#allocation2 + $0x170] sm:$0xff]
    %v2366 = vld [vmem:[#allocation2 + $0x178] sm:$0xff]
    %v2367 = vld [vmem:[#allocation2 + $0x180] sm:$0xff]
    %v2368 = vld [vmem:[#allocation2 + $0x188] sm:$0xff]
    %v2369 = vld [vmem:[#allocation2 + $0x190] sm:$0xff]
    %v2370 = vld [vmem:[#allocation2 + $0x198] sm:$0xff]
    %v2371 = vld [vmem:[#allocation2 + $0x1a0] sm:$0xff]
    %v2372 = vld [vmem:[#allocation2 + $0x1a8] sm:$0xff]
    %v2373 = vld [vmem:[#allocation2 + $0x1b0] sm:$0xff]
    %v2374 = vld [vmem:[#allocation2 + $0x1b8] sm:$0xff]
    %v2375 = vld [vmem:[#allocation2 + $0x1c0] sm:$0xff]
    %v2376 = vld [vmem:[#allocation2 + $0x1c8] sm:$0xff]
    %v2377 = vld [vmem:[#allocation2 + $0x1d0] sm:$0xff]
    %v2378 = vld [vmem:[#allocation2 + $0x1d8] sm:$0xff]
    %v2379 = vld [vmem:[#allocation2 + $0x1e0] sm:$0xff]
    %v2380 = vld [vmem:[#allocation2 + $0x1e8] sm:$0xff]
    %v2381 = vld [vmem:[#allocation2 + $0x1f0] sm:$0xff]
    %v2382 = vld [vmem:[#allocation2 + $0x1f8] sm:$0xff]
    %v2383 = vld [vmem:[#allocation2 + $0x200] sm:$0xff]
    %v2384 = vld [vmem:[#allocation2 + $0x208] sm:$0xff]
    %v2385 = vld [vmem:[#allocation2 + $0x210] sm:$0xff]
    %v2386 = vld [vmem:[#allocation2 + $0x218] sm:$0xff]
    %v2387 = vld [vmem:[#allocation2 + $0x220] sm:$0xff]
    %v2388 = vld [vmem:[#allocation2 + $0x228] sm:$0xff]
    %v2389 = vld [vmem:[#allocation2 + $0x230] sm:$0xff]
    %v2390 = vld [vmem:[#allocation2 + $0x238] sm:$0xff]
    %v2391 = vld [vmem:[#allocation2 + $0x240] sm:$0xff]
    %v2392 = vld [vmem:[#allocation6 + $0x30] ss:$0 sm:$0xff]
    %2393 = vmatpush.msra.mxu0 %v2375
    %2394 = vmatpush.msra.mxu0 %v2374
    %2395 = vmatpush.msra.mxu0 %v2373
    %2396 = vmatpush.msra.mxu0 %v2372
    %2397 = vmatpush.msra.mxu0 %v2371
    %2398 = vmatpush.msra.mxu0 %v2370
    %2399 = vmatpush.msra.mxu0 %v2369
    %2400 = vmatpush.msra.mxu0 %v2368
    %2401 = vmatpush.msra.mxu0 %v2367
    %2402 = vmatpush.msra.mxu0 %v2366
    %2403 = vmatpush.msra.mxu0 %v2365
    %2404 = vmatpush.msra.mxu0 %v2364
    %2405 = vmatpush.msra.mxu0 %v2363
    %2406 = vmatpush.msra.mxu0 %v2362
    %2407 = vmatpush.msra.mxu0 %v2361
    %2408 = vmatpush.msra.mxu0 %v2360
    %2409 = vmatmul.f32.gmra.mxu0 %v2358
    %v2410 = vpop.f32.mrf.mxu0
    %v2411 = vadd.f32 %v2392, %v2410
    %2412 = vdwg.mxu0
    %2413 = vmatpush.msra.mxu0 %v2391
    %2414 = vmatpush.msra.mxu0 %v2390
    %2415 = vmatpush.msra.mxu0 %v2389
    %2416 = vmatpush.msra.mxu0 %v2388
    %2417 = vmatpush.msra.mxu0 %v2387
    %2418 = vmatpush.msra.mxu0 %v2386
    %2419 = vmatpush.msra.mxu0 %v2385
    %2420 = vmatpush.msra.mxu0 %v2384
    %2421 = vmatpush.msra.mxu0 %v2383
    %2422 = vmatpush.msra.mxu0 %v2382
    %2423 = vmatpush.msra.mxu0 %v2381
    %2424 = vmatpush.msra.mxu0 %v2380
    %2425 = vmatpush.msra.mxu0 %v2379
    %2426 = vmatpush.msra.mxu0 %v2378
    %2427 = vmatpush.msra.mxu0 %v2377
    %2428 = vmatpush.msra.mxu0 %v2376
    %2429 = vmatmul.f32.gmra.mxu0 %v2359
    %v2430 = vpop.f32.mrf.mxu0
    %v2431 = vadd.f32 %v2411, %v2430
    %2432 = vdwg.mxu0
    %v2434 = vrot.slane %v2431, 7
    %2435 = vrot.lane.b32.xlu0 %v2434, 120
    %v2436 = vpop.permute.xlu0 %2435
    %v2438 = vrot.slane %v2431, 6
    %2439 = vrot.lane.b32.xlu0 %v2438, 112
    %v2440 = vpop.permute.xlu0 %2439
    %v2442 = vsel %vm1738, %v2431, %v2436
    %v2443 = vsel %vm1802, %v2442, %v2440
    %v2444 = vrot.slane %v2431, 1
    %2446 = vrot.lane.b32.xlu0 %v2431, 120
    %v2447 = vpop.permute.xlu0 %2446
    %2449 = vrot.lane.b32.xlu0 %v2434, 112
    %v2450 = vpop.permute.xlu0 %2449
    %v2452 = vsel %vm1738, %v2444, %v2447
    %v2453 = vsel %vm1802, %v2452, %v2450
    %v2455 = vrot.slane %v2453, 5
    %v2457 = vsel %vm268, %v2443, %v2455
    %vm2458 = vcmask 62464
    %2459 = vst.msk [vmem:[%s4] sm:$0x3f] %vm2458, %v2457
    %v2461 = vsel %vm268, %v2443, 0
    %2463 = vmatpush.msra.mxu0 0.0
    %2464 = vmatpush.msra.mxu0 0.0
    %2465 = vmatpush.msra.mxu0 0.0
    %2466 = vmatpush.msra.mxu0 0.0
    %2467 = vmatpush.msra.mxu0 0.0
    %2468 = vmatpush.msra.mxu0 0.0
    %2469 = vmatpush.msra.mxu0 0.0
    %2470 = vmatpush.msra.mxu0 0.0
    %2471 = vmatpush.msra.mxu0 0.0
    %2472 = vmatpush.msra.mxu0 0.0
    %2473 = vmatpush.msra.mxu0 0.0
    %2474 = vmatpush.msra.mxu0 0.0
    %2475 = vmatpush.msra.mxu0 0.0
    %2476 = vmatpush.msra.mxu0 0.0
    %2477 = vmatpush.msra.mxu0 0.0
    %2478 = vmatpush.msra.mxu0 %v2461
    %2479 = vmatmul.f32.gmra.mxu0 %v221
    %v2480 = vpop.f32.mrf.mxu0
    %v2481 = vadd.f32 0.0, %v2480
    %2482 = vmatmul.f32.gmra.mxu0 %v224
    %v2483 = vpop.f32.mrf.mxu0
    %v2484 = vadd.f32 0.0, %v2483
    %2485 = vmatmul.f32.gmra.mxu0 %v227
    %v2486 = vpop.f32.mrf.mxu0
    %v2487 = vadd.f32 0.0, %v2486
    %2488 = vmatmul.f32.gmra.mxu0 %v230
    %v2489 = vpop.f32.mrf.mxu0
    %v2490 = vadd.f32 0.0, %v2489
    %2491 = vmatmul.f32.gmra.mxu0 %v233
    %v2492 = vpop.f32.mrf.mxu0
    %v2493 = vadd.f32 0.0, %v2492
    %2494 = vmatmul.f32.gmra.mxu0 %v236
    %v2495 = vpop.f32.mrf.mxu0
    %v2496 = vadd.f32 0.0, %v2495
    %2497 = vmatmul.f32.gmra.mxu0 %v239
    %v2498 = vpop.f32.mrf.mxu0
    %v2499 = vadd.f32 0.0, %v2498
    %2500 = vmatmul.f32.gmra.mxu0 %v242
    %v2501 = vpop.f32.mrf.mxu0
    %v2502 = vadd.f32 0.0, %v2501
    %2503 = vdwg.mxu0
    %v2504 = vmul.f32 %v150, %v150
    %v2505 = vmul.f32 %v153, %v153
    %v2506 = vmul.f32 %v156, %v156
    %v2507 = vmul.f32 %v159, %v159
    %v2508 = vmul.f32 %v162, %v162
    %v2509 = vmul.f32 %v165, %v165
    %v2510 = vmul.f32 %v168, %v168
    %v2511 = vmul.f32 %v171, %v171
    %v2512 = vsel %vm219, %v2504, 0.0
    %2513 = vadd.xlane.f32.xlu0 %v2512
    %v2514 = vpop.xlane.xlu0 %2513
    %v2515 = vsel %vm219, %v2505, 0.0
    %2516 = vadd.xlane.f32.xlu0 %v2515
    %v2517 = vpop.xlane.xlu0 %2516
    %v2518 = vsel %vm219, %v2506, 0.0
    %2519 = vadd.xlane.f32.xlu0 %v2518
    %v2520 = vpop.xlane.xlu0 %2519
    %v2521 = vsel %vm219, %v2507, 0.0
    %2522 = vadd.xlane.f32.xlu0 %v2521
    %v2523 = vpop.xlane.xlu0 %2522
    %v2524 = vsel %vm219, %v2508, 0.0
    %2525 = vadd.xlane.f32.xlu0 %v2524
    %v2526 = vpop.xlane.xlu0 %2525
    %v2527 = vsel %vm219, %v2509, 0.0
    %2528 = vadd.xlane.f32.xlu0 %v2527
    %v2529 = vpop.xlane.xlu0 %2528
    %v2530 = vsel %vm219, %v2510, 0.0
    %2531 = vadd.xlane.f32.xlu0 %v2530
    %v2532 = vpop.xlane.xlu0 %2531
    %v2533 = vsel %vm219, %v2511, 0.0
    %2534 = vadd.xlane.f32.xlu0 %v2533
    %v2535 = vpop.xlane.xlu0 %2534
    %v2536 = vmul.f32 %v2443, %v2443
    %vm2537 = vcmask 59392
    %v2538 = vsel %vm2537, %v2536, 0.0
    %v2539 = vrot.slane %v2538, 4
    %v2540 = vadd.f32 %v2538, %v2539
    %v2541 = vrot.slane %v2540, 2
    %v2542 = vadd.f32 %v2540, %v2541
    %v2543 = vrot.slane %v2542, 1
    %v2544 = vadd.f32 %v2542, %v2543
    %v2545 = vmul.f32 %v2481, 2.0
    %v2546 = vmul.f32 %v2484, 2.0
    %v2547 = vmul.f32 %v2487, 2.0
    %v2548 = vmul.f32 %v2490, 2.0
    %v2549 = vmul.f32 %v2493, 2.0
    %v2550 = vmul.f32 %v2496, 2.0
    %v2551 = vmul.f32 %v2499, 2.0
    %v2552 = vmul.f32 %v2502, 2.0
    %v2553 = vsub.f32 %v2514, %v2545
    %v2554 = vsub.f32 %v2517, %v2546
    %v2555 = vsub.f32 %v2520, %v2547
    %v2556 = vsub.f32 %v2523, %v2548
    %v2557 = vsub.f32 %v2526, %v2549
    %v2558 = vsub.f32 %v2529, %v2550
    %v2559 = vsub.f32 %v2532, %v2551
    %v2560 = vsub.f32 %v2535, %v2552
    %v2561 = vadd.f32 %v2553, %v2544
    %v2562 = vadd.f32 %v2554, %v2544
    %v2563 = vadd.f32 %v2555, %v2544
    %v2564 = vadd.f32 %v2556, %v2544
    %v2565 = vadd.f32 %v2557, %v2544
    %v2566 = vadd.f32 %v2558, %v2544
    %v2567 = vadd.f32 %v2559, %v2544
    %v2568 = vadd.f32 %v2560, %v2544
    %vm2569 = vcmask 64512
    %v2570 = vsel %vm2569, %v2561, inf
    %v2571 = vsel %vm2569, %v2562, inf
    %v2572 = vsel %vm2569, %v2563, inf
    %v2573 = vsel %vm2569, %v2564, inf
    %v2574 = vsel %vm2569, %v2565, inf
    %v2575 = vmin.f32 %v2570, %v2574
    %v2576 = vsel %vm2569, %v2566, inf
    %v2577 = vmin.f32 %v2571, %v2576
    %v2578 = vsel %vm2569, %v2567, inf
    %v2579 = vmin.f32 %v2572, %v2578
    %v2580 = vsel %vm2569, %v2568, inf
    %v2581 = vmin.f32 %v2573, %v2580
    %v2582 = vmin.f32 %v2575, %v2577
    %v2583 = vmin.f32 %v2579, %v2581
    %v2584 = vmin.f32 %v2582, %v2583
    %v2585 = vrot.slane %v2584, 4
    %v2586 = vmin.f32 %v2584, %v2585
    %v2587 = vrot.slane %v2586, 2
    %v2588 = vmin.f32 %v2586, %v2587
    %v2589 = vrot.slane %v2588, 1
    %v2590 = vmin.f32 %v2588, %v2589
    %vm2591 = vcmp.le.f32.partialorder %v2561, %v2590
    %vm2592 = vcmp.le.f32.partialorder %v2562, %v2590
    %vm2593 = vcmp.le.f32.partialorder %v2563, %v2590
    %vm2594 = vcmp.le.f32.partialorder %v2564, %v2590
    %vm2595 = vcmp.le.f32.partialorder %v2565, %v2590
    %vm2596 = vcmp.le.f32.partialorder %v2566, %v2590
    %vm2597 = vcmp.le.f32.partialorder %v2567, %v2590
    %vm2598 = vcmp.le.f32.partialorder %v2568, %v2590
    %v2599 = vsel %vm2591, %v67, 64
    %v2600 = vsel %vm2592, %v68, 64
    %v2601 = vsel %vm2593, %v69, 64
    %v2602 = vsel %vm2594, %v70, 64
    %v2603 = vsel %vm2595, %v71, 64
    %v2604 = vsel %vm2596, %v72, 64
    %v2605 = vsel %vm2597, %v73, 64
    %v2606 = vsel %vm2598, %v74, 64
    %v2607 = vsel %vm2569, %v2599, 2147483647
    %v2608 = vsel %vm2569, %v2600, 2147483647
    %v2609 = vsel %vm2569, %v2601, 2147483647
    %v2610 = vsel %vm2569, %v2602, 2147483647
    %v2611 = vsel %vm2569, %v2603, 2147483647
    %vm2612 = vcmp.lt.s32.totalorder %v2607, %v2611
    %v2613 = vsel %vm2612, %v2607, %v2611
    %v2614 = vsel %vm2569, %v2604, 2147483647
    %vm2615 = vcmp.lt.s32.totalorder %v2608, %v2614
    %v2616 = vsel %vm2615, %v2608, %v2614
    %v2617 = vsel %vm2569, %v2605, 2147483647
    %vm2618 = vcmp.lt.s32.totalorder %v2609, %v2617
    %v2619 = vsel %vm2618, %v2609, %v2617
    %v2620 = vsel %vm2569, %v2606, 2147483647
    %vm2621 = vcmp.lt.s32.totalorder %v2610, %v2620
    %v2622 = vsel %vm2621, %v2610, %v2620
    %vm2623 = vcmp.lt.s32.totalorder %v2613, %v2616
    %v2624 = vsel %vm2623, %v2613, %v2616
    %vm2625 = vcmp.lt.s32.totalorder %v2619, %v2622
    %v2626 = vsel %vm2625, %v2619, %v2622
    %vm2627 = vcmp.lt.s32.totalorder %v2624, %v2626
    %v2628 = vsel %vm2627, %v2624, %v2626
    %v2629 = vrot.slane %v2628, 4
    %vm2630 = vcmp.lt.s32.totalorder %v2628, %v2629
    %v2631 = vsel %vm2630, %v2628, %v2629
    %v2632 = vrot.slane %v2631, 2
    %vm2633 = vcmp.lt.s32.totalorder %v2631, %v2632
    %v2634 = vsel %vm2633, %v2631, %v2632
    %v2635 = vrot.slane %v2634, 1
    %vm2636 = vcmp.lt.s32.totalorder %v2634, %v2635
    %v2637 = vsel %vm2636, %v2634, %v2635
    %vm2638 = vcmp.eq.s32.totalorder %v67, %v2637
    %vm2639 = vcmp.eq.s32.totalorder %v68, %v2637
    %vm2640 = vcmp.eq.s32.totalorder %v69, %v2637
    %vm2641 = vcmp.eq.s32.totalorder %v70, %v2637
    %vm2642 = vcmp.eq.s32.totalorder %v71, %v2637
    %vm2643 = vcmp.eq.s32.totalorder %v72, %v2637
    %vm2644 = vcmp.eq.s32.totalorder %v73, %v2637
    %vm2645 = vcmp.eq.s32.totalorder %v74, %v2637
    %v2646 = vsel %vm2638, 1e+30, %v2561
    %v2647 = vsel %vm2639, 1e+30, %v2562
    %v2648 = vsel %vm2640, 1e+30, %v2563
    %v2649 = vsel %vm2641, 1e+30, %v2564
    %v2650 = vsel %vm2642, 1e+30, %v2565
    %v2651 = vsel %vm2643, 1e+30, %v2566
    %v2652 = vsel %vm2644, 1e+30, %v2567
    %v2653 = vsel %vm2645, 1e+30, %v2568
    %v2654 = vsel %vm2569, %v2646, inf
    %v2655 = vsel %vm2569, %v2647, inf
    %v2656 = vsel %vm2569, %v2648, inf
    %v2657 = vsel %vm2569, %v2649, inf
    %v2658 = vsel %vm2569, %v2650, inf
    %v2659 = vmin.f32 %v2654, %v2658
    %v2660 = vsel %vm2569, %v2651, inf
    %v2661 = vmin.f32 %v2655, %v2660
    %v2662 = vsel %vm2569, %v2652, inf
    %v2663 = vmin.f32 %v2656, %v2662
    %v2664 = vsel %vm2569, %v2653, inf
    %v2665 = vmin.f32 %v2657, %v2664
    %v2666 = vmin.f32 %v2659, %v2661
    %v2667 = vmin.f32 %v2663, %v2665
    %v2668 = vmin.f32 %v2666, %v2667
    %v2669 = vrot.slane %v2668, 4
    %v2670 = vmin.f32 %v2668, %v2669
    %v2671 = vrot.slane %v2670, 2
    %v2672 = vmin.f32 %v2670, %v2671
    %v2673 = vrot.slane %v2672, 1
    %v2674 = vmin.f32 %v2672, %v2673
    %vm2675 = vcmp.le.f32.partialorder %v2646, %v2674
    %vm2676 = vcmp.le.f32.partialorder %v2647, %v2674
    %vm2677 = vcmp.le.f32.partialorder %v2648, %v2674
    %vm2678 = vcmp.le.f32.partialorder %v2649, %v2674
    %vm2679 = vcmp.le.f32.partialorder %v2650, %v2674
    %vm2680 = vcmp.le.f32.partialorder %v2651, %v2674
    %vm2681 = vcmp.le.f32.partialorder %v2652, %v2674
    %vm2682 = vcmp.le.f32.partialorder %v2653, %v2674
    %v2683 = vsel %vm2675, %v67, 64
    %v2684 = vsel %vm2676, %v68, 64
    %v2685 = vsel %vm2677, %v69, 64
    %v2686 = vsel %vm2678, %v70, 64
    %v2687 = vsel %vm2679, %v71, 64
    %v2688 = vsel %vm2680, %v72, 64
    %v2689 = vsel %vm2681, %v73, 64
    %v2690 = vsel %vm2682, %v74, 64
    %v2691 = vsel %vm2569, %v2683, 2147483647
    %v2692 = vsel %vm2569, %v2684, 2147483647
    %v2693 = vsel %vm2569, %v2685, 2147483647
    %v2694 = vsel %vm2569, %v2686, 2147483647
    %v2695 = vsel %vm2569, %v2687, 2147483647
    %vm2696 = vcmp.lt.s32.totalorder %v2691, %v2695
    %v2697 = vsel %vm2696, %v2691, %v2695
    %v2698 = vsel %vm2569, %v2688, 2147483647
    %vm2699 = vcmp.lt.s32.totalorder %v2692, %v2698
    %v2700 = vsel %vm2699, %v2692, %v2698
    %v2701 = vsel %vm2569, %v2689, 2147483647
    %vm2702 = vcmp.lt.s32.totalorder %v2693, %v2701
    %v2703 = vsel %vm2702, %v2693, %v2701
    %v2704 = vsel %vm2569, %v2690, 2147483647
    %vm2705 = vcmp.lt.s32.totalorder %v2694, %v2704
    %v2706 = vsel %vm2705, %v2694, %v2704
    %vm2707 = vcmp.lt.s32.totalorder %v2697, %v2700
    %v2708 = vsel %vm2707, %v2697, %v2700
    %vm2709 = vcmp.lt.s32.totalorder %v2703, %v2706
    %v2710 = vsel %vm2709, %v2703, %v2706
    %vm2711 = vcmp.lt.s32.totalorder %v2708, %v2710
    %v2712 = vsel %vm2711, %v2708, %v2710
    %v2713 = vrot.slane %v2712, 4
    %vm2714 = vcmp.lt.s32.totalorder %v2712, %v2713
    %v2715 = vsel %vm2714, %v2712, %v2713
    %v2716 = vrot.slane %v2715, 2
    %vm2717 = vcmp.lt.s32.totalorder %v2715, %v2716
    %v2718 = vsel %vm2717, %v2715, %v2716
    %v2719 = vrot.slane %v2718, 1
    %vm2720 = vcmp.lt.s32.totalorder %v2718, %v2719
    %v2721 = vsel %vm2720, %v2718, %v2719
    %vm2722 = vcmp.eq.s32.totalorder %v67, %v2721
    %vm2723 = vcmp.eq.s32.totalorder %v68, %v2721
    %vm2724 = vcmp.eq.s32.totalorder %v69, %v2721
    %vm2725 = vcmp.eq.s32.totalorder %v70, %v2721
    %vm2726 = vcmp.eq.s32.totalorder %v71, %v2721
    %vm2727 = vcmp.eq.s32.totalorder %v72, %v2721
    %vm2728 = vcmp.eq.s32.totalorder %v73, %v2721
    %vm2729 = vcmp.eq.s32.totalorder %v74, %v2721
    %v2730 = vsel %vm2722, 1e+30, %v2646
    %v2731 = vsel %vm2723, 1e+30, %v2647
    %v2732 = vsel %vm2724, 1e+30, %v2648
    %v2733 = vsel %vm2725, 1e+30, %v2649
    %v2734 = vsel %vm2726, 1e+30, %v2650
    %v2735 = vsel %vm2727, 1e+30, %v2651
    %v2736 = vsel %vm2728, 1e+30, %v2652
    %v2737 = vsel %vm2729, 1e+30, %v2653
    %v2738 = vsel %vm2569, %v2730, inf
    %v2739 = vsel %vm2569, %v2731, inf
    %v2740 = vsel %vm2569, %v2732, inf
    %v2741 = vsel %vm2569, %v2733, inf
    %v2742 = vsel %vm2569, %v2734, inf
    %v2743 = vmin.f32 %v2738, %v2742
    %v2744 = vsel %vm2569, %v2735, inf
    %v2745 = vmin.f32 %v2739, %v2744
    %v2746 = vsel %vm2569, %v2736, inf
    %v2747 = vmin.f32 %v2740, %v2746
    %v2748 = vsel %vm2569, %v2737, inf
    %v2749 = vmin.f32 %v2741, %v2748
    %v2750 = vmin.f32 %v2743, %v2745
    %v2751 = vmin.f32 %v2747, %v2749
    %v2752 = vmin.f32 %v2750, %v2751
    %v2753 = vrot.slane %v2752, 4
    %v2754 = vmin.f32 %v2752, %v2753
    %v2755 = vrot.slane %v2754, 2
    %v2756 = vmin.f32 %v2754, %v2755
    %v2757 = vrot.slane %v2756, 1
    %v2758 = vmin.f32 %v2756, %v2757
    %vm2759 = vcmp.le.f32.partialorder %v2730, %v2758
    %vm2760 = vcmp.le.f32.partialorder %v2731, %v2758
    %vm2761 = vcmp.le.f32.partialorder %v2732, %v2758
    %vm2762 = vcmp.le.f32.partialorder %v2733, %v2758
    %vm2763 = vcmp.le.f32.partialorder %v2734, %v2758
    %vm2764 = vcmp.le.f32.partialorder %v2735, %v2758
    %vm2765 = vcmp.le.f32.partialorder %v2736, %v2758
    %vm2766 = vcmp.le.f32.partialorder %v2737, %v2758
    %v2767 = vsel %vm2759, %v67, 64
    %v2768 = vsel %vm2760, %v68, 64
    %v2769 = vsel %vm2761, %v69, 64
    %v2770 = vsel %vm2762, %v70, 64
    %v2771 = vsel %vm2763, %v71, 64
    %v2772 = vsel %vm2764, %v72, 64
    %v2773 = vsel %vm2765, %v73, 64
    %v2774 = vsel %vm2766, %v74, 64
    %v2775 = vsel %vm2569, %v2767, 2147483647
    %v2776 = vsel %vm2569, %v2768, 2147483647
    %v2777 = vsel %vm2569, %v2769, 2147483647
    %v2778 = vsel %vm2569, %v2770, 2147483647
    %v2779 = vsel %vm2569, %v2771, 2147483647
    %vm2780 = vcmp.lt.s32.totalorder %v2775, %v2779
    %v2781 = vsel %vm2780, %v2775, %v2779
    %v2782 = vsel %vm2569, %v2772, 2147483647
    %vm2783 = vcmp.lt.s32.totalorder %v2776, %v2782
    %v2784 = vsel %vm2783, %v2776, %v2782
    %v2785 = vsel %vm2569, %v2773, 2147483647
    %vm2786 = vcmp.lt.s32.totalorder %v2777, %v2785
    %v2787 = vsel %vm2786, %v2777, %v2785
    %v2788 = vsel %vm2569, %v2774, 2147483647
    %vm2789 = vcmp.lt.s32.totalorder %v2778, %v2788
    %v2790 = vsel %vm2789, %v2778, %v2788
    %vm2791 = vcmp.lt.s32.totalorder %v2781, %v2784
    %v2792 = vsel %vm2791, %v2781, %v2784
    %vm2793 = vcmp.lt.s32.totalorder %v2787, %v2790
    %v2794 = vsel %vm2793, %v2787, %v2790
    %vm2795 = vcmp.lt.s32.totalorder %v2792, %v2794
    %v2796 = vsel %vm2795, %v2792, %v2794
    %v2797 = vrot.slane %v2796, 4
    %vm2798 = vcmp.lt.s32.totalorder %v2796, %v2797
    %v2799 = vsel %vm2798, %v2796, %v2797
    %v2800 = vrot.slane %v2799, 2
    %vm2801 = vcmp.lt.s32.totalorder %v2799, %v2800
    %v2802 = vsel %vm2801, %v2799, %v2800
    %v2803 = vrot.slane %v2802, 1
    %vm2804 = vcmp.lt.s32.totalorder %v2802, %v2803
    %v2805 = vsel %vm2804, %v2802, %v2803
    %vm2806 = vcmp.eq.s32.totalorder %v67, %v2805
    %vm2807 = vcmp.eq.s32.totalorder %v68, %v2805
    %vm2808 = vcmp.eq.s32.totalorder %v69, %v2805
    %vm2809 = vcmp.eq.s32.totalorder %v70, %v2805
    %vm2810 = vcmp.eq.s32.totalorder %v71, %v2805
    %vm2811 = vcmp.eq.s32.totalorder %v72, %v2805
    %vm2812 = vcmp.eq.s32.totalorder %v73, %v2805
    %vm2813 = vcmp.eq.s32.totalorder %v74, %v2805
    %v2814 = vsel %vm2806, 1e+30, %v2730
    %v2815 = vsel %vm2807, 1e+30, %v2731
    %v2816 = vsel %vm2808, 1e+30, %v2732
    %v2817 = vsel %vm2809, 1e+30, %v2733
    %v2818 = vsel %vm2810, 1e+30, %v2734
    %v2819 = vsel %vm2811, 1e+30, %v2735
    %v2820 = vsel %vm2812, 1e+30, %v2736
    %v2821 = vsel %vm2813, 1e+30, %v2737
    %v2822 = vsel %vm2569, %v2814, inf
    %v2823 = vsel %vm2569, %v2815, inf
    %v2824 = vsel %vm2569, %v2816, inf
    %v2825 = vsel %vm2569, %v2817, inf
    %v2826 = vsel %vm2569, %v2818, inf
    %v2827 = vmin.f32 %v2822, %v2826
    %v2828 = vsel %vm2569, %v2819, inf
    %v2829 = vmin.f32 %v2823, %v2828
    %v2830 = vsel %vm2569, %v2820, inf
    %v2831 = vmin.f32 %v2824, %v2830
    %v2832 = vsel %vm2569, %v2821, inf
    %v2833 = vmin.f32 %v2825, %v2832
    %v2834 = vmin.f32 %v2827, %v2829
    %v2835 = vmin.f32 %v2831, %v2833
    %v2836 = vmin.f32 %v2834, %v2835
    %v2837 = vrot.slane %v2836, 4
    %v2838 = vmin.f32 %v2836, %v2837
    %v2839 = vrot.slane %v2838, 2
    %v2840 = vmin.f32 %v2838, %v2839
    %v2841 = vrot.slane %v2840, 1
    %v2842 = vmin.f32 %v2840, %v2841
    %vm2843 = vcmp.le.f32.partialorder %v2814, %v2842
    %vm2844 = vcmp.le.f32.partialorder %v2815, %v2842
    %vm2845 = vcmp.le.f32.partialorder %v2816, %v2842
    %vm2846 = vcmp.le.f32.partialorder %v2817, %v2842
    %vm2847 = vcmp.le.f32.partialorder %v2818, %v2842
    %vm2848 = vcmp.le.f32.partialorder %v2819, %v2842
    %vm2849 = vcmp.le.f32.partialorder %v2820, %v2842
    %vm2850 = vcmp.le.f32.partialorder %v2821, %v2842
    %v2851 = vsel %vm2843, %v67, 64
    %v2852 = vsel %vm2844, %v68, 64
    %v2853 = vsel %vm2845, %v69, 64
    %v2854 = vsel %vm2846, %v70, 64
    %v2855 = vsel %vm2847, %v71, 64
    %v2856 = vsel %vm2848, %v72, 64
    %v2857 = vsel %vm2849, %v73, 64
    %v2858 = vsel %vm2850, %v74, 64
    %v2859 = vsel %vm2569, %v2851, 2147483647
    %v2860 = vsel %vm2569, %v2852, 2147483647
    %v2861 = vsel %vm2569, %v2853, 2147483647
    %v2862 = vsel %vm2569, %v2854, 2147483647
    %v2863 = vsel %vm2569, %v2855, 2147483647
    %vm2864 = vcmp.lt.s32.totalorder %v2859, %v2863
    %v2865 = vsel %vm2864, %v2859, %v2863
    %v2866 = vsel %vm2569, %v2856, 2147483647
    %vm2867 = vcmp.lt.s32.totalorder %v2860, %v2866
    %v2868 = vsel %vm2867, %v2860, %v2866
    %v2869 = vsel %vm2569, %v2857, 2147483647
    %vm2870 = vcmp.lt.s32.totalorder %v2861, %v2869
    %v2871 = vsel %vm2870, %v2861, %v2869
    %v2872 = vsel %vm2569, %v2858, 2147483647
    %vm2873 = vcmp.lt.s32.totalorder %v2862, %v2872
    %v2874 = vsel %vm2873, %v2862, %v2872
    %vm2875 = vcmp.lt.s32.totalorder %v2865, %v2868
    %v2876 = vsel %vm2875, %v2865, %v2868
    %vm2877 = vcmp.lt.s32.totalorder %v2871, %v2874
    %v2878 = vsel %vm2877, %v2871, %v2874
    %vm2879 = vcmp.lt.s32.totalorder %v2876, %v2878
    %v2880 = vsel %vm2879, %v2876, %v2878
    %v2881 = vrot.slane %v2880, 4
    %vm2882 = vcmp.lt.s32.totalorder %v2880, %v2881
    %v2883 = vsel %vm2882, %v2880, %v2881
    %v2884 = vrot.slane %v2883, 2
    %vm2885 = vcmp.lt.s32.totalorder %v2883, %v2884
    %v2886 = vsel %vm2885, %v2883, %v2884
    %v2887 = vrot.slane %v2886, 1
    %vm2888 = vcmp.lt.s32.totalorder %v2886, %v2887
    %v2889 = vsel %vm2888, %v2886, %v2887
    %vm2890 = vcmp.eq.s32.totalorder %v67, %v2889
    %vm2891 = vcmp.eq.s32.totalorder %v68, %v2889
    %vm2892 = vcmp.eq.s32.totalorder %v69, %v2889
    %vm2893 = vcmp.eq.s32.totalorder %v70, %v2889
    %vm2894 = vcmp.eq.s32.totalorder %v71, %v2889
    %vm2895 = vcmp.eq.s32.totalorder %v72, %v2889
    %vm2896 = vcmp.eq.s32.totalorder %v73, %v2889
    %vm2897 = vcmp.eq.s32.totalorder %v74, %v2889
    %v2898 = vsub.f32 %v2590, %v2590
    %v2899 = vmul.f32 %v2898, 1.442695
    %v2900 = vpow.pop %v2899
    %v2901 = vsel %vm2638, %v2900, 0.0
    %v2902 = vsel %vm2639, %v2900, 0.0
    %v2903 = vsel %vm2640, %v2900, 0.0
    %v2904 = vsel %vm2641, %v2900, 0.0
    %v2905 = vsel %vm2642, %v2900, 0.0
    %v2906 = vsel %vm2643, %v2900, 0.0
    %v2907 = vsel %vm2644, %v2900, 0.0
    %v2908 = vsel %vm2645, %v2900, 0.0
    %v2909 = vadd.f32 %v2901, 0.0
    %v2910 = vadd.f32 %v2902, 0.0
    %v2911 = vadd.f32 %v2903, 0.0
    %v2912 = vadd.f32 %v2904, 0.0
    %v2913 = vadd.f32 %v2905, 0.0
    %v2914 = vadd.f32 %v2906, 0.0
    %v2915 = vadd.f32 %v2907, 0.0
    %v2916 = vadd.f32 %v2908, 0.0
    %v2917 = vsub.f32 %v2590, %v2674
    %v2918 = vmul.f32 %v2917, 1.442695
    %v2919 = vpow.pop %v2918
    %v2920 = vsel %vm2722, %v2919, 0.0
    %v2921 = vsel %vm2723, %v2919, 0.0
    %v2922 = vsel %vm2724, %v2919, 0.0
    %v2923 = vsel %vm2725, %v2919, 0.0
    %v2924 = vsel %vm2726, %v2919, 0.0
    %v2925 = vsel %vm2727, %v2919, 0.0
    %v2926 = vsel %vm2728, %v2919, 0.0
    %v2927 = vsel %vm2729, %v2919, 0.0
    %v2928 = vadd.f32 %v2909, %v2920
    %v2929 = vadd.f32 %v2910, %v2921
    %v2930 = vadd.f32 %v2911, %v2922
    %v2931 = vadd.f32 %v2912, %v2923
    %v2932 = vadd.f32 %v2913, %v2924
    %v2933 = vadd.f32 %v2914, %v2925
    %v2934 = vadd.f32 %v2915, %v2926
    %v2935 = vadd.f32 %v2916, %v2927
    %v2936 = vsub.f32 %v2590, %v2758
    %v2937 = vmul.f32 %v2936, 1.442695
    %v2938 = vpow.pop %v2937
    %v2939 = vsel %vm2806, %v2938, 0.0
    %v2940 = vsel %vm2807, %v2938, 0.0
    %v2941 = vsel %vm2808, %v2938, 0.0
    %v2942 = vsel %vm2809, %v2938, 0.0
    %v2943 = vsel %vm2810, %v2938, 0.0
    %v2944 = vsel %vm2811, %v2938, 0.0
    %v2945 = vsel %vm2812, %v2938, 0.0
    %v2946 = vsel %vm2813, %v2938, 0.0
    %v2947 = vadd.f32 %v2928, %v2939
    %v2948 = vadd.f32 %v2929, %v2940
    %v2949 = vadd.f32 %v2930, %v2941
    %v2950 = vadd.f32 %v2931, %v2942
    %v2951 = vadd.f32 %v2932, %v2943
    %v2952 = vadd.f32 %v2933, %v2944
    %v2953 = vadd.f32 %v2934, %v2945
    %v2954 = vadd.f32 %v2935, %v2946
    %v2955 = vsub.f32 %v2590, %v2842
    %v2956 = vmul.f32 %v2955, 1.442695
    %v2957 = vpow.pop %v2956
    %v2958 = vsel %vm2890, %v2957, 0.0
    %v2959 = vsel %vm2891, %v2957, 0.0
    %v2960 = vsel %vm2892, %v2957, 0.0
    %v2961 = vsel %vm2893, %v2957, 0.0
    %v2962 = vsel %vm2894, %v2957, 0.0
    %v2963 = vsel %vm2895, %v2957, 0.0
    %v2964 = vsel %vm2896, %v2957, 0.0
    %v2965 = vsel %vm2897, %v2957, 0.0
    %v2966 = vadd.f32 %v2947, %v2958
    %v2967 = vadd.f32 %v2948, %v2959
    %v2968 = vadd.f32 %v2949, %v2960
    %v2969 = vadd.f32 %v2950, %v2961
    %v2970 = vadd.f32 %v2951, %v2962
    %v2971 = vadd.f32 %v2952, %v2963
    %v2972 = vadd.f32 %v2953, %v2964
    %v2973 = vadd.f32 %v2954, %v2965
    %2974 = vmatpush.msra.mxu0 0.0
    %2975 = vmatpush.msra.mxu0 0.0
    %2976 = vmatpush.msra.mxu0 0.0
    %2977 = vmatpush.msra.mxu0 0.0
    %2978 = vmatpush.msra.mxu0 0.0
    %2979 = vmatpush.msra.mxu0 0.0
    %2980 = vmatpush.msra.mxu0 0.0
    %2981 = vmatpush.msra.mxu0 0.0
    %2982 = vmatpush.msra.mxu0 %v2973
    %2983 = vmatpush.msra.mxu0 %v2972
    %2984 = vmatpush.msra.mxu0 %v2971
    %2985 = vmatpush.msra.mxu0 %v2970
    %2986 = vmatpush.msra.mxu0 %v2969
    %2987 = vmatpush.msra.mxu0 %v2968
    %2988 = vmatpush.msra.mxu0 %v2967
    %2989 = vmatpush.msra.mxu0 %v2966
    %2990 = vmatmul.f32.gmra.mxu0 %v130
    %v2991 = vpop.f32.mrf.mxu0
    %v2992 = vadd.f32 0.0, %v2991
    %2993 = vdwg.mxu0
    %v2994 = vsel %vm2569, %v2966, 0.0
    %v2995 = vsel %vm2569, %v2967, 0.0
    %v2996 = vadd.f32 %v2994, %v2995
    %v2997 = vsel %vm2569, %v2968, 0.0
    %v2998 = vadd.f32 %v2996, %v2997
    %v2999 = vsel %vm2569, %v2969, 0.0
    %v3000 = vadd.f32 %v2998, %v2999
    %v3001 = vsel %vm2569, %v2970, 0.0
    %v3002 = vadd.f32 %v3000, %v3001
    %v3003 = vsel %vm2569, %v2971, 0.0
    %v3004 = vadd.f32 %v3002, %v3003
    %v3005 = vsel %vm2569, %v2972, 0.0
    %v3006 = vadd.f32 %v3004, %v3005
    %v3007 = vsel %vm2569, %v2973, 0.0
    %v3008 = vadd.f32 %v3006, %v3007
    %v3009 = vrot.slane %v3008, 4
    %v3010 = vadd.f32 %v3008, %v3009
    %v3011 = vrot.slane %v3010, 2
    %v3012 = vadd.f32 %v3010, %v3011
    %v3013 = vrot.slane %v3012, 1
    %v3014 = vadd.f32 %v3012, %v3013
    %v3015 = vrcp.pop %v3014
    %v3016 = vmul.f32 %v3014, %v3015
    %v3017 = vsub.f32 1.0, %v3016
    %v3018 = vmul.f32 %v3015, %v3017
    %v3019 = vadd.f32 %v3015, %v3018
    %vm3020 = vweird.f32 %v3014
    %vm3021 = vweird.f32 %v3015
    %vm3022 = vmor %vm3020, %vm3021
    %v3023 = vsel %vm3022, %v3015, %v3019
    %v3024 = vand.u32 2147483647, %v3014
    %vm3025 = vcmp.eq.f32.partialorder %v3024, 8.507059e+37
    %v3026 = vand.u32 %v3014, 2147483648
    %v3027 = vor.u32 1.1754944e-38, %v3026
    %v3028 = vsel %vm3025, %v3027, %v3023
    %v3029 = vmul.f32 %v2992, %v3028
    %v3030 = vsel %vm268, %v2453, 0
    %3032 = vmatpush.msra.mxu0 0.0
    %3033 = vmatpush.msra.mxu0 0.0
    %3034 = vmatpush.msra.mxu0 0.0
    %3035 = vmatpush.msra.mxu0 0.0
    %3036 = vmatpush.msra.mxu0 0.0
    %3037 = vmatpush.msra.mxu0 0.0
    %3038 = vmatpush.msra.mxu0 0.0
    %3039 = vmatpush.msra.mxu0 0.0
    %3040 = vmatpush.msra.mxu0 0.0
    %3041 = vmatpush.msra.mxu0 0.0
    %3042 = vmatpush.msra.mxu0 0.0
    %3043 = vmatpush.msra.mxu0 0.0
    %3044 = vmatpush.msra.mxu0 0.0
    %3045 = vmatpush.msra.mxu0 0.0
    %3046 = vmatpush.msra.mxu0 0.0
    %3047 = vmatpush.msra.mxu0 %v3030
    %3048 = vmatmul.f32.gmra.mxu0 %v245
    %v3049 = vpop.f32.mrf.mxu0
    %v3050 = vadd.f32 0.0, %v3049
    %3051 = vmatmul.f32.gmra.mxu0 %v248
    %v3052 = vpop.f32.mrf.mxu0
    %v3053 = vadd.f32 0.0, %v3052
    %3054 = vmatmul.f32.gmra.mxu0 %v251
    %v3055 = vpop.f32.mrf.mxu0
    %v3056 = vadd.f32 0.0, %v3055
    %3057 = vmatmul.f32.gmra.mxu0 %v254
    %v3058 = vpop.f32.mrf.mxu0
    %v3059 = vadd.f32 0.0, %v3058
    %3060 = vmatmul.f32.gmra.mxu0 %v257
    %v3061 = vpop.f32.mrf.mxu0
    %v3062 = vadd.f32 0.0, %v3061
    %3063 = vmatmul.f32.gmra.mxu0 %v260
    %v3064 = vpop.f32.mrf.mxu0
    %v3065 = vadd.f32 0.0, %v3064
    %3066 = vmatmul.f32.gmra.mxu0 %v263
    %v3067 = vpop.f32.mrf.mxu0
    %v3068 = vadd.f32 0.0, %v3067
    %3069 = vmatmul.f32.gmra.mxu0 %v266
    %v3070 = vpop.f32.mrf.mxu0
    %v3071 = vadd.f32 0.0, %v3070
    %3072 = vdwg.mxu0
    %v3073 = vmul.f32 %v194, %v194
    %v3074 = vmul.f32 %v197, %v197
    %v3075 = vmul.f32 %v200, %v200
    %v3076 = vmul.f32 %v203, %v203
    %v3077 = vmul.f32 %v206, %v206
    %v3078 = vmul.f32 %v209, %v209
    %v3079 = vmul.f32 %v212, %v212
    %v3080 = vmul.f32 %v215, %v215
    %v3081 = vsel %vm219, %v3073, 0.0
    %3082 = vadd.xlane.f32.xlu0 %v3081
    %v3083 = vpop.xlane.xlu0 %3082
    %v3084 = vsel %vm219, %v3074, 0.0
    %3085 = vadd.xlane.f32.xlu0 %v3084
    %v3086 = vpop.xlane.xlu0 %3085
    %v3087 = vsel %vm219, %v3075, 0.0
    %3088 = vadd.xlane.f32.xlu0 %v3087
    %v3089 = vpop.xlane.xlu0 %3088
    %v3090 = vsel %vm219, %v3076, 0.0
    %3091 = vadd.xlane.f32.xlu0 %v3090
    %v3092 = vpop.xlane.xlu0 %3091
    %v3093 = vsel %vm219, %v3077, 0.0
    %3094 = vadd.xlane.f32.xlu0 %v3093
    %v3095 = vpop.xlane.xlu0 %3094
    %v3096 = vsel %vm219, %v3078, 0.0
    %3097 = vadd.xlane.f32.xlu0 %v3096
    %v3098 = vpop.xlane.xlu0 %3097
    %v3099 = vsel %vm219, %v3079, 0.0
    %3100 = vadd.xlane.f32.xlu0 %v3099
    %v3101 = vpop.xlane.xlu0 %3100
    %v3102 = vsel %vm219, %v3080, 0.0
    %3103 = vadd.xlane.f32.xlu0 %v3102
    %v3104 = vpop.xlane.xlu0 %3103
    %v3105 = vmul.f32 %v2453, %v2453
    %v3106 = vsel %vm2537, %v3105, 0.0
    %v3107 = vrot.slane %v3106, 4
    %v3108 = vadd.f32 %v3106, %v3107
    %v3109 = vrot.slane %v3108, 2
    %v3110 = vadd.f32 %v3108, %v3109
    %v3111 = vrot.slane %v3110, 1
    %v3112 = vadd.f32 %v3110, %v3111
    %v3113 = vmul.f32 %v3050, 2.0
    %v3114 = vmul.f32 %v3053, 2.0
    %v3115 = vmul.f32 %v3056, 2.0
    %v3116 = vmul.f32 %v3059, 2.0
    %v3117 = vmul.f32 %v3062, 2.0
    %v3118 = vmul.f32 %v3065, 2.0
    %v3119 = vmul.f32 %v3068, 2.0
    %v3120 = vmul.f32 %v3071, 2.0
    %v3121 = vsub.f32 %v3083, %v3113
    %v3122 = vsub.f32 %v3086, %v3114
    %v3123 = vsub.f32 %v3089, %v3115
    %v3124 = vsub.f32 %v3092, %v3116
    %v3125 = vsub.f32 %v3095, %v3117
    %v3126 = vsub.f32 %v3098, %v3118
    %v3127 = vsub.f32 %v3101, %v3119
    %v3128 = vsub.f32 %v3104, %v3120
    %v3129 = vadd.f32 %v3121, %v3112
    %v3130 = vadd.f32 %v3122, %v3112
    %v3131 = vadd.f32 %v3123, %v3112
    %v3132 = vadd.f32 %v3124, %v3112
    %v3133 = vadd.f32 %v3125, %v3112
    %v3134 = vadd.f32 %v3126, %v3112
    %v3135 = vadd.f32 %v3127, %v3112
    %v3136 = vadd.f32 %v3128, %v3112
    %v3137 = vsel %vm2569, %v3129, inf
    %v3138 = vsel %vm2569, %v3130, inf
    %v3139 = vsel %vm2569, %v3131, inf
    %v3140 = vsel %vm2569, %v3132, inf
    %v3141 = vsel %vm2569, %v3133, inf
    %v3142 = vmin.f32 %v3137, %v3141
    %v3143 = vsel %vm2569, %v3134, inf
    %v3144 = vmin.f32 %v3138, %v3143
    %v3145 = vsel %vm2569, %v3135, inf
    %v3146 = vmin.f32 %v3139, %v3145
    %v3147 = vsel %vm2569, %v3136, inf
    %v3148 = vmin.f32 %v3140, %v3147
    %v3149 = vmin.f32 %v3142, %v3144
    %v3150 = vmin.f32 %v3146, %v3148
    %v3151 = vmin.f32 %v3149, %v3150
    %v3152 = vrot.slane %v3151, 4
    %v3153 = vmin.f32 %v3151, %v3152
    %v3154 = vrot.slane %v3153, 2
    %v3155 = vmin.f32 %v3153, %v3154
    %v3156 = vrot.slane %v3155, 1
    %v3157 = vmin.f32 %v3155, %v3156
    %vm3158 = vcmp.le.f32.partialorder %v3129, %v3157
    %vm3159 = vcmp.le.f32.partialorder %v3130, %v3157
    %vm3160 = vcmp.le.f32.partialorder %v3131, %v3157
    %vm3161 = vcmp.le.f32.partialorder %v3132, %v3157
    %vm3162 = vcmp.le.f32.partialorder %v3133, %v3157
    %vm3163 = vcmp.le.f32.partialorder %v3134, %v3157
    %vm3164 = vcmp.le.f32.partialorder %v3135, %v3157
    %vm3165 = vcmp.le.f32.partialorder %v3136, %v3157
    %v3166 = vsel %vm3158, %v67, 64
    %v3167 = vsel %vm3159, %v68, 64
    %v3168 = vsel %vm3160, %v69, 64
    %v3169 = vsel %vm3161, %v70, 64
    %v3170 = vsel %vm3162, %v71, 64
    %v3171 = vsel %vm3163, %v72, 64
    %v3172 = vsel %vm3164, %v73, 64
    %v3173 = vsel %vm3165, %v74, 64
    %v3174 = vsel %vm2569, %v3166, 2147483647
    %v3175 = vsel %vm2569, %v3167, 2147483647
    %v3176 = vsel %vm2569, %v3168, 2147483647
    %v3177 = vsel %vm2569, %v3169, 2147483647
    %v3178 = vsel %vm2569, %v3170, 2147483647
    %vm3179 = vcmp.lt.s32.totalorder %v3174, %v3178
    %v3180 = vsel %vm3179, %v3174, %v3178
    %v3181 = vsel %vm2569, %v3171, 2147483647
    %vm3182 = vcmp.lt.s32.totalorder %v3175, %v3181
    %v3183 = vsel %vm3182, %v3175, %v3181
    %v3184 = vsel %vm2569, %v3172, 2147483647
    %vm3185 = vcmp.lt.s32.totalorder %v3176, %v3184
    %v3186 = vsel %vm3185, %v3176, %v3184
    %v3187 = vsel %vm2569, %v3173, 2147483647
    %vm3188 = vcmp.lt.s32.totalorder %v3177, %v3187
    %v3189 = vsel %vm3188, %v3177, %v3187
    %vm3190 = vcmp.lt.s32.totalorder %v3180, %v3183
    %v3191 = vsel %vm3190, %v3180, %v3183
    %vm3192 = vcmp.lt.s32.totalorder %v3186, %v3189
    %v3193 = vsel %vm3192, %v3186, %v3189
    %vm3194 = vcmp.lt.s32.totalorder %v3191, %v3193
    %v3195 = vsel %vm3194, %v3191, %v3193
    %v3196 = vrot.slane %v3195, 4
    %vm3197 = vcmp.lt.s32.totalorder %v3195, %v3196
    %v3198 = vsel %vm3197, %v3195, %v3196
    %v3199 = vrot.slane %v3198, 2
    %vm3200 = vcmp.lt.s32.totalorder %v3198, %v3199
    %v3201 = vsel %vm3200, %v3198, %v3199
    %v3202 = vrot.slane %v3201, 1
    %vm3203 = vcmp.lt.s32.totalorder %v3201, %v3202
    %v3204 = vsel %vm3203, %v3201, %v3202
    %vm3205 = vcmp.eq.s32.totalorder %v67, %v3204
    %vm3206 = vcmp.eq.s32.totalorder %v68, %v3204
    %vm3207 = vcmp.eq.s32.totalorder %v69, %v3204
    %vm3208 = vcmp.eq.s32.totalorder %v70, %v3204
    %vm3209 = vcmp.eq.s32.totalorder %v71, %v3204
    %vm3210 = vcmp.eq.s32.totalorder %v72, %v3204
    %vm3211 = vcmp.eq.s32.totalorder %v73, %v3204
    %vm3212 = vcmp.eq.s32.totalorder %v74, %v3204
    %v3213 = vsel %vm3205, 1e+30, %v3129
    %v3214 = vsel %vm3206, 1e+30, %v3130
    %v3215 = vsel %vm3207, 1e+30, %v3131
    %v3216 = vsel %vm3208, 1e+30, %v3132
    %v3217 = vsel %vm3209, 1e+30, %v3133
    %v3218 = vsel %vm3210, 1e+30, %v3134
    %v3219 = vsel %vm3211, 1e+30, %v3135
    %v3220 = vsel %vm3212, 1e+30, %v3136
    %v3221 = vsel %vm2569, %v3213, inf
    %v3222 = vsel %vm2569, %v3214, inf
    %v3223 = vsel %vm2569, %v3215, inf
    %v3224 = vsel %vm2569, %v3216, inf
    %v3225 = vsel %vm2569, %v3217, inf
    %v3226 = vmin.f32 %v3221, %v3225
    %v3227 = vsel %vm2569, %v3218, inf
    %v3228 = vmin.f32 %v3222, %v3227
    %v3229 = vsel %vm2569, %v3219, inf
    %v3230 = vmin.f32 %v3223, %v3229
    %v3231 = vsel %vm2569, %v3220, inf
    %v3232 = vmin.f32 %v3224, %v3231
    %v3233 = vmin.f32 %v3226, %v3228
    %v3234 = vmin.f32 %v3230, %v3232
    %v3235 = vmin.f32 %v3233, %v3234
    %v3236 = vrot.slane %v3235, 4
    %v3237 = vmin.f32 %v3235, %v3236
    %v3238 = vrot.slane %v3237, 2
    %v3239 = vmin.f32 %v3237, %v3238
    %v3240 = vrot.slane %v3239, 1
    %v3241 = vmin.f32 %v3239, %v3240
    %vm3242 = vcmp.le.f32.partialorder %v3213, %v3241
    %vm3243 = vcmp.le.f32.partialorder %v3214, %v3241
    %vm3244 = vcmp.le.f32.partialorder %v3215, %v3241
    %vm3245 = vcmp.le.f32.partialorder %v3216, %v3241
    %vm3246 = vcmp.le.f32.partialorder %v3217, %v3241
    %vm3247 = vcmp.le.f32.partialorder %v3218, %v3241
    %vm3248 = vcmp.le.f32.partialorder %v3219, %v3241
    %vm3249 = vcmp.le.f32.partialorder %v3220, %v3241
    %v3250 = vsel %vm3242, %v67, 64
    %v3251 = vsel %vm3243, %v68, 64
    %v3252 = vsel %vm3244, %v69, 64
    %v3253 = vsel %vm3245, %v70, 64
    %v3254 = vsel %vm3246, %v71, 64
    %v3255 = vsel %vm3247, %v72, 64
    %v3256 = vsel %vm3248, %v73, 64
    %v3257 = vsel %vm3249, %v74, 64
    %v3258 = vsel %vm2569, %v3250, 2147483647
    %v3259 = vsel %vm2569, %v3251, 2147483647
    %v3260 = vsel %vm2569, %v3252, 2147483647
    %v3261 = vsel %vm2569, %v3253, 2147483647
    %v3262 = vsel %vm2569, %v3254, 2147483647
    %vm3263 = vcmp.lt.s32.totalorder %v3258, %v3262
    %v3264 = vsel %vm3263, %v3258, %v3262
    %v3265 = vsel %vm2569, %v3255, 2147483647
    %vm3266 = vcmp.lt.s32.totalorder %v3259, %v3265
    %v3267 = vsel %vm3266, %v3259, %v3265
    %v3268 = vsel %vm2569, %v3256, 2147483647
    %vm3269 = vcmp.lt.s32.totalorder %v3260, %v3268
    %v3270 = vsel %vm3269, %v3260, %v3268
    %v3271 = vsel %vm2569, %v3257, 2147483647
    %vm3272 = vcmp.lt.s32.totalorder %v3261, %v3271
    %v3273 = vsel %vm3272, %v3261, %v3271
    %vm3274 = vcmp.lt.s32.totalorder %v3264, %v3267
    %v3275 = vsel %vm3274, %v3264, %v3267
    %vm3276 = vcmp.lt.s32.totalorder %v3270, %v3273
    %v3277 = vsel %vm3276, %v3270, %v3273
    %vm3278 = vcmp.lt.s32.totalorder %v3275, %v3277
    %v3279 = vsel %vm3278, %v3275, %v3277
    %v3280 = vrot.slane %v3279, 4
    %vm3281 = vcmp.lt.s32.totalorder %v3279, %v3280
    %v3282 = vsel %vm3281, %v3279, %v3280
    %v3283 = vrot.slane %v3282, 2
    %vm3284 = vcmp.lt.s32.totalorder %v3282, %v3283
    %v3285 = vsel %vm3284, %v3282, %v3283
    %v3286 = vrot.slane %v3285, 1
    %vm3287 = vcmp.lt.s32.totalorder %v3285, %v3286
    %v3288 = vsel %vm3287, %v3285, %v3286
    %vm3289 = vcmp.eq.s32.totalorder %v67, %v3288
    %vm3290 = vcmp.eq.s32.totalorder %v68, %v3288
    %vm3291 = vcmp.eq.s32.totalorder %v69, %v3288
    %vm3292 = vcmp.eq.s32.totalorder %v70, %v3288
    %vm3293 = vcmp.eq.s32.totalorder %v71, %v3288
    %vm3294 = vcmp.eq.s32.totalorder %v72, %v3288
    %vm3295 = vcmp.eq.s32.totalorder %v73, %v3288
    %vm3296 = vcmp.eq.s32.totalorder %v74, %v3288
    %v3297 = vsel %vm3289, 1e+30, %v3213
    %v3298 = vsel %vm3290, 1e+30, %v3214
    %v3299 = vsel %vm3291, 1e+30, %v3215
    %v3300 = vsel %vm3292, 1e+30, %v3216
    %v3301 = vsel %vm3293, 1e+30, %v3217
    %v3302 = vsel %vm3294, 1e+30, %v3218
    %v3303 = vsel %vm3295, 1e+30, %v3219
    %v3304 = vsel %vm3296, 1e+30, %v3220
    %v3305 = vsel %vm2569, %v3297, inf
    %v3306 = vsel %vm2569, %v3298, inf
    %v3307 = vsel %vm2569, %v3299, inf
    %v3308 = vsel %vm2569, %v3300, inf
    %v3309 = vsel %vm2569, %v3301, inf
    %v3310 = vmin.f32 %v3305, %v3309
    %v3311 = vsel %vm2569, %v3302, inf
    %v3312 = vmin.f32 %v3306, %v3311
    %v3313 = vsel %vm2569, %v3303, inf
    %v3314 = vmin.f32 %v3307, %v3313
    %v3315 = vsel %vm2569, %v3304, inf
    %v3316 = vmin.f32 %v3308, %v3315
    %v3317 = vmin.f32 %v3310, %v3312
    %v3318 = vmin.f32 %v3314, %v3316
    %v3319 = vmin.f32 %v3317, %v3318
    %v3320 = vrot.slane %v3319, 4
    %v3321 = vmin.f32 %v3319, %v3320
    %v3322 = vrot.slane %v3321, 2
    %v3323 = vmin.f32 %v3321, %v3322
    %v3324 = vrot.slane %v3323, 1
    %v3325 = vmin.f32 %v3323, %v3324
    %vm3326 = vcmp.le.f32.partialorder %v3297, %v3325
    %vm3327 = vcmp.le.f32.partialorder %v3298, %v3325
    %vm3328 = vcmp.le.f32.partialorder %v3299, %v3325
    %vm3329 = vcmp.le.f32.partialorder %v3300, %v3325
    %vm3330 = vcmp.le.f32.partialorder %v3301, %v3325
    %vm3331 = vcmp.le.f32.partialorder %v3302, %v3325
    %vm3332 = vcmp.le.f32.partialorder %v3303, %v3325
    %vm3333 = vcmp.le.f32.partialorder %v3304, %v3325
    %v3334 = vsel %vm3326, %v67, 64
    %v3335 = vsel %vm3327, %v68, 64
    %v3336 = vsel %vm3328, %v69, 64
    %v3337 = vsel %vm3329, %v70, 64
    %v3338 = vsel %vm3330, %v71, 64
    %v3339 = vsel %vm3331, %v72, 64
    %v3340 = vsel %vm3332, %v73, 64
    %v3341 = vsel %vm3333, %v74, 64
    %v3342 = vsel %vm2569, %v3334, 2147483647
    %v3343 = vsel %vm2569, %v3335, 2147483647
    %v3344 = vsel %vm2569, %v3336, 2147483647
    %v3345 = vsel %vm2569, %v3337, 2147483647
    %v3346 = vsel %vm2569, %v3338, 2147483647
    %vm3347 = vcmp.lt.s32.totalorder %v3342, %v3346
    %v3348 = vsel %vm3347, %v3342, %v3346
    %v3349 = vsel %vm2569, %v3339, 2147483647
    %vm3350 = vcmp.lt.s32.totalorder %v3343, %v3349
    %v3351 = vsel %vm3350, %v3343, %v3349
    %v3352 = vsel %vm2569, %v3340, 2147483647
    %vm3353 = vcmp.lt.s32.totalorder %v3344, %v3352
    %v3354 = vsel %vm3353, %v3344, %v3352
    %v3355 = vsel %vm2569, %v3341, 2147483647
    %vm3356 = vcmp.lt.s32.totalorder %v3345, %v3355
    %v3357 = vsel %vm3356, %v3345, %v3355
    %vm3358 = vcmp.lt.s32.totalorder %v3348, %v3351
    %v3359 = vsel %vm3358, %v3348, %v3351
    %vm3360 = vcmp.lt.s32.totalorder %v3354, %v3357
    %v3361 = vsel %vm3360, %v3354, %v3357
    %vm3362 = vcmp.lt.s32.totalorder %v3359, %v3361
    %v3363 = vsel %vm3362, %v3359, %v3361
    %v3364 = vrot.slane %v3363, 4
    %vm3365 = vcmp.lt.s32.totalorder %v3363, %v3364
    %v3366 = vsel %vm3365, %v3363, %v3364
    %v3367 = vrot.slane %v3366, 2
    %vm3368 = vcmp.lt.s32.totalorder %v3366, %v3367
    %v3369 = vsel %vm3368, %v3366, %v3367
    %v3370 = vrot.slane %v3369, 1
    %vm3371 = vcmp.lt.s32.totalorder %v3369, %v3370
    %v3372 = vsel %vm3371, %v3369, %v3370
    %vm3373 = vcmp.eq.s32.totalorder %v67, %v3372
    %vm3374 = vcmp.eq.s32.totalorder %v68, %v3372
    %vm3375 = vcmp.eq.s32.totalorder %v69, %v3372
    %vm3376 = vcmp.eq.s32.totalorder %v70, %v3372
    %vm3377 = vcmp.eq.s32.totalorder %v71, %v3372
    %vm3378 = vcmp.eq.s32.totalorder %v72, %v3372
    %vm3379 = vcmp.eq.s32.totalorder %v73, %v3372
    %vm3380 = vcmp.eq.s32.totalorder %v74, %v3372
    %v3381 = vsel %vm3373, 1e+30, %v3297
    %v3382 = vsel %vm3374, 1e+30, %v3298
    %v3383 = vsel %vm3375, 1e+30, %v3299
    %v3384 = vsel %vm3376, 1e+30, %v3300
    %v3385 = vsel %vm3377, 1e+30, %v3301
    %v3386 = vsel %vm3378, 1e+30, %v3302
    %v3387 = vsel %vm3379, 1e+30, %v3303
    %v3388 = vsel %vm3380, 1e+30, %v3304
    %v3389 = vsel %vm2569, %v3381, inf
    %v3390 = vsel %vm2569, %v3382, inf
    %v3391 = vsel %vm2569, %v3383, inf
    %v3392 = vsel %vm2569, %v3384, inf
    %v3393 = vsel %vm2569, %v3385, inf
    %v3394 = vmin.f32 %v3389, %v3393
    %v3395 = vsel %vm2569, %v3386, inf
    %v3396 = vmin.f32 %v3390, %v3395
    %v3397 = vsel %vm2569, %v3387, inf
    %v3398 = vmin.f32 %v3391, %v3397
    %v3399 = vsel %vm2569, %v3388, inf
    %v3400 = vmin.f32 %v3392, %v3399
    %v3401 = vmin.f32 %v3394, %v3396
    %v3402 = vmin.f32 %v3398, %v3400
    %v3403 = vmin.f32 %v3401, %v3402
    %v3404 = vrot.slane %v3403, 4
    %v3405 = vmin.f32 %v3403, %v3404
    %v3406 = vrot.slane %v3405, 2
    %v3407 = vmin.f32 %v3405, %v3406
    %v3408 = vrot.slane %v3407, 1
    %v3409 = vmin.f32 %v3407, %v3408
    %vm3410 = vcmp.le.f32.partialorder %v3381, %v3409
    %vm3411 = vcmp.le.f32.partialorder %v3382, %v3409
    %vm3412 = vcmp.le.f32.partialorder %v3383, %v3409
    %vm3413 = vcmp.le.f32.partialorder %v3384, %v3409
    %vm3414 = vcmp.le.f32.partialorder %v3385, %v3409
    %vm3415 = vcmp.le.f32.partialorder %v3386, %v3409
    %vm3416 = vcmp.le.f32.partialorder %v3387, %v3409
    %vm3417 = vcmp.le.f32.partialorder %v3388, %v3409
    %v3418 = vsel %vm3410, %v67, 64
    %v3419 = vsel %vm3411, %v68, 64
    %v3420 = vsel %vm3412, %v69, 64
    %v3421 = vsel %vm3413, %v70, 64
    %v3422 = vsel %vm3414, %v71, 64
    %v3423 = vsel %vm3415, %v72, 64
    %v3424 = vsel %vm3416, %v73, 64
    %v3425 = vsel %vm3417, %v74, 64
    %v3426 = vsel %vm2569, %v3418, 2147483647
    %v3427 = vsel %vm2569, %v3419, 2147483647
    %v3428 = vsel %vm2569, %v3420, 2147483647
    %v3429 = vsel %vm2569, %v3421, 2147483647
    %v3430 = vsel %vm2569, %v3422, 2147483647
    %vm3431 = vcmp.lt.s32.totalorder %v3426, %v3430
    %v3432 = vsel %vm3431, %v3426, %v3430
    %v3433 = vsel %vm2569, %v3423, 2147483647
    %vm3434 = vcmp.lt.s32.totalorder %v3427, %v3433
    %v3435 = vsel %vm3434, %v3427, %v3433
    %v3436 = vsel %vm2569, %v3424, 2147483647
    %vm3437 = vcmp.lt.s32.totalorder %v3428, %v3436
    %v3438 = vsel %vm3437, %v3428, %v3436
    %v3439 = vsel %vm2569, %v3425, 2147483647
    %vm3440 = vcmp.lt.s32.totalorder %v3429, %v3439
    %v3441 = vsel %vm3440, %v3429, %v3439
    %vm3442 = vcmp.lt.s32.totalorder %v3432, %v3435
    %v3443 = vsel %vm3442, %v3432, %v3435
    %vm3444 = vcmp.lt.s32.totalorder %v3438, %v3441
    %v3445 = vsel %vm3444, %v3438, %v3441
    %vm3446 = vcmp.lt.s32.totalorder %v3443, %v3445
    %v3447 = vsel %vm3446, %v3443, %v3445
    %v3448 = vrot.slane %v3447, 4
    %vm3449 = vcmp.lt.s32.totalorder %v3447, %v3448
    %v3450 = vsel %vm3449, %v3447, %v3448
    %v3451 = vrot.slane %v3450, 2
    %vm3452 = vcmp.lt.s32.totalorder %v3450, %v3451
    %v3453 = vsel %vm3452, %v3450, %v3451
    %v3454 = vrot.slane %v3453, 1
    %vm3455 = vcmp.lt.s32.totalorder %v3453, %v3454
    %v3456 = vsel %vm3455, %v3453, %v3454
    %vm3457 = vcmp.eq.s32.totalorder %v67, %v3456
    %vm3458 = vcmp.eq.s32.totalorder %v68, %v3456
    %vm3459 = vcmp.eq.s32.totalorder %v69, %v3456
    %vm3460 = vcmp.eq.s32.totalorder %v70, %v3456
    %vm3461 = vcmp.eq.s32.totalorder %v71, %v3456
    %vm3462 = vcmp.eq.s32.totalorder %v72, %v3456
    %vm3463 = vcmp.eq.s32.totalorder %v73, %v3456
    %vm3464 = vcmp.eq.s32.totalorder %v74, %v3456
    %v3465 = vsub.f32 %v3157, %v3157
    %v3466 = vmul.f32 %v3465, 1.442695
    %v3467 = vpow.pop %v3466
    %v3468 = vsel %vm3205, %v3467, 0.0
    %v3469 = vsel %vm3206, %v3467, 0.0
    %v3470 = vsel %vm3207, %v3467, 0.0
    %v3471 = vsel %vm3208, %v3467, 0.0
    %v3472 = vsel %vm3209, %v3467, 0.0
    %v3473 = vsel %vm3210, %v3467, 0.0
    %v3474 = vsel %vm3211, %v3467, 0.0
    %v3475 = vsel %vm3212, %v3467, 0.0
    %v3476 = vadd.f32 %v3468, 0.0
    %v3477 = vadd.f32 %v3469, 0.0
    %v3478 = vadd.f32 %v3470, 0.0
    %v3479 = vadd.f32 %v3471, 0.0
    %v3480 = vadd.f32 %v3472, 0.0
    %v3481 = vadd.f32 %v3473, 0.0
    %v3482 = vadd.f32 %v3474, 0.0
    %v3483 = vadd.f32 %v3475, 0.0
    %v3484 = vsub.f32 %v3157, %v3241
    %v3485 = vmul.f32 %v3484, 1.442695
    %v3486 = vpow.pop %v3485
    %v3487 = vsel %vm3289, %v3486, 0.0
    %v3488 = vsel %vm3290, %v3486, 0.0
    %v3489 = vsel %vm3291, %v3486, 0.0
    %v3490 = vsel %vm3292, %v3486, 0.0
    %v3491 = vsel %vm3293, %v3486, 0.0
    %v3492 = vsel %vm3294, %v3486, 0.0
    %v3493 = vsel %vm3295, %v3486, 0.0
    %v3494 = vsel %vm3296, %v3486, 0.0
    %v3495 = vadd.f32 %v3476, %v3487
    %v3496 = vadd.f32 %v3477, %v3488
    %v3497 = vadd.f32 %v3478, %v3489
    %v3498 = vadd.f32 %v3479, %v3490
    %v3499 = vadd.f32 %v3480, %v3491
    %v3500 = vadd.f32 %v3481, %v3492
    %v3501 = vadd.f32 %v3482, %v3493
    %v3502 = vadd.f32 %v3483, %v3494
    %v3503 = vsub.f32 %v3157, %v3325
    %v3504 = vmul.f32 %v3503, 1.442695
    %v3505 = vpow.pop %v3504
    %v3506 = vsel %vm3373, %v3505, 0.0
    %v3507 = vsel %vm3374, %v3505, 0.0
    %v3508 = vsel %vm3375, %v3505, 0.0
    %v3509 = vsel %vm3376, %v3505, 0.0
    %v3510 = vsel %vm3377, %v3505, 0.0
    %v3511 = vsel %vm3378, %v3505, 0.0
    %v3512 = vsel %vm3379, %v3505, 0.0
    %v3513 = vsel %vm3380, %v3505, 0.0
    %v3514 = vadd.f32 %v3495, %v3506
    %v3515 = vadd.f32 %v3496, %v3507
    %v3516 = vadd.f32 %v3497, %v3508
    %v3517 = vadd.f32 %v3498, %v3509
    %v3518 = vadd.f32 %v3499, %v3510
    %v3519 = vadd.f32 %v3500, %v3511
    %v3520 = vadd.f32 %v3501, %v3512
    %v3521 = vadd.f32 %v3502, %v3513
    %v3522 = vsub.f32 %v3157, %v3409
    %v3523 = vmul.f32 %v3522, 1.442695
    %v3524 = vpow.pop %v3523
    %v3525 = vsel %vm3457, %v3524, 0.0
    %v3526 = vsel %vm3458, %v3524, 0.0
    %v3527 = vsel %vm3459, %v3524, 0.0
    %v3528 = vsel %vm3460, %v3524, 0.0
    %v3529 = vsel %vm3461, %v3524, 0.0
    %v3530 = vsel %vm3462, %v3524, 0.0
    %v3531 = vsel %vm3463, %v3524, 0.0
    %v3532 = vsel %vm3464, %v3524, 0.0
    %v3533 = vadd.f32 %v3514, %v3525
    %v3534 = vadd.f32 %v3515, %v3526
    %v3535 = vadd.f32 %v3516, %v3527
    %v3536 = vadd.f32 %v3517, %v3528
    %v3537 = vadd.f32 %v3518, %v3529
    %v3538 = vadd.f32 %v3519, %v3530
    %v3539 = vadd.f32 %v3520, %v3531
    %v3540 = vadd.f32 %v3521, %v3532
    %3541 = vmatpush.msra.mxu0 0.0
    %3542 = vmatpush.msra.mxu0 0.0
    %3543 = vmatpush.msra.mxu0 0.0
    %3544 = vmatpush.msra.mxu0 0.0
    %3545 = vmatpush.msra.mxu0 0.0
    %3546 = vmatpush.msra.mxu0 0.0
    %3547 = vmatpush.msra.mxu0 0.0
    %3548 = vmatpush.msra.mxu0 0.0
    %3549 = vmatpush.msra.mxu0 %v3540
    %3550 = vmatpush.msra.mxu0 %v3539
    %3551 = vmatpush.msra.mxu0 %v3538
    %3552 = vmatpush.msra.mxu0 %v3537
    %3553 = vmatpush.msra.mxu0 %v3536
    %3554 = vmatpush.msra.mxu0 %v3535
    %3555 = vmatpush.msra.mxu0 %v3534
    %3556 = vmatpush.msra.mxu0 %v3533
    %3557 = vmatmul.f32.gmra.mxu0 %v174
    %v3558 = vpop.f32.mrf.mxu0
    %v3559 = vadd.f32 0.0, %v3558
    %3560 = vdwg.mxu0
    %v3561 = vsel %vm2569, %v3533, 0.0
    %v3562 = vsel %vm2569, %v3534, 0.0
    %v3563 = vadd.f32 %v3561, %v3562
    %v3564 = vsel %vm2569, %v3535, 0.0
    %v3565 = vadd.f32 %v3563, %v3564
    %v3566 = vsel %vm2569, %v3536, 0.0
    %v3567 = vadd.f32 %v3565, %v3566
    %v3568 = vsel %vm2569, %v3537, 0.0
    %v3569 = vadd.f32 %v3567, %v3568
    %v3570 = vsel %vm2569, %v3538, 0.0
    %v3571 = vadd.f32 %v3569, %v3570
    %v3572 = vsel %vm2569, %v3539, 0.0
    %v3573 = vadd.f32 %v3571, %v3572
    %v3574 = vsel %vm2569, %v3540, 0.0
    %v3575 = vadd.f32 %v3573, %v3574
    %v3576 = vrot.slane %v3575, 4
    %v3577 = vadd.f32 %v3575, %v3576
    %v3578 = vrot.slane %v3577, 2
    %v3579 = vadd.f32 %v3577, %v3578
    %v3580 = vrot.slane %v3579, 1
    %v3581 = vadd.f32 %v3579, %v3580
    %v3582 = vrcp.pop %v3581
    %v3583 = vmul.f32 %v3581, %v3582
    %v3584 = vsub.f32 1.0, %v3583
    %v3585 = vmul.f32 %v3582, %v3584
    %v3586 = vadd.f32 %v3582, %v3585
    %vm3587 = vweird.f32 %v3581
    %vm3588 = vweird.f32 %v3582
    %vm3589 = vmor %vm3587, %vm3588
    %v3590 = vsel %vm3589, %v3582, %v3586
    %v3591 = vand.u32 2147483647, %v3581
    %vm3592 = vcmp.eq.f32.partialorder %v3591, 8.507059e+37
    %v3593 = vand.u32 %v3581, 2147483648
    %v3594 = vor.u32 1.1754944e-38, %v3593
    %v3595 = vsel %vm3592, %v3594, %v3590
    %v3596 = vmul.f32 %v3559, %v3595
    %v3598 = vrot.slane %v3596, 5
    %v3600 = vsel %vm268, %v3029, %v3598
    %3601 = vst.msk [vmem:[%s5] sm:$0x3f] %vm2458, %v3600
    // Predicated region
    $region30: #{samplenet_forward.1} parent=1 // pred_check
      _
    $region31: #{samplenet_forward.1} parent=1 // pred_check_branch
      %3603 = sbr.rel (0) target = $region33
    $region32: #{samplenet_forward.1} parent=1 // pred_region
      _
    $region33: #{samplenet_forward.1} parent=1 // pred_fallthru
      _
    // Predicated region
    $region34: #{samplenet_forward.1} parent=1 // pred_check
      _
    $region35: #{samplenet_forward.1} parent=1 // pred_check_branch
      %3605 = sbr.rel (0) target = $region37
    $region36: #{samplenet_forward.1} parent=1 // pred_region
      _
    $region37: #{samplenet_forward.1} parent=1 // pred_fallthru
      _
    // Predicated region
    $region38: #{samplenet_forward.1} parent=1 // pred_check
      _
    $region39: #{samplenet_forward.1} parent=1 // pred_check_branch
      %3607 = sbr.rel (0) target = $region41
    $region40: #{samplenet_forward.1} parent=1 // pred_region
      _
    $region41: #{samplenet_forward.1} parent=1 // pred_fallthru
      _
    // Predicated region
    $region42: #{samplenet_forward.1} parent=1 // pred_check
      _
    $region43: #{samplenet_forward.1} parent=1 // pred_check_branch
      %3609 = sbr.rel (0) target = $region45
    $region44: #{samplenet_forward.1} parent=1 // pred_region
      _
    $region45: #{samplenet_forward.1} parent=1 // pred_fallthru
      _
    %3610 = vsyncpa [#allocation3], 1
    %3611 = vsyncpa [#allocation5], 1

</llo_original>
